<compile_context>
chip_gen: v7x
topology: tpu7x:2x2x1
jax: 0.10.0
libtpu: 0.0.40
codegen_flags: <defaults>
</compile_context>

<pallas_src>
import jax
import jax.numpy as jnp
from jax.experimental import pallas as pl
from jax.experimental.pallas import tpu as pltpu


def _round_up(n, m):
    return ((n + m - 1) // m) * m


def mlp_kernel(x_ref, w1_ref, p_ref, b2_ref, o_ref):
    # ---- Layer 1: [tile_b, D] @ [D, H] on the MXU ------------------------
    # x arrives f32 from HBM; cast to bf16 in VMEM right before the dot
    # (f32 accumulation via preferred_element_type).
    x = x_ref[...].astype(jnp.bfloat16)
    h = jnp.dot(x, w1_ref[...], preferred_element_type=jnp.float32)
    h = h + p_ref[0:1, :]                    # b1 broadcast (1, H)
    h = jnp.maximum(h, 0.0)                  # ReLU on the VPU

    # ---- Layer 2: H -> 1 as VPU multiply + lane reduction (skip the MXU) --
    z = jnp.sum(h * p_ref[1:2, :], axis=-1)  # (tile_b,)
    z = z + b2_ref[0, 0]                     # scalar bias from SMEM

    # ---- Sigmoid: exp + approximate reciprocal, both on the EUP slot ------
    p = pl.reciprocal(1.0 + jnp.exp(-z), approx=True)

    # Lane-dense store: batch along the lane dim of the (1, tile_b) block.
    o_ref[0, :] = p.astype(o_ref.dtype)


def nn_forward(x, w1, b1, w2, b2, *, tile_b=2048):
    """Forward of Linear(D,256) -> ReLU -> Linear(256,1) -> Sigmoid.

    x : [B, D] float32 activations
    w1: [D, H], b1: [H] or [1, H]     (first linear, stored (in, out))
    w2: [H, 1], b2: scalar-like       (second linear)
    Returns [B, 1] float32.
    """
    B, D = x.shape
    H = w1.shape[1]

    # Small params: pack b1 and w2^T into one (2, H) f32 operand.
    b1 = jnp.asarray(b1, jnp.float32).reshape(1, H)
    w2t = jnp.asarray(w2, jnp.float32).reshape(1, H)   # (H,1) -> (1,H) == w2.T
    p2 = jnp.concatenate([b1, w2t], axis=0)            # (2, H)
    b2 = jnp.asarray(b2, jnp.float32).reshape(1, 1)

    # w1 is tiny (D*H) and resident across the grid; cast once to bf16.
    w1_lo = w1.astype(jnp.bfloat16)

    # Batch tile: multiple of 128, big enough to amortize per-step overhead,
    # but (a) no bigger than the (rounded-up) batch and (b) capped so the
    # grid has >= 2 steps when B > 128 -> both v7x TensorCores get work.
    tile_b = _round_up(max(tile_b, 128), 128)
    if B > 128:
        tile_b = min(tile_b, _round_up(-(-B // 2), 128))
    tile_b = max(128, min(tile_b, _round_up(B, 128)))

    grid = (pl.cdiv(B, tile_b),)   # ragged last block handled by Mosaic

    cost = pl.CostEstimate(
        flops=2 * B * D * H + 2 * B * H,
        transcendentals=B,
        bytes_accessed=B * D * 4 + D * H * 2 + 2 * H * 4 + 4 + B * 4,
    )

    out = pl.pallas_call(
        mlp_kernel,
        out_shape=jax.ShapeDtypeStruct((1, B), jnp.float32),
        grid=grid,
        in_specs=[
            pl.BlockSpec((tile_b, D), lambda i: (i, 0)),        # x tile per step
            pl.BlockSpec((D, H), lambda i: (0, 0)),             # w1 (resident)
            pl.BlockSpec((2, H), lambda i: (0, 0)),             # [b1; w2^T]
            pl.BlockSpec(memory_space=pltpu.MemorySpace.SMEM),  # b2 scalar
        ],
        out_specs=pl.BlockSpec((1, tile_b), lambda i: (0, i)),  # lane-dense out
        compiler_params=pltpu.CompilerParams(
            dimension_semantics=("parallel",),
            # 48 MiB: covers f32 x tiles at tile_b=2048 (double-buffered) plus
            # weights/intermediates; below v7x's 64 MiB physical per-TC VMEM.
            vmem_limit_bytes=48 * 1024 * 1024,
        ),
        cost_estimate=cost,
    )(x, w1_lo, p2, b2)

    return out[0, :].reshape(B, 1)


def reference_forward(x, w1, b1, w2, b2):
    h = jnp.maximum(x @ w1 + jnp.reshape(b1, (1, -1)), 0.0)
    return jax.nn.sigmoid(h @ jnp.reshape(w2, (-1, 1)) + jnp.reshape(b2, (1, 1)))


if __name__ == "__main__":
    EMBED = 768     # embedding_dim of the module
    HIDDEN = 256
    OUT = 1
    BATCH = 300     # deliberately NOT a multiple of the tile: exercises ragged edge

    key = jax.random.PRNGKey(0)
    kx, kw1, kb1, kw2, kb2 = jax.random.split(key, 5)

    x = jax.random.normal(kx, (BATCH, EMBED), dtype=jnp.float32)
    # Deterministic synthetic parameters (stored (in, out) — transposed vs torch).
    w1 = jax.random.normal(kw1, (EMBED, HIDDEN), dtype=jnp.float32) * 0.02
    b1 = jax.random.normal(kb1, (1, HIDDEN), dtype=jnp.float32) * 0.02
    w2 = jax.random.normal(kw2, (HIDDEN, OUT), dtype=jnp.float32) * 0.02
    b2 = jax.random.normal(kb2, (1, OUT), dtype=jnp.float32) * 0.02

    ref = reference_forward(x, w1, b1, w2, b2)

    # Run 1: default tile -> 2-step grid (256-row tiles for B=300, ragged edge).
    out_big = jax.block_until_ready(nn_forward(x, w1, b1, w2, b2))
    # Run 2: small tile -> 3-step grid (exercises index maps / edge masking).
    out_small = jax.block_until_ready(nn_forward(x, w1, b1, w2, b2, tile_b=128))

    assert out_big.shape == (BATCH, OUT)
    assert out_small.shape == (BATCH, OUT)
    # First matmul runs in bf16 (f32 accumulation) and the sigmoid uses an
    # approximate EUP reciprocal, so compare with a bf16-appropriate tolerance.
    assert jnp.allclose(out_big, ref, atol=5e-3, rtol=5e-3)
    assert jnp.allclose(out_small, ref, atol=5e-3, rtol=5e-3)

    print("KERNEL_OK")
</pallas_src>

<mosaic_0001>
module attributes {stable_mosaic.version = 11 : i64} {
  func.func @mlp_kernel(%arg0: i32, %arg1: memref<256x768xf32, #tpu.memory_space<vmem>>, %arg2: memref<768x256xbf16, #tpu.memory_space<vmem>>, %arg3: memref<2x256xf32, #tpu.memory_space<vmem>>, %arg4: memref<1x1xf32, #tpu.memory_space<smem>>, %arg5: memref<1x256xf32, #tpu.memory_space<vmem>>) attributes {dimension_semantics = [#tpu.dimension_semantics<parallel>], iteration_bounds = array<i64: 2>, scalar_prefetch = 0 : i64, scratch_operands = 0 : i64, tpu.core_type = #tpu.core_type<tc>, window_params = [{transform_indices = @transform_0, window_bounds = array<i64: 256, 768>}, {pipeline_mode = #tpu.pipeline_mode<synchronous>, transform_indices = @transform_1, window_bounds = array<i64: 768, 256>}, {pipeline_mode = #tpu.pipeline_mode<synchronous>, transform_indices = @transform_2, window_bounds = array<i64: 2, 256>}, {transform_indices = @transform_3, window_bounds = array<i64: 1, 1>}, {transform_indices = @transform_4, window_bounds = array<i64: 1, 256>}]} {
    %c0 = arith.constant 0 : index
    %c0_0 = arith.constant 0 : index
    %0 = vector.load %arg1[%c0, %c0_0] : memref<256x768xf32, #tpu.memory_space<vmem>>, vector<256x768xf32>
    %1 = arith.truncf %0 : vector<256x768xf32> to vector<256x768xbf16>
    %c0_1 = arith.constant 0 : index
    %c0_2 = arith.constant 0 : index
    %2 = vector.load %arg2[%c0_1, %c0_2] : memref<768x256xbf16, #tpu.memory_space<vmem>>, vector<768x256xbf16>
    %cst = arith.constant dense<0.000000e+00> : vector<256x256xf32>
    %3 = tpu.matmul %1, %2, %cst {dimension_numbers = #tpu.dot_dimension_numbers<[1], [0], [0], [1], [0, 0, 1, 1], [], []>} : vector<256x768xbf16>, vector<768x256xbf16>, vector<256x256xf32> -> vector<256x256xf32>
    %c0_3 = arith.constant 0 : index
    %c0_4 = arith.constant 0 : index
    %4 = vector.load %arg3[%c0_3, %c0_4] : memref<2x256xf32, #tpu.memory_space<vmem>>, vector<1x256xf32>
    %5 = vector.broadcast %4 : vector<1x256xf32> to vector<256x256xf32>
    %6 = arith.addf %3, %5 : vector<256x256xf32>
    %cst_5 = arith.constant 0.000000e+00 : f32
    %7 = vector.broadcast %cst_5 : f32 to vector<256x256xf32>
    %8 = arith.maximumf %6, %7 : vector<256x256xf32>
    %c1 = arith.constant 1 : index
    %c0_6 = arith.constant 0 : index
    %9 = vector.load %arg3[%c1, %c0_6] : memref<2x256xf32, #tpu.memory_space<vmem>>, vector<1x256xf32>
    %10 = vector.broadcast %9 : vector<1x256xf32> to vector<256x256xf32>
    %11 = arith.mulf %8, %10 : vector<256x256xf32>
    %cst_7 = arith.constant dense<0.000000e+00> : vector<256xf32>
    %12 = vector.multi_reduction <add>, %11, %cst_7 [1] : vector<256x256xf32> to vector<256xf32>
    %c0_8 = arith.constant 0 : index
    %c0_9 = arith.constant 0 : index
    %13 = memref.load %arg4[%c0_8, %c0_9] : memref<1x1xf32, #tpu.memory_space<smem>>
    %14 = vector.broadcast %13 : f32 to vector<256xf32>
    %15 = arith.addf %12, %14 : vector<256xf32>
    %cst_10 = arith.constant 0.000000e+00 : f32
    %16 = vector.broadcast %cst_10 : f32 to vector<256xf32>
    %17 = arith.subf %16, %15 : vector<256xf32>
    %18 = math.exp %17 : vector<256xf32>
    %cst_11 = arith.constant 1.000000e+00 : f32
    %19 = vector.broadcast %cst_11 : f32 to vector<256xf32>
    %20 = arith.addf %19, %18 : vector<256xf32>
    %21 = tpu.reciprocal %20 {approx = true} : vector<256xf32> -> vector<256xf32>
    %c0_12 = arith.constant 0 : index
    %c0_13 = arith.constant 0 : index
    %22 = vector.load %arg5[%c0_12, %c0_13] : memref<1x256xf32, #tpu.memory_space<vmem>>, vector<1x256xf32>
    %23 = vector.shape_cast %22 : vector<1x256xf32> to vector<256xf32>
    %24 = vector.shape_cast %21 : vector<256xf32> to vector<1x256xf32>
    tpu.vector_store %arg5[%c0_12, %c0_13], %24 {strides = array<i32>} : memref<1x256xf32, #tpu.memory_space<vmem>>, vector<1x256xf32>,
    return
  }
  func.func @transform_0(%arg0: i32) -> (i32, i32) {
    %c0_i32 = arith.constant 0 : i32
    %c0_i32_0 = arith.constant 0 : i32
    return %arg0, %c0_i32 : i32, i32
  }
  func.func @transform_1(%arg0: i32) -> (i32, i32) {
    %c0_i32 = arith.constant 0 : i32
    %c0_i32_0 = arith.constant 0 : i32
    %c0_i32_1 = arith.constant 0 : i32
    return %c0_i32, %c0_i32_0 : i32, i32
  }
  func.func @transform_2(%arg0: i32) -> (i32, i32) {
    %c0_i32 = arith.constant 0 : i32
    %c0_i32_0 = arith.constant 0 : i32
    %c0_i32_1 = arith.constant 0 : i32
    return %c0_i32, %c0_i32_0 : i32, i32
  }
  func.func @transform_3(%arg0: i32) -> (i32, i32) {
    %c0_i32 = arith.constant 0 : i32
    %c0_i32_0 = arith.constant 0 : i32
    %c0_i32_1 = arith.constant 0 : i32
    return %c0_i32, %c0_i32_0 : i32, i32
  }
  func.func @transform_4(%arg0: i32) -> (i32, i32) {
    %c0_i32 = arith.constant 0 : i32
    %c0_i32_0 = arith.constant 0 : i32
    return %c0_i32, %arg0 : i32, i32
  }
}

</mosaic_0001>

<llo_original>
// kernel: tpu_custom_call.1
$region0: #{tpu_custom_call.1}
  #allocation0 [shape = 'u32[]', space=smem, size = 0x4, offset = 0x4, fixed_abs, tag = 'smem constant byte address 0x4 - core index']
  #allocation1 [shape = 'u32[144,128]{1,0:T(1,128)}', space=vmem, size = 0x12000, scoped, tag = 'internal scratch']
  #allocation2 [shape = 'f32[1,1]{1,0:T(1,128)S(6)}', space=smem, size = 0x200, scoped, tag = 'scoped memory for tpu_custom_call.1']
  %s0 = inlined_call_operand.hbm [shape: f32[300,768], index: 0, kind: input, shape index: {}]
  %s1 = inlined_call_operand.hbm [shape: bf16[768,256], index: 1, kind: input, shape index: {}]
  %s2 = inlined_call_operand.vmem [shape: f32[2,256], index: 2, kind: input, shape index: {}]
  %s3 = inlined_call_operand.<no memory space> [shape: f32[1,1], index: 3, kind: input, shape index: {}]
  %s4 = inlined_call_operand.hbm [shape: f32[1,300], index: 4, kind: output, shape index: {}]
  %s5 = sld [smem:[#allocation0]]
  $region57: #{tpu_custom_call.1} parent=0
    _
  %s7 = ssub.s32 1, %s5
  %s8 = scalar_select 0, %s7, %s5
  %9 = sst [smem:[#allocation2]] %s3
  $region1: #{tpu_custom_call.1} parent=0
    #allocation3 [shape = 'u8[1572864]{0}', space=vmem, size = 0x180000, scoped, tag = 'input window, operand 0']
    #allocation4 [shape = 's32[2]{0}', space=sflag, size = 0x8, scoped, tag = 'scoped memory for tpu_custom_call.1']
    #allocation5 [shape = 's32[2]{0}', space=sflag, size = 0x8, scoped, tag = 'scoped memory for tpu_custom_call.1']
    #allocation6 [shape = 'u8[393216]{0}', space=vmem, size = 0x60000, scoped, tag = 'input window, operand 1, single buffered']
    #allocation7 [shape = 's32[1]{0}', space=sflag, size = 0x4, scoped, tag = 'scoped memory for tpu_custom_call.1']
    #allocation8 [shape = 'u8[2048]{0}', space=vmem, size = 0x800, scoped, tag = 'output window, operand 0']
    %10 = vsyncpa [#allocation4], 0
    %s11 = scalar_lea.sflag [#allocation4], 1
    %12 = vsyncpa %s11, 0
    %13 = vsyncpa [#allocation7], 0
    %14 = vsyncpa [#allocation5], 0
    %s15 = scalar_lea.sflag [#allocation5], 1
    %16 = vsyncpa %s15, 0
    loop: start=0, step=1, limit=4
    $region2: #{tpu_custom_call.1} parent=1 // loop_pre_header
      _
    $region3: #{tpu_custom_call.1} parent=1 // loop_header
      %s18 = sphi 0, %s22
      %p19 = scmp.ge.s32.totalorder %s18, 4
      %s28 = sphi 0, %s30
      %s31 = sphi 0, %s28
      %s32 = sphi 0, %s31
      %s48 = sphi 0, %s32
      %s52 = sphi 0, %s52
      %s54 = sphi 0, %s52
      %s55 = sphi 0, %s54
      %s69 = sphi 0, %s55
      %s73 = sphi 0, %s73
      %s75 = sphi 0, %s73
      %s76 = sphi 0, %s75
      %s90 = sphi 0, %s76
      %s94 = sphi 0, %s94
      %s96 = sphi 0, %s94
      %s97 = sphi 0, %s96
      %s111 = sphi 0, %s97
      %s117 = sphi 0, %s119
      %s120 = sphi 0, %s117
      %s121 = sphi 0, %s120
      %s137 = sphi 0, %s121
    $region4: #{tpu_custom_call.1} parent=1 // loop_header_branch
      %21 = sbr.rel (%p19) target = $region8
    $region5: #{tpu_custom_call.1} parent=1 // loop_body
      %s23 = ssub.s32 %s18, 1
      %s24 = ssub.s32 %s18, 2
      %s25 = sadd.s32 %s18, 1
      %s26 = ssub.s32 %s18, %s25
      %p27 = scmp.eq.s32.totalorder %s26, 0
      %s29 = sadd.s32 %s28, 1
      %s30 = scalar_select %p27, %s28, %s29
      %p33 = pneg %p27
      %p34 = scmp.eq.s32.totalorder %s18, 1
      %p35 = por %p33, %p34
      %p36 = scmp.ne.s32.totalorder %s28, %s31
      %p37 = scmp.eq.s32.totalorder %s18, 0
      %p38 = por %p36, %p37
      %p39 = scmp.ne.s32.totalorder %s28, %s31
      %p40 = scmp.eq.s32.totalorder %s23, 1
      %p41 = por %p39, %p40
      %p42 = scmp.ne.s32.totalorder %s31, %s32
      %p43 = scmp.eq.s32.totalorder %s23, 0
      %p44 = por %p42, %p43
      %p45 = scmp.ne.s32.totalorder %s31, %s32
      %p46 = scmp.eq.s32.totalorder %s24, 1
      %p47 = por %p45, %p46
      %p49 = scmp.ne.s32.totalorder %s32, %s48
      %p50 = scmp.eq.s32.totalorder %s24, 0
      %p51 = por %p49, %p50
      %s53 = sadd.s32 %s52, 1
      %p56 = scmp.eq.s32.totalorder %s18, 1
      %p57 = scmp.ne.s32.totalorder %s52, %s54
      %p58 = scmp.eq.s32.totalorder %s18, 0
      %p59 = por %p57, %p58
      %p60 = scmp.ne.s32.totalorder %s52, %s54
      %p61 = scmp.eq.s32.totalorder %s23, 1
      %p62 = por %p60, %p61
      %p63 = scmp.ne.s32.totalorder %s54, %s55
      %p64 = scmp.eq.s32.totalorder %s23, 0
      %p65 = por %p63, %p64
      %p66 = scmp.ne.s32.totalorder %s54, %s55
      %p67 = scmp.eq.s32.totalorder %s24, 1
      %p68 = por %p66, %p67
      %p70 = scmp.ne.s32.totalorder %s55, %s69
      %p71 = scmp.eq.s32.totalorder %s24, 0
      %p72 = por %p70, %p71
      %s74 = sadd.s32 %s73, 1
      %p77 = scmp.eq.s32.totalorder %s18, 1
      %p78 = scmp.ne.s32.totalorder %s73, %s75
      %p79 = scmp.eq.s32.totalorder %s18, 0
      %p80 = por %p78, %p79
      %p81 = scmp.ne.s32.totalorder %s73, %s75
      %p82 = scmp.eq.s32.totalorder %s23, 1
      %p83 = por %p81, %p82
      %p84 = scmp.ne.s32.totalorder %s75, %s76
      %p85 = scmp.eq.s32.totalorder %s23, 0
      %p86 = por %p84, %p85
      %p87 = scmp.ne.s32.totalorder %s75, %s76
      %p88 = scmp.eq.s32.totalorder %s24, 1
      %p89 = por %p87, %p88
      %p91 = scmp.ne.s32.totalorder %s76, %s90
      %p92 = scmp.eq.s32.totalorder %s24, 0
      %p93 = por %p91, %p92
      %s95 = sadd.s32 %s94, 1
      %p98 = scmp.eq.s32.totalorder %s18, 1
      %p99 = scmp.ne.s32.totalorder %s94, %s96
      %p100 = scmp.eq.s32.totalorder %s18, 0
      %p101 = por %p99, %p100
      %p102 = scmp.ne.s32.totalorder %s94, %s96
      %p103 = scmp.eq.s32.totalorder %s23, 1
      %p104 = por %p102, %p103
      %p105 = scmp.ne.s32.totalorder %s96, %s97
      %p106 = scmp.eq.s32.totalorder %s23, 0
      %p107 = por %p105, %p106
      %p108 = scmp.ne.s32.totalorder %s96, %s97
      %p109 = scmp.eq.s32.totalorder %s24, 1
      %p110 = por %p108, %p109
      %p112 = scmp.ne.s32.totalorder %s97, %s111
      %p113 = scmp.eq.s32.totalorder %s24, 0
      %p114 = por %p112, %p113
      %s115 = ssub.s32 %s18, %s25
      %p116 = scmp.eq.s32.totalorder %s115, 0
      %s118 = sadd.s32 %s117, 1
      %s119 = scalar_select %p116, %s117, %s118
      %p122 = pneg %p116
      %p123 = scmp.eq.s32.totalorder %s18, 1
      %p124 = por %p122, %p123
      %p125 = scmp.ne.s32.totalorder %s117, %s120
      %p126 = scmp.eq.s32.totalorder %s18, 0
      %p127 = por %p125, %p126
      %p128 = scmp.ne.s32.totalorder %s117, %s120
      %p129 = scmp.eq.s32.totalorder %s23, 1
      %p130 = por %p128, %p129
      %p131 = scmp.ne.s32.totalorder %s120, %s121
      %p132 = scmp.eq.s32.totalorder %s23, 0
      %p133 = por %p131, %p132
      %p134 = scmp.ne.s32.totalorder %s120, %s121
      %p135 = scmp.eq.s32.totalorder %s24, 1
      %p136 = por %p134, %p135
      %p138 = scmp.ne.s32.totalorder %s121, %s137
      %p139 = scmp.eq.s32.totalorder %s24, 0
      %p140 = por %p138, %p139
      %p141 = scmp.le.s32.totalorder 1, %s18
      %p142 = scmp.lt.s32.totalorder %s18, 3
      %p143 = pnand %p141, %p142
      %p144 = pneg %p143
      // Predicated region
      $region9: #{tpu_custom_call.1} parent=5 // pred_check
        _
      $region10: #{tpu_custom_call.1} parent=5 // pred_check_branch
        %146 = sbr.rel (%p143) target = $region12
      $region11: #{tpu_custom_call.1} parent=5 // pred_region
        %s147 = ssub.s32 %s18, 1
        // Predicated region
        $region13: #{tpu_custom_call.1} parent=11 // pred_check
          %p148 = pneg %p65
        $region14: #{tpu_custom_call.1} parent=11 // pred_check_branch
          %150 = sbr.rel (%p148) target = $region16
        $region15: #{tpu_custom_call.1} parent=11 // pred_region
          %s152 = ssub.s32 12288, 12288
          %153 = vsyncadd [#allocation7], %s152
          %s154 = sshll.u32 [#allocation6], 4
          %s155 = int_to_ptr.vmem [resolvable:$true] %s154
          %160 = dma.hbm_to_vmem [thread:$0]  %s1, 12288, %s155, [#allocation7], 128, 128, 8
        $region16: #{tpu_custom_call.1} parent=11 // pred_fallthru
          _
        // Predicated region
        $region17: #{tpu_custom_call.1} parent=11 // pred_check
          %p161 = pneg %p86
        $region18: #{tpu_custom_call.1} parent=11 // pred_check_branch
          %163 = sbr.rel (%p161) target = $region20
        $region19: #{tpu_custom_call.1} parent=11 // pred_region
          _
        $region20: #{tpu_custom_call.1} parent=11 // pred_fallthru
          _
        // Predicated region
        $region21: #{tpu_custom_call.1} parent=11 // pred_check
          %p164 = pneg %p107
        $region22: #{tpu_custom_call.1} parent=11 // pred_check_branch
          %166 = sbr.rel (%p164) target = $region24
        $region23: #{tpu_custom_call.1} parent=11 // pred_region
          _
        $region24: #{tpu_custom_call.1} parent=11 // pred_fallthru
          _
      $region12: #{tpu_custom_call.1} parent=5 // pred_fallthru
        _
      %p167 = scmp.lt.s32.totalorder %s18, 2
      // Predicated region
      $region25: #{tpu_custom_call.1} parent=5 // pred_check
        %p168 = pneg %p167
      $region26: #{tpu_custom_call.1} parent=5 // pred_check_branch
        %170 = sbr.rel (%p168) target = $region28
      $region27: #{tpu_custom_call.1} parent=5 // pred_region
        // Predicated region
        $region29: #{tpu_custom_call.1} parent=27 // pred_check
          %p171 = pneg %p38
        $region30: #{tpu_custom_call.1} parent=27 // pred_check_branch
          %173 = sbr.rel (%p171) target = $region32
        $region31: #{tpu_custom_call.1} parent=27 // pred_region
          %s174 = sand.u32 %s28, 1
          %s175 = scalar_lea.sflag [#allocation4], %s174
          %s176 = sand.u32 %s28, 1
          %s177 = smul.addr %s176, 1536
          %s178 = scalar_lea.vmem [#allocation3], %s177
          %s179 = smul.u32 32, %s18
          %s180 = ssub.s32 38, %s179
          %p181 = scmp.lt.s32.totalorder %s180, 32
          %s182 = scalar_select %p181, %s180, 32
          %s183 = smul.u32 128, %s182
          %s184 = smul.u32 %s183, 6
          %s186 = ssub.s32 24576, %s184
          %187 = vsyncadd %s175, %s186
          %p188 = scmp.ne.s32.totalorder 0, %s184
          %s189 = smul.addr %s179, 6
          %s190 = smul.addr %s189, 128
          %s191 = scalar_lea.hbm %s0, %s190
          %s192 = smul.u32 48, %s182
          %s193 = sshll.u32 %s178, 4
          %s194 = int_to_ptr.vmem [resolvable:$true] %s193
          %s195 = sshll.u32 %s192, 4
          %199 = dma.hbm_to_vmem [thread:$0]  (%p188), %s191, %s195, %s194, %s175, 768, 768, 48
        $region32: #{tpu_custom_call.1} parent=27 // pred_fallthru
          _
      $region28: #{tpu_custom_call.1} parent=5 // pred_fallthru
        _
      %p200 = scmp.le.s32.totalorder 1, %s18
      %p201 = scmp.lt.s32.totalorder %s18, 3
      %p202 = pnand %p200, %p201
      %p203 = pneg %p202
      // Predicated region
      $region33: #{tpu_custom_call.1} parent=5 // pred_check
        _
      $region34: #{tpu_custom_call.1} parent=5 // pred_check_branch
        %205 = sbr.rel (%p202) target = $region36
      $region35: #{tpu_custom_call.1} parent=5 // pred_region
        %s206 = ssub.s32 %s18, 1
        %s207 = sand.u32 %s31, 1
        %s208 = scalar_lea.sflag [#allocation4], %s207
        %s209 = sand.u32 %s31, 1
        %s210 = smul.addr %s209, 1536
        %s211 = scalar_lea.vmem [#allocation3], %s210
        // Predicated region
        $region37: #{tpu_custom_call.1} parent=35 // pred_check
          %p212 = pneg %p44
        $region38: #{tpu_custom_call.1} parent=35 // pred_check_branch
          %214 = sbr.rel (%p212) target = $region40
        $region39: #{tpu_custom_call.1} parent=35 // pred_region
          %215 = dma.done %s208, 24576
        $region40: #{tpu_custom_call.1} parent=35 // pred_fallthru
          _
        // Predicated region
        $region41: #{tpu_custom_call.1} parent=35 // pred_check
          %p216 = pneg %p65
        $region42: #{tpu_custom_call.1} parent=35 // pred_check_branch
          %218 = sbr.rel (%p216) target = $region44
        $region43: #{tpu_custom_call.1} parent=35 // pred_region
          %219 = dma.done [#allocation7], 12288
        $region44: #{tpu_custom_call.1} parent=35 // pred_fallthru
          _
        %s220 = sand.u32 %s31, 1
        %s221 = scalar_lea.sflag [#allocation4], %s220
        %s222 = sand.u32 %s31, 1
        %s223 = smul.addr %s222, 1536
        %s224 = scalar_lea.vmem [#allocation3], %s223
        %p225 = pneg %p44
        %p226 = pneg %p41
        %p227 = pneg %p65
        %p228 = pneg %p62
        %p229 = pneg %p86
        %p230 = pneg %p83
        %p231 = pneg %p107
        %p232 = pneg %p104
        %p233 = pneg %p133
        %p234 = pneg %p130
        %s235 = sand.u32 %s120, 1
        %s236 = scalar_lea.sflag [#allocation5], %s235
        %s237 = sand.u32 %s120, 1
        %s238 = smul.addr %s237, 2
        %s239 = scalar_lea.vmem [#allocation8], %s238
        %s240 = smul.u32 32, %s23
        %s241 = ssub.s32 38, %s240
        %p242 = scmp.lt.s32.totalorder %s241, 32
        %s243 = scalar_select %p242, %s241, 32
        %s244 = smul.u32 128, %s243
        %s245 = smul.u32 %s244, 6
        %s246 = smul.u32 2, %s23
        %s247 = ssub.s32 3, %s246
        %p248 = scmp.lt.s32.totalorder %s247, 2
        %s249 = scalar_select %p248, %s247, 2
        %s250 = smul.u32 16, %s249
        %v251 = vld [vmem:[%s211] sm:$0xff]
        %v252 = vld [vmem:[%s211 + $0x8] sm:$0xff]
        %v253 = vld [vmem:[%s211 + $0x10] sm:$0xff]
        %v254 = vld [vmem:[%s211 + $0x18] sm:$0xff]
        %v255 = vld [vmem:[%s211 + $0x20] sm:$0xff]
        %v256 = vld [vmem:[%s211 + $0x28] sm:$0xff]
        %v257 = vld [vmem:[%s211 + $0x30] sm:$0xff]
        %v258 = vld [vmem:[%s211 + $0x38] sm:$0xff]
        %v259 = vld [vmem:[%s211 + $0x40] sm:$0xff]
        %v260 = vld [vmem:[%s211 + $0x48] sm:$0xff]
        %v261 = vld [vmem:[%s211 + $0x50] sm:$0xff]
        %v262 = vld [vmem:[%s211 + $0x58] sm:$0xff]
        %v263 = vld [vmem:[%s211 + $0x60] sm:$0xff]
        %v264 = vld [vmem:[%s211 + $0x68] sm:$0xff]
        %v265 = vld [vmem:[%s211 + $0x70] sm:$0xff]
        %v266 = vld [vmem:[%s211 + $0x78] sm:$0xff]
        %v267 = vld [vmem:[%s211 + $0x80] sm:$0xff]
        %v268 = vld [vmem:[%s211 + $0x88] sm:$0xff]
        %v269 = vld [vmem:[%s211 + $0x90] sm:$0xff]
        %v270 = vld [vmem:[%s211 + $0x98] sm:$0xff]
        %v271 = vld [vmem:[%s211 + $0xa0] sm:$0xff]
        %v272 = vld [vmem:[%s211 + $0xa8] sm:$0xff]
        %v273 = vld [vmem:[%s211 + $0xb0] sm:$0xff]
        %v274 = vld [vmem:[%s211 + $0xb8] sm:$0xff]
        %v275 = vld [vmem:[%s211 + $0xc0] sm:$0xff]
        %v276 = vld [vmem:[%s211 + $0xc8] sm:$0xff]
        %v277 = vld [vmem:[%s211 + $0xd0] sm:$0xff]
        %v278 = vld [vmem:[%s211 + $0xd8] sm:$0xff]
        %v279 = vld [vmem:[%s211 + $0xe0] sm:$0xff]
        %v280 = vld [vmem:[%s211 + $0xe8] sm:$0xff]
        %v281 = vld [vmem:[%s211 + $0xf0] sm:$0xff]
        %v282 = vld [vmem:[%s211 + $0xf8] sm:$0xff]
        %v283 = vld [vmem:[%s211 + $0x100] sm:$0xff]
        %v284 = vld [vmem:[%s211 + $0x108] sm:$0xff]
        %v285 = vld [vmem:[%s211 + $0x110] sm:$0xff]
        %v286 = vld [vmem:[%s211 + $0x118] sm:$0xff]
        %v287 = vld [vmem:[%s211 + $0x120] sm:$0xff]
        %v288 = vld [vmem:[%s211 + $0x128] sm:$0xff]
        %v289 = vld [vmem:[%s211 + $0x130] sm:$0xff]
        %v290 = vld [vmem:[%s211 + $0x138] sm:$0xff]
        %v291 = vld [vmem:[%s211 + $0x140] sm:$0xff]
        %v292 = vld [vmem:[%s211 + $0x148] sm:$0xff]
        %v293 = vld [vmem:[%s211 + $0x150] sm:$0xff]
        %v294 = vld [vmem:[%s211 + $0x158] sm:$0xff]
        %v295 = vld [vmem:[%s211 + $0x160] sm:$0xff]
        %v296 = vld [vmem:[%s211 + $0x168] sm:$0xff]
        %v297 = vld [vmem:[%s211 + $0x170] sm:$0xff]
        %v298 = vld [vmem:[%s211 + $0x178] sm:$0xff]
        %v299 = vld [vmem:[%s211 + $0x180] sm:$0xff]
        %v300 = vld [vmem:[%s211 + $0x188] sm:$0xff]
        %v301 = vld [vmem:[%s211 + $0x190] sm:$0xff]
        %v302 = vld [vmem:[%s211 + $0x198] sm:$0xff]
        %v303 = vld [vmem:[%s211 + $0x1a0] sm:$0xff]
        %v304 = vld [vmem:[%s211 + $0x1a8] sm:$0xff]
        %v305 = vld [vmem:[%s211 + $0x1b0] sm:$0xff]
        %v306 = vld [vmem:[%s211 + $0x1b8] sm:$0xff]
        %v307 = vld [vmem:[%s211 + $0x1c0] sm:$0xff]
        %v308 = vld [vmem:[%s211 + $0x1c8] sm:$0xff]
        %v309 = vld [vmem:[%s211 + $0x1d0] sm:$0xff]
        %v310 = vld [vmem:[%s211 + $0x1d8] sm:$0xff]
        %v311 = vld [vmem:[%s211 + $0x1e0] sm:$0xff]
        %v312 = vld [vmem:[%s211 + $0x1e8] sm:$0xff]
        %v313 = vld [vmem:[%s211 + $0x1f0] sm:$0xff]
        %v314 = vld [vmem:[%s211 + $0x1f8] sm:$0xff]
        %v315 = vld [vmem:[%s211 + $0x200] sm:$0xff]
        %v316 = vld [vmem:[%s211 + $0x208] sm:$0xff]
        %v317 = vld [vmem:[%s211 + $0x210] sm:$0xff]
        %v318 = vld [vmem:[%s211 + $0x218] sm:$0xff]
        %v319 = vld [vmem:[%s211 + $0x220] sm:$0xff]
        %v320 = vld [vmem:[%s211 + $0x228] sm:$0xff]
        %v321 = vld [vmem:[%s211 + $0x230] sm:$0xff]
        %v322 = vld [vmem:[%s211 + $0x238] sm:$0xff]
        %v323 = vld [vmem:[%s211 + $0x240] sm:$0xff]
        %v324 = vld [vmem:[%s211 + $0x248] sm:$0xff]
        %v325 = vld [vmem:[%s211 + $0x250] sm:$0xff]
        %v326 = vld [vmem:[%s211 + $0x258] sm:$0xff]
        %v327 = vld [vmem:[%s211 + $0x260] sm:$0xff]
        %v328 = vld [vmem:[%s211 + $0x268] sm:$0xff]
        %v329 = vld [vmem:[%s211 + $0x270] sm:$0xff]
        %v330 = vld [vmem:[%s211 + $0x278] sm:$0xff]
        %v331 = vld [vmem:[%s211 + $0x280] sm:$0xff]
        %v332 = vld [vmem:[%s211 + $0x288] sm:$0xff]
        %v333 = vld [vmem:[%s211 + $0x290] sm:$0xff]
        %v334 = vld [vmem:[%s211 + $0x298] sm:$0xff]
        %v335 = vld [vmem:[%s211 + $0x2a0] sm:$0xff]
        %v336 = vld [vmem:[%s211 + $0x2a8] sm:$0xff]
        %v337 = vld [vmem:[%s211 + $0x2b0] sm:$0xff]
        %v338 = vld [vmem:[%s211 + $0x2b8] sm:$0xff]
        %v339 = vld [vmem:[%s211 + $0x2c0] sm:$0xff]
        %v340 = vld [vmem:[%s211 + $0x2c8] sm:$0xff]
        %v341 = vld [vmem:[%s211 + $0x2d0] sm:$0xff]
        %v342 = vld [vmem:[%s211 + $0x2d8] sm:$0xff]
        %v343 = vld [vmem:[%s211 + $0x2e0] sm:$0xff]
        %v344 = vld [vmem:[%s211 + $0x2e8] sm:$0xff]
        %v345 = vld [vmem:[%s211 + $0x2f0] sm:$0xff]
        %v346 = vld [vmem:[%s211 + $0x2f8] sm:$0xff]
        %v347 = vld [vmem:[%s211 + $0x300] sm:$0xff]
        %v348 = vld [vmem:[%s211 + $0x308] sm:$0xff]
        %v349 = vld [vmem:[%s211 + $0x310] sm:$0xff]
        %v350 = vld [vmem:[%s211 + $0x318] sm:$0xff]
        %v351 = vld [vmem:[%s211 + $0x320] sm:$0xff]
        %v352 = vld [vmem:[%s211 + $0x328] sm:$0xff]
        %v353 = vld [vmem:[%s211 + $0x330] sm:$0xff]
        %v354 = vld [vmem:[%s211 + $0x338] sm:$0xff]
        %v355 = vld [vmem:[%s211 + $0x340] sm:$0xff]
        %v356 = vld [vmem:[%s211 + $0x348] sm:$0xff]
        %v357 = vld [vmem:[%s211 + $0x350] sm:$0xff]
        %v358 = vld [vmem:[%s211 + $0x358] sm:$0xff]
        %v359 = vld [vmem:[%s211 + $0x360] sm:$0xff]
        %v360 = vld [vmem:[%s211 + $0x368] sm:$0xff]
        %v361 = vld [vmem:[%s211 + $0x370] sm:$0xff]
        %v362 = vld [vmem:[%s211 + $0x378] sm:$0xff]
        %v363 = vld [vmem:[%s211 + $0x380] sm:$0xff]
        %v364 = vld [vmem:[%s211 + $0x388] sm:$0xff]
        %v365 = vld [vmem:[%s211 + $0x390] sm:$0xff]
        %v366 = vld [vmem:[%s211 + $0x398] sm:$0xff]
        %v367 = vld [vmem:[%s211 + $0x3a0] sm:$0xff]
        %v368 = vld [vmem:[%s211 + $0x3a8] sm:$0xff]
        %v369 = vld [vmem:[%s211 + $0x3b0] sm:$0xff]
        %v370 = vld [vmem:[%s211 + $0x3b8] sm:$0xff]
        %v371 = vld [vmem:[%s211 + $0x3c0] sm:$0xff]
        %v372 = vld [vmem:[%s211 + $0x3c8] sm:$0xff]
        %v373 = vld [vmem:[%s211 + $0x3d0] sm:$0xff]
        %v374 = vld [vmem:[%s211 + $0x3d8] sm:$0xff]
        %v375 = vld [vmem:[%s211 + $0x3e0] sm:$0xff]
        %v376 = vld [vmem:[%s211 + $0x3e8] sm:$0xff]
        %v377 = vld [vmem:[%s211 + $0x3f0] sm:$0xff]
        %v378 = vld [vmem:[%s211 + $0x3f8] sm:$0xff]
        %v379 = vld [vmem:[%s211 + $0x400] sm:$0xff]
        %v380 = vld [vmem:[%s211 + $0x408] sm:$0xff]
        %v381 = vld [vmem:[%s211 + $0x410] sm:$0xff]
        %v382 = vld [vmem:[%s211 + $0x418] sm:$0xff]
        %v383 = vld [vmem:[%s211 + $0x420] sm:$0xff]
        %v384 = vld [vmem:[%s211 + $0x428] sm:$0xff]
        %v385 = vld [vmem:[%s211 + $0x430] sm:$0xff]
        %v386 = vld [vmem:[%s211 + $0x438] sm:$0xff]
        %v387 = vld [vmem:[%s211 + $0x440] sm:$0xff]
        %v388 = vld [vmem:[%s211 + $0x448] sm:$0xff]
        %v389 = vld [vmem:[%s211 + $0x450] sm:$0xff]
        %v390 = vld [vmem:[%s211 + $0x458] sm:$0xff]
        %v391 = vld [vmem:[%s211 + $0x460] sm:$0xff]
        %v392 = vld [vmem:[%s211 + $0x468] sm:$0xff]
        %v393 = vld [vmem:[%s211 + $0x470] sm:$0xff]
        %v394 = vld [vmem:[%s211 + $0x478] sm:$0xff]
        %v395 = vld [vmem:[%s211 + $0x480] sm:$0xff]
        %v396 = vld [vmem:[%s211 + $0x488] sm:$0xff]
        %v397 = vld [vmem:[%s211 + $0x490] sm:$0xff]
        %v398 = vld [vmem:[%s211 + $0x498] sm:$0xff]
        %v399 = vld [vmem:[%s211 + $0x4a0] sm:$0xff]
        %v400 = vld [vmem:[%s211 + $0x4a8] sm:$0xff]
        %v401 = vld [vmem:[%s211 + $0x4b0] sm:$0xff]
        %v402 = vld [vmem:[%s211 + $0x4b8] sm:$0xff]
        %v403 = vld [vmem:[%s211 + $0x4c0] sm:$0xff]
        %v404 = vld [vmem:[%s211 + $0x4c8] sm:$0xff]
        %v405 = vld [vmem:[%s211 + $0x4d0] sm:$0xff]
        %v406 = vld [vmem:[%s211 + $0x4d8] sm:$0xff]
        %v407 = vld [vmem:[%s211 + $0x4e0] sm:$0xff]
        %v408 = vld [vmem:[%s211 + $0x4e8] sm:$0xff]
        %v409 = vld [vmem:[%s211 + $0x4f0] sm:$0xff]
        %v410 = vld [vmem:[%s211 + $0x4f8] sm:$0xff]
        %v411 = vld [vmem:[%s211 + $0x500] sm:$0xff]
        %v412 = vld [vmem:[%s211 + $0x508] sm:$0xff]
        %v413 = vld [vmem:[%s211 + $0x510] sm:$0xff]
        %v414 = vld [vmem:[%s211 + $0x518] sm:$0xff]
        %v415 = vld [vmem:[%s211 + $0x520] sm:$0xff]
        %v416 = vld [vmem:[%s211 + $0x528] sm:$0xff]
        %v417 = vld [vmem:[%s211 + $0x530] sm:$0xff]
        %v418 = vld [vmem:[%s211 + $0x538] sm:$0xff]
        %v419 = vld [vmem:[%s211 + $0x540] sm:$0xff]
        %v420 = vld [vmem:[%s211 + $0x548] sm:$0xff]
        %v421 = vld [vmem:[%s211 + $0x550] sm:$0xff]
        %v422 = vld [vmem:[%s211 + $0x558] sm:$0xff]
        %v423 = vld [vmem:[%s211 + $0x560] sm:$0xff]
        %v424 = vld [vmem:[%s211 + $0x568] sm:$0xff]
        %v425 = vld [vmem:[%s211 + $0x570] sm:$0xff]
        %v426 = vld [vmem:[%s211 + $0x578] sm:$0xff]
        %v427 = vld [vmem:[%s211 + $0x580] sm:$0xff]
        %v428 = vld [vmem:[%s211 + $0x588] sm:$0xff]
        %v429 = vld [vmem:[%s211 + $0x590] sm:$0xff]
        %v430 = vld [vmem:[%s211 + $0x598] sm:$0xff]
        %v431 = vld [vmem:[%s211 + $0x5a0] sm:$0xff]
        %v432 = vld [vmem:[%s211 + $0x5a8] sm:$0xff]
        %v433 = vld [vmem:[%s211 + $0x5b0] sm:$0xff]
        %v434 = vld [vmem:[%s211 + $0x5b8] sm:$0xff]
        %v435 = vld [vmem:[%s211 + $0x5c0] sm:$0xff]
        %v436 = vld [vmem:[%s211 + $0x5c8] sm:$0xff]
        %v437 = vld [vmem:[%s211 + $0x5d0] sm:$0xff]
        %v438 = vld [vmem:[%s211 + $0x5d8] sm:$0xff]
        %v439 = vld [vmem:[%s211 + $0x5e0] sm:$0xff]
        %v440 = vld [vmem:[%s211 + $0x5e8] sm:$0xff]
        %v441 = vld [vmem:[%s211 + $0x5f0] sm:$0xff]
        %v442 = vld [vmem:[%s211 + $0x5f8] sm:$0xff]
        %v443 = vpack.c.bf16 %v257, %v251
        %v444 = vpack.c.bf16 %v258, %v252
        %v445 = vpack.c.bf16 %v259, %v253
        %v446 = vpack.c.bf16 %v260, %v254
        %v447 = vpack.c.bf16 %v261, %v255
        %v448 = vpack.c.bf16 %v262, %v256
        %v449 = vpack.c.bf16 %v269, %v263
        %v450 = vpack.c.bf16 %v270, %v264
        %v451 = vpack.c.bf16 %v271, %v265
        %v452 = vpack.c.bf16 %v272, %v266
        %v453 = vpack.c.bf16 %v273, %v267
        %v454 = vpack.c.bf16 %v274, %v268
        %v455 = vpack.c.bf16 %v281, %v275
        %v456 = vpack.c.bf16 %v282, %v276
        %v457 = vpack.c.bf16 %v283, %v277
        %v458 = vpack.c.bf16 %v284, %v278
        %v459 = vpack.c.bf16 %v285, %v279
        %v460 = vpack.c.bf16 %v286, %v280
        %v461 = vpack.c.bf16 %v293, %v287
        %v462 = vpack.c.bf16 %v294, %v288
        %v463 = vpack.c.bf16 %v295, %v289
        %v464 = vpack.c.bf16 %v296, %v290
        %v465 = vpack.c.bf16 %v297, %v291
        %v466 = vpack.c.bf16 %v298, %v292
        %v467 = vpack.c.bf16 %v305, %v299
        %v468 = vpack.c.bf16 %v306, %v300
        %v469 = vpack.c.bf16 %v307, %v301
        %v470 = vpack.c.bf16 %v308, %v302
        %v471 = vpack.c.bf16 %v309, %v303
        %v472 = vpack.c.bf16 %v310, %v304
        %v473 = vpack.c.bf16 %v317, %v311
        %v474 = vpack.c.bf16 %v318, %v312
        %v475 = vpack.c.bf16 %v319, %v313
        %v476 = vpack.c.bf16 %v320, %v314
        %v477 = vpack.c.bf16 %v321, %v315
        %v478 = vpack.c.bf16 %v322, %v316
        %v479 = vpack.c.bf16 %v329, %v323
        %v480 = vpack.c.bf16 %v330, %v324
        %v481 = vpack.c.bf16 %v331, %v325
        %v482 = vpack.c.bf16 %v332, %v326
        %v483 = vpack.c.bf16 %v333, %v327
        %v484 = vpack.c.bf16 %v334, %v328
        %v485 = vpack.c.bf16 %v341, %v335
        %v486 = vpack.c.bf16 %v342, %v336
        %v487 = vpack.c.bf16 %v343, %v337
        %v488 = vpack.c.bf16 %v344, %v338
        %v489 = vpack.c.bf16 %v345, %v339
        %v490 = vpack.c.bf16 %v346, %v340
        %v491 = vpack.c.bf16 %v353, %v347
        %v492 = vpack.c.bf16 %v354, %v348
        %v493 = vpack.c.bf16 %v355, %v349
        %v494 = vpack.c.bf16 %v356, %v350
        %v495 = vpack.c.bf16 %v357, %v351
        %v496 = vpack.c.bf16 %v358, %v352
        %v497 = vpack.c.bf16 %v365, %v359
        %v498 = vpack.c.bf16 %v366, %v360
        %v499 = vpack.c.bf16 %v367, %v361
        %v500 = vpack.c.bf16 %v368, %v362
        %v501 = vpack.c.bf16 %v369, %v363
        %v502 = vpack.c.bf16 %v370, %v364
        %v503 = vpack.c.bf16 %v377, %v371
        %v504 = vpack.c.bf16 %v378, %v372
        %v505 = vpack.c.bf16 %v379, %v373
        %v506 = vpack.c.bf16 %v380, %v374
        %v507 = vpack.c.bf16 %v381, %v375
        %v508 = vpack.c.bf16 %v382, %v376
        %v509 = vpack.c.bf16 %v389, %v383
        %v510 = vpack.c.bf16 %v390, %v384
        %v511 = vpack.c.bf16 %v391, %v385
        %v512 = vpack.c.bf16 %v392, %v386
        %v513 = vpack.c.bf16 %v393, %v387
        %v514 = vpack.c.bf16 %v394, %v388
        %v515 = vpack.c.bf16 %v401, %v395
        %v516 = vpack.c.bf16 %v402, %v396
        %v517 = vpack.c.bf16 %v403, %v397
        %v518 = vpack.c.bf16 %v404, %v398
        %v519 = vpack.c.bf16 %v405, %v399
        %v520 = vpack.c.bf16 %v406, %v400
        %v521 = vpack.c.bf16 %v413, %v407
        %v522 = vpack.c.bf16 %v414, %v408
        %v523 = vpack.c.bf16 %v415, %v409
        %v524 = vpack.c.bf16 %v416, %v410
        %v525 = vpack.c.bf16 %v417, %v411
        %v526 = vpack.c.bf16 %v418, %v412
        %v527 = vpack.c.bf16 %v425, %v419
        %v528 = vpack.c.bf16 %v426, %v420
        %v529 = vpack.c.bf16 %v427, %v421
        %v530 = vpack.c.bf16 %v428, %v422
        %v531 = vpack.c.bf16 %v429, %v423
        %v532 = vpack.c.bf16 %v430, %v424
        %v533 = vpack.c.bf16 %v437, %v431
        %v534 = vpack.c.bf16 %v438, %v432
        %v535 = vpack.c.bf16 %v439, %v433
        %v536 = vpack.c.bf16 %v440, %v434
        %v537 = vpack.c.bf16 %v441, %v435
        %v538 = vpack.c.bf16 %v442, %v436
        %v539 = vld [vmem:[#allocation6] sm:$0xff]
        %v540 = vld [vmem:[#allocation6 + $0x8] sm:$0xff]
        %v541 = vld [vmem:[#allocation6 + $0x10] sm:$0xff]
        %v542 = vld [vmem:[#allocation6 + $0x18] sm:$0xff]
        %v543 = vld [vmem:[#allocation6 + $0x20] sm:$0xff]
        %v544 = vld [vmem:[#allocation6 + $0x28] sm:$0xff]
        %v545 = vld [vmem:[#allocation6 + $0x30] sm:$0xff]
        %v546 = vld [vmem:[#allocation6 + $0x38] sm:$0xff]
        %v547 = vld [vmem:[#allocation6 + $0x40] sm:$0xff]
        %v548 = vld [vmem:[#allocation6 + $0x48] sm:$0xff]
        %v549 = vld [vmem:[#allocation6 + $0x50] sm:$0xff]
        %v550 = vld [vmem:[#allocation6 + $0x58] sm:$0xff]
        %v551 = vld [vmem:[#allocation6 + $0x60] sm:$0xff]
        %v552 = vld [vmem:[#allocation6 + $0x68] sm:$0xff]
        %v553 = vld [vmem:[#allocation6 + $0x70] sm:$0xff]
        %v554 = vld [vmem:[#allocation6 + $0x78] sm:$0xff]
        %v555 = vld [vmem:[#allocation6 + $0x80] sm:$0xff]
        %v556 = vld [vmem:[#allocation6 + $0x88] sm:$0xff]
        %v557 = vld [vmem:[#allocation6 + $0x90] sm:$0xff]
        %v558 = vld [vmem:[#allocation6 + $0x98] sm:$0xff]
        %v559 = vld [vmem:[#allocation6 + $0xa0] sm:$0xff]
        %v560 = vld [vmem:[#allocation6 + $0xa8] sm:$0xff]
        %v561 = vld [vmem:[#allocation6 + $0xb0] sm:$0xff]
        %v562 = vld [vmem:[#allocation6 + $0xb8] sm:$0xff]
        %v563 = vld [vmem:[#allocation6 + $0xc0] sm:$0xff]
        %v564 = vld [vmem:[#allocation6 + $0xc8] sm:$0xff]
        %v565 = vld [vmem:[#allocation6 + $0xd0] sm:$0xff]
        %v566 = vld [vmem:[#allocation6 + $0xd8] sm:$0xff]
        %v567 = vld [vmem:[#allocation6 + $0xe0] sm:$0xff]
        %v568 = vld [vmem:[#allocation6 + $0xe8] sm:$0xff]
        %v569 = vld [vmem:[#allocation6 + $0xf0] sm:$0xff]
        %v570 = vld [vmem:[#allocation6 + $0xf8] sm:$0xff]
        %v571 = vld [vmem:[#allocation6 + $0x100] sm:$0xff]
        %v572 = vld [vmem:[#allocation6 + $0x108] sm:$0xff]
        %v573 = vld [vmem:[#allocation6 + $0x110] sm:$0xff]
        %v574 = vld [vmem:[#allocation6 + $0x118] sm:$0xff]
        %v575 = vld [vmem:[#allocation6 + $0x120] sm:$0xff]
        %v576 = vld [vmem:[#allocation6 + $0x128] sm:$0xff]
        %v577 = vld [vmem:[#allocation6 + $0x130] sm:$0xff]
        %v578 = vld [vmem:[#allocation6 + $0x138] sm:$0xff]
        %v579 = vld [vmem:[#allocation6 + $0x140] sm:$0xff]
        %v580 = vld [vmem:[#allocation6 + $0x148] sm:$0xff]
        %v581 = vld [vmem:[#allocation6 + $0x150] sm:$0xff]
        %v582 = vld [vmem:[#allocation6 + $0x158] sm:$0xff]
        %v583 = vld [vmem:[#allocation6 + $0x160] sm:$0xff]
        %v584 = vld [vmem:[#allocation6 + $0x168] sm:$0xff]
        %v585 = vld [vmem:[#allocation6 + $0x170] sm:$0xff]
        %v586 = vld [vmem:[#allocation6 + $0x178] sm:$0xff]
        %v587 = vld [vmem:[#allocation6 + $0x180] sm:$0xff]
        %v588 = vld [vmem:[#allocation6 + $0x188] sm:$0xff]
        %v589 = vld [vmem:[#allocation6 + $0x190] sm:$0xff]
        %v590 = vld [vmem:[#allocation6 + $0x198] sm:$0xff]
        %v591 = vld [vmem:[#allocation6 + $0x1a0] sm:$0xff]
        %v592 = vld [vmem:[#allocation6 + $0x1a8] sm:$0xff]
        %v593 = vld [vmem:[#allocation6 + $0x1b0] sm:$0xff]
        %v594 = vld [vmem:[#allocation6 + $0x1b8] sm:$0xff]
        %v595 = vld [vmem:[#allocation6 + $0x1c0] sm:$0xff]
        %v596 = vld [vmem:[#allocation6 + $0x1c8] sm:$0xff]
        %v597 = vld [vmem:[#allocation6 + $0x1d0] sm:$0xff]
        %v598 = vld [vmem:[#allocation6 + $0x1d8] sm:$0xff]
        %v599 = vld [vmem:[#allocation6 + $0x1e0] sm:$0xff]
        %v600 = vld [vmem:[#allocation6 + $0x1e8] sm:$0xff]
        %v601 = vld [vmem:[#allocation6 + $0x1f0] sm:$0xff]
        %v602 = vld [vmem:[#allocation6 + $0x1f8] sm:$0xff]
        %v603 = vld [vmem:[#allocation6 + $0x200] sm:$0xff]
        %v604 = vld [vmem:[#allocation6 + $0x208] sm:$0xff]
        %v605 = vld [vmem:[#allocation6 + $0x210] sm:$0xff]
        %v606 = vld [vmem:[#allocation6 + $0x218] sm:$0xff]
        %v607 = vld [vmem:[#allocation6 + $0x220] sm:$0xff]
        %v608 = vld [vmem:[#allocation6 + $0x228] sm:$0xff]
        %v609 = vld [vmem:[#allocation6 + $0x230] sm:$0xff]
        %v610 = vld [vmem:[#allocation6 + $0x238] sm:$0xff]
        %v611 = vld [vmem:[#allocation6 + $0x240] sm:$0xff]
        %v612 = vld [vmem:[#allocation6 + $0x248] sm:$0xff]
        %v613 = vld [vmem:[#allocation6 + $0x250] sm:$0xff]
        %v614 = vld [vmem:[#allocation6 + $0x258] sm:$0xff]
        %v615 = vld [vmem:[#allocation6 + $0x260] sm:$0xff]
        %v616 = vld [vmem:[#allocation6 + $0x268] sm:$0xff]
        %v617 = vld [vmem:[#allocation6 + $0x270] sm:$0xff]
        %v618 = vld [vmem:[#allocation6 + $0x278] sm:$0xff]
        %v619 = vld [vmem:[#allocation6 + $0x280] sm:$0xff]
        %v620 = vld [vmem:[#allocation6 + $0x288] sm:$0xff]
        %v621 = vld [vmem:[#allocation6 + $0x290] sm:$0xff]
        %v622 = vld [vmem:[#allocation6 + $0x298] sm:$0xff]
        %v623 = vld [vmem:[#allocation6 + $0x2a0] sm:$0xff]
        %v624 = vld [vmem:[#allocation6 + $0x2a8] sm:$0xff]
        %v625 = vld [vmem:[#allocation6 + $0x2b0] sm:$0xff]
        %v626 = vld [vmem:[#allocation6 + $0x2b8] sm:$0xff]
        %v627 = vld [vmem:[#allocation6 + $0x2c0] sm:$0xff]
        %v628 = vld [vmem:[#allocation6 + $0x2c8] sm:$0xff]
        %v629 = vld [vmem:[#allocation6 + $0x2d0] sm:$0xff]
        %v630 = vld [vmem:[#allocation6 + $0x2d8] sm:$0xff]
        %v631 = vld [vmem:[#allocation6 + $0x2e0] sm:$0xff]
        %v632 = vld [vmem:[#allocation6 + $0x2e8] sm:$0xff]
        %v633 = vld [vmem:[#allocation6 + $0x2f0] sm:$0xff]
        %v634 = vld [vmem:[#allocation6 + $0x2f8] sm:$0xff]
        %v635 = vld [vmem:[%s2] ss:$2 sm:$0x3]
        %v637 = vlaneseq
        %v638 = vshrl.u32 %v637, 7
        %v639 = vsub.s32 0, %v638
        %v640 = vrot.slane %v635, %v639
        %v641 = vlaneseq
        %v642 = vshrl.u32 %v641, 7
        %v643 = vsub.s32 1, %v642
        %v644 = vrot.slane %v635, %v643
        %v743 = vunpack.c.l.b16 %v539
        %v744 = vunpack.c.h.b16 %v539
        %v745 = vunpack.c.l.b16 %v540
        %v746 = vunpack.c.h.b16 %v540
        %v747 = vunpack.c.l.b16 %v541
        %v748 = vunpack.c.h.b16 %v541
        %v749 = vunpack.c.l.b16 %v542
        %v750 = vunpack.c.h.b16 %v542
        %v751 = vunpack.c.l.b16 %v543
        %v752 = vunpack.c.h.b16 %v543
        %v753 = vunpack.c.l.b16 %v544
        %v754 = vunpack.c.h.b16 %v544
        %v755 = vunpack.c.l.b16 %v545
        %v756 = vunpack.c.h.b16 %v545
        %v757 = vunpack.c.l.b16 %v546
        %v758 = vunpack.c.h.b16 %v546
        %v759 = vunpack.c.l.b16 %v547
        %v760 = vunpack.c.h.b16 %v547
        %v761 = vunpack.c.l.b16 %v548
        %v762 = vunpack.c.h.b16 %v548
        %v763 = vunpack.c.l.b16 %v549
        %v764 = vunpack.c.h.b16 %v549
        %v765 = vunpack.c.l.b16 %v550
        %v766 = vunpack.c.h.b16 %v550
        %v767 = vunpack.c.l.b16 %v551
        %v768 = vunpack.c.h.b16 %v551
        %v769 = vunpack.c.l.b16 %v552
        %v770 = vunpack.c.h.b16 %v552
        %v771 = vunpack.c.l.b16 %v553
        %v772 = vunpack.c.h.b16 %v553
        %v773 = vunpack.c.l.b16 %v554
        %v774 = vunpack.c.h.b16 %v554
        %v775 = vunpack.c.l.b16 %v555
        %v776 = vunpack.c.h.b16 %v555
        %v777 = vunpack.c.l.b16 %v556
        %v778 = vunpack.c.h.b16 %v556
        %v779 = vunpack.c.l.b16 %v557
        %v780 = vunpack.c.h.b16 %v557
        %v781 = vunpack.c.l.b16 %v558
        %v782 = vunpack.c.h.b16 %v558
        %v783 = vunpack.c.l.b16 %v559
        %v784 = vunpack.c.h.b16 %v559
        %v785 = vunpack.c.l.b16 %v560
        %v786 = vunpack.c.h.b16 %v560
        %v787 = vunpack.c.l.b16 %v561
        %v788 = vunpack.c.h.b16 %v561
        %v789 = vunpack.c.l.b16 %v562
        %v790 = vunpack.c.h.b16 %v562
        %v791 = vunpack.c.l.b16 %v563
        %v792 = vunpack.c.h.b16 %v563
        %v793 = vunpack.c.l.b16 %v564
        %v794 = vunpack.c.h.b16 %v564
        %v795 = vunpack.c.l.b16 %v565
        %v796 = vunpack.c.h.b16 %v565
        %v797 = vunpack.c.l.b16 %v566
        %v798 = vunpack.c.h.b16 %v566
        %v799 = vunpack.c.l.b16 %v567
        %v800 = vunpack.c.h.b16 %v567
        %v801 = vunpack.c.l.b16 %v568
        %v802 = vunpack.c.h.b16 %v568
        %v803 = vunpack.c.l.b16 %v569
        %v804 = vunpack.c.h.b16 %v569
        %v805 = vunpack.c.l.b16 %v570
        %v806 = vunpack.c.h.b16 %v570
        %v807 = vunpack.c.l.b16 %v571
        %v808 = vunpack.c.h.b16 %v571
        %v809 = vunpack.c.l.b16 %v572
        %v810 = vunpack.c.h.b16 %v572
        %v811 = vunpack.c.l.b16 %v573
        %v812 = vunpack.c.h.b16 %v573
        %v813 = vunpack.c.l.b16 %v574
        %v814 = vunpack.c.h.b16 %v574
        %v815 = vunpack.c.l.b16 %v575
        %v816 = vunpack.c.h.b16 %v575
        %v817 = vunpack.c.l.b16 %v576
        %v818 = vunpack.c.h.b16 %v576
        %v819 = vunpack.c.l.b16 %v577
        %v820 = vunpack.c.h.b16 %v577
        %v821 = vunpack.c.l.b16 %v578
        %v822 = vunpack.c.h.b16 %v578
        %v823 = vunpack.c.l.b16 %v579
        %v824 = vunpack.c.h.b16 %v579
        %v825 = vunpack.c.l.b16 %v580
        %v826 = vunpack.c.h.b16 %v580
        %v827 = vunpack.c.l.b16 %v581
        %v828 = vunpack.c.h.b16 %v581
        %v829 = vunpack.c.l.b16 %v582
        %v830 = vunpack.c.h.b16 %v582
        %v831 = vunpack.c.l.b16 %v583
        %v832 = vunpack.c.h.b16 %v583
        %v833 = vunpack.c.l.b16 %v584
        %v834 = vunpack.c.h.b16 %v584
        %v835 = vunpack.c.l.b16 %v585
        %v836 = vunpack.c.h.b16 %v585
        %v837 = vunpack.c.l.b16 %v586
        %v838 = vunpack.c.h.b16 %v586
        %v839 = vunpack.c.l.b16 %v587
        %v840 = vunpack.c.h.b16 %v587
        %v841 = vunpack.c.l.b16 %v588
        %v842 = vunpack.c.h.b16 %v588
        %v843 = vunpack.c.l.b16 %v589
        %v844 = vunpack.c.h.b16 %v589
        %v845 = vunpack.c.l.b16 %v590
        %v846 = vunpack.c.h.b16 %v590
        %v847 = vunpack.c.l.b16 %v591
        %v848 = vunpack.c.h.b16 %v591
        %v849 = vunpack.c.l.b16 %v592
        %v850 = vunpack.c.h.b16 %v592
        %v851 = vunpack.c.l.b16 %v593
        %v852 = vunpack.c.h.b16 %v593
        %v853 = vunpack.c.l.b16 %v594
        %v854 = vunpack.c.h.b16 %v594
        %v855 = vunpack.c.l.b16 %v595
        %v856 = vunpack.c.h.b16 %v595
        %v857 = vunpack.c.l.b16 %v596
        %v858 = vunpack.c.h.b16 %v596
        %v859 = vunpack.c.l.b16 %v597
        %v860 = vunpack.c.h.b16 %v597
        %v861 = vunpack.c.l.b16 %v598
        %v862 = vunpack.c.h.b16 %v598
        %v863 = vunpack.c.l.b16 %v599
        %v864 = vunpack.c.h.b16 %v599
        %v865 = vunpack.c.l.b16 %v600
        %v866 = vunpack.c.h.b16 %v600
        %v867 = vunpack.c.l.b16 %v601
        %v868 = vunpack.c.h.b16 %v601
        %v869 = vunpack.c.l.b16 %v602
        %v870 = vunpack.c.h.b16 %v602
        %v871 = vunpack.c.l.b16 %v603
        %v872 = vunpack.c.h.b16 %v603
        %v873 = vunpack.c.l.b16 %v604
        %v874 = vunpack.c.h.b16 %v604
        %v875 = vunpack.c.l.b16 %v605
        %v876 = vunpack.c.h.b16 %v605
        %v877 = vunpack.c.l.b16 %v606
        %v878 = vunpack.c.h.b16 %v606
        %v879 = vunpack.c.l.b16 %v607
        %v880 = vunpack.c.h.b16 %v607
        %v881 = vunpack.c.l.b16 %v608
        %v882 = vunpack.c.h.b16 %v608
        %v883 = vunpack.c.l.b16 %v609
        %v884 = vunpack.c.h.b16 %v609
        %v885 = vunpack.c.l.b16 %v610
        %v886 = vunpack.c.h.b16 %v610
        %v887 = vunpack.c.l.b16 %v611
        %v888 = vunpack.c.h.b16 %v611
        %v889 = vunpack.c.l.b16 %v612
        %v890 = vunpack.c.h.b16 %v612
        %v891 = vunpack.c.l.b16 %v613
        %v892 = vunpack.c.h.b16 %v613
        %v893 = vunpack.c.l.b16 %v614
        %v894 = vunpack.c.h.b16 %v614
        %v895 = vunpack.c.l.b16 %v615
        %v896 = vunpack.c.h.b16 %v615
        %v897 = vunpack.c.l.b16 %v616
        %v898 = vunpack.c.h.b16 %v616
        %v899 = vunpack.c.l.b16 %v617
        %v900 = vunpack.c.h.b16 %v617
        %v901 = vunpack.c.l.b16 %v618
        %v902 = vunpack.c.h.b16 %v618
        %v903 = vunpack.c.l.b16 %v619
        %v904 = vunpack.c.h.b16 %v619
        %v905 = vunpack.c.l.b16 %v620
        %v906 = vunpack.c.h.b16 %v620
        %v907 = vunpack.c.l.b16 %v621
        %v908 = vunpack.c.h.b16 %v621
        %v909 = vunpack.c.l.b16 %v622
        %v910 = vunpack.c.h.b16 %v622
        %v911 = vunpack.c.l.b16 %v623
        %v912 = vunpack.c.h.b16 %v623
        %v913 = vunpack.c.l.b16 %v624
        %v914 = vunpack.c.h.b16 %v624
        %v915 = vunpack.c.l.b16 %v625
        %v916 = vunpack.c.h.b16 %v625
        %v917 = vunpack.c.l.b16 %v626
        %v918 = vunpack.c.h.b16 %v626
        %v919 = vunpack.c.l.b16 %v627
        %v920 = vunpack.c.h.b16 %v627
        %v921 = vunpack.c.l.b16 %v628
        %v922 = vunpack.c.h.b16 %v628
        %v923 = vunpack.c.l.b16 %v629
        %v924 = vunpack.c.h.b16 %v629
        %v925 = vunpack.c.l.b16 %v630
        %v926 = vunpack.c.h.b16 %v630
        %v927 = vunpack.c.l.b16 %v631
        %v928 = vunpack.c.h.b16 %v631
        %v929 = vunpack.c.l.b16 %v632
        %v930 = vunpack.c.h.b16 %v632
        %v931 = vunpack.c.l.b16 %v633
        %v932 = vunpack.c.h.b16 %v633
        %v933 = vunpack.c.l.b16 %v634
        %v934 = vunpack.c.h.b16 %v634
        %v935 = vpack.c.b16 %v745, %v743
        %v936 = vpack.c.b16 %v746, %v744
        %v937 = vpack.c.b16 %v749, %v747
        %v938 = vpack.c.b16 %v750, %v748
        %v939 = vpack.c.b16 %v753, %v751
        %v940 = vpack.c.b16 %v754, %v752
        %v941 = vpack.c.b16 %v757, %v755
        %v942 = vpack.c.b16 %v758, %v756
        %v943 = vpack.c.b16 %v761, %v759
        %v944 = vpack.c.b16 %v762, %v760
        %v945 = vpack.c.b16 %v765, %v763
        %v946 = vpack.c.b16 %v766, %v764
        %v947 = vpack.c.b16 %v769, %v767
        %v948 = vpack.c.b16 %v770, %v768
        %v949 = vpack.c.b16 %v773, %v771
        %v950 = vpack.c.b16 %v774, %v772
        %v951 = vpack.c.b16 %v777, %v775
        %v952 = vpack.c.b16 %v778, %v776
        %v953 = vpack.c.b16 %v781, %v779
        %v954 = vpack.c.b16 %v782, %v780
        %v955 = vpack.c.b16 %v785, %v783
        %v956 = vpack.c.b16 %v786, %v784
        %v957 = vpack.c.b16 %v789, %v787
        %v958 = vpack.c.b16 %v790, %v788
        %v959 = vpack.c.b16 %v793, %v791
        %v960 = vpack.c.b16 %v794, %v792
        %v961 = vpack.c.b16 %v797, %v795
        %v962 = vpack.c.b16 %v798, %v796
        %v963 = vpack.c.b16 %v801, %v799
        %v964 = vpack.c.b16 %v802, %v800
        %v965 = vpack.c.b16 %v805, %v803
        %v966 = vpack.c.b16 %v806, %v804
        %v967 = vpack.c.b16 %v809, %v807
        %v968 = vpack.c.b16 %v810, %v808
        %v969 = vpack.c.b16 %v813, %v811
        %v970 = vpack.c.b16 %v814, %v812
        %v971 = vpack.c.b16 %v817, %v815
        %v972 = vpack.c.b16 %v818, %v816
        %v973 = vpack.c.b16 %v821, %v819
        %v974 = vpack.c.b16 %v822, %v820
        %v975 = vpack.c.b16 %v825, %v823
        %v976 = vpack.c.b16 %v826, %v824
        %v977 = vpack.c.b16 %v829, %v827
        %v978 = vpack.c.b16 %v830, %v828
        %v979 = vpack.c.b16 %v833, %v831
        %v980 = vpack.c.b16 %v834, %v832
        %v981 = vpack.c.b16 %v837, %v835
        %v982 = vpack.c.b16 %v838, %v836
        %v983 = vpack.c.b16 %v841, %v839
        %v984 = vpack.c.b16 %v842, %v840
        %v985 = vpack.c.b16 %v845, %v843
        %v986 = vpack.c.b16 %v846, %v844
        %v987 = vpack.c.b16 %v849, %v847
        %v988 = vpack.c.b16 %v850, %v848
        %v989 = vpack.c.b16 %v853, %v851
        %v990 = vpack.c.b16 %v854, %v852
        %v991 = vpack.c.b16 %v857, %v855
        %v992 = vpack.c.b16 %v858, %v856
        %v993 = vpack.c.b16 %v861, %v859
        %v994 = vpack.c.b16 %v862, %v860
        %v995 = vpack.c.b16 %v865, %v863
        %v996 = vpack.c.b16 %v866, %v864
        %v997 = vpack.c.b16 %v869, %v867
        %v998 = vpack.c.b16 %v870, %v868
        %v999 = vpack.c.b16 %v873, %v871
        %v1000 = vpack.c.b16 %v874, %v872
        %v1001 = vpack.c.b16 %v877, %v875
        %v1002 = vpack.c.b16 %v878, %v876
        %v1003 = vpack.c.b16 %v881, %v879
        %v1004 = vpack.c.b16 %v882, %v880
        %v1005 = vpack.c.b16 %v885, %v883
        %v1006 = vpack.c.b16 %v886, %v884
        %v1007 = vpack.c.b16 %v889, %v887
        %v1008 = vpack.c.b16 %v890, %v888
        %v1009 = vpack.c.b16 %v893, %v891
        %v1010 = vpack.c.b16 %v894, %v892
        %v1011 = vpack.c.b16 %v897, %v895
        %v1012 = vpack.c.b16 %v898, %v896
        %v1013 = vpack.c.b16 %v901, %v899
        %v1014 = vpack.c.b16 %v902, %v900
        %v1015 = vpack.c.b16 %v905, %v903
        %v1016 = vpack.c.b16 %v906, %v904
        %v1017 = vpack.c.b16 %v909, %v907
        %v1018 = vpack.c.b16 %v910, %v908
        %v1019 = vpack.c.b16 %v913, %v911
        %v1020 = vpack.c.b16 %v914, %v912
        %v1021 = vpack.c.b16 %v917, %v915
        %v1022 = vpack.c.b16 %v918, %v916
        %v1023 = vpack.c.b16 %v921, %v919
        %v1024 = vpack.c.b16 %v922, %v920
        %v1025 = vpack.c.b16 %v925, %v923
        %v1026 = vpack.c.b16 %v926, %v924
        %v1027 = vpack.c.b16 %v929, %v927
        %v1028 = vpack.c.b16 %v930, %v928
        %v1029 = vpack.c.b16 %v933, %v931
        %v1030 = vpack.c.b16 %v934, %v932
        %1127 = vmatprep.subr.bf16.mxu0 %v936
        %1128 = vmatpush1.bf16.msra.mxu0 %v935
        %1129 = vmatprep.subr.bf16.mxu0 %v938
        %1130 = vmatpush1.bf16.msra.mxu0 %v937
        %1131 = vmatprep.subr.bf16.mxu0 %v940
        %1132 = vmatpush1.bf16.msra.mxu0 %v939
        %1133 = vmatprep.subr.bf16.mxu0 %v942
        %1134 = vmatpush1.bf16.msra.mxu0 %v941
        %1135 = vmatprep.subr.bf16.mxu0 %v944
        %1136 = vmatpush1.bf16.msra.mxu0 %v943
        %1137 = vmatprep.subr.bf16.mxu0 %v946
        %1138 = vmatpush1.bf16.msra.mxu0 %v945
        %1139 = vmatprep.subr.bf16.mxu0 %v948
        %1140 = vmatpush1.bf16.msra.mxu0 %v947
        %1141 = vmatprep.subr.bf16.mxu0 %v950
        %1142 = vmatpush1.bf16.msra.mxu0 %v949
        %1143 = vmatprep.subr.bf16.mxu0 %v952
        %1144 = vmatpush1.bf16.msra.mxu0 %v951
        %1145 = vmatprep.subr.bf16.mxu0 %v954
        %1146 = vmatpush1.bf16.msra.mxu0 %v953
        %1147 = vmatprep.subr.bf16.mxu0 %v956
        %1148 = vmatpush1.bf16.msra.mxu0 %v955
        %1149 = vmatprep.subr.bf16.mxu0 %v958
        %1150 = vmatpush1.bf16.msra.mxu0 %v957
        %1151 = vmatprep.subr.bf16.mxu0 %v960
        %1152 = vmatpush1.bf16.msra.mxu0 %v959
        %1153 = vmatprep.subr.bf16.mxu0 %v962
        %1154 = vmatpush1.bf16.msra.mxu0 %v961
        %1155 = vmatprep.subr.bf16.mxu0 %v964
        %1156 = vmatpush1.bf16.msra.mxu0 %v963
        %1157 = vmatprep.subr.bf16.mxu0 %v966
        %1158 = vmatpush1.bf16.msra.mxu0 %v965
        %1159 = vmatprep.mubr.bf16.mxu0 %v444
        %1160 = vmatmul.mubr.bf16.gmra.mrb[0].mxu0 %v443
        %v1161 = vpop.f32.mrb[0].mxu0
        %v1162 = vadd.f32 %v640, %v1161
        %v1163 = vpop.f32.mrb[0].mxu0
        %v1164 = vadd.f32 %v644, %v1163
        %v1165 = vpop.f32.mrb[0].mxu0
        %v1166 = vadd.f32 %v640, %v1165
        %v1167 = vpop.f32.mrb[0].mxu0
        %v1168 = vadd.f32 %v644, %v1167
        %1169 = vmatprep.mubr.bf16.mxu0 %v450
        %1170 = vmatmul.mubr.bf16.gmra.mrb[0].mxu0 %v449
        %v1171 = vpop.f32.mrb[0].mxu0
        %v1172 = vadd.f32 %v640, %v1171
        %v1173 = vpop.f32.mrb[0].mxu0
        %v1174 = vadd.f32 %v644, %v1173
        %v1175 = vpop.f32.mrb[0].mxu0
        %v1176 = vadd.f32 %v640, %v1175
        %v1177 = vpop.f32.mrb[0].mxu0
        %v1178 = vadd.f32 %v644, %v1177
        %1179 = vmatprep.mubr.bf16.mxu0 %v456
        %1180 = vmatmul.mubr.bf16.gmra.mrb[0].mxu0 %v455
        %v1181 = vpop.f32.mrb[0].mxu0
        %v1182 = vadd.f32 %v640, %v1181
        %v1183 = vpop.f32.mrb[0].mxu0
        %v1184 = vadd.f32 %v644, %v1183
        %v1185 = vpop.f32.mrb[0].mxu0
        %v1186 = vadd.f32 %v640, %v1185
        %v1187 = vpop.f32.mrb[0].mxu0
        %v1188 = vadd.f32 %v644, %v1187
        %1189 = vmatprep.mubr.bf16.mxu0 %v462
        %1190 = vmatmul.mubr.bf16.gmra.mrb[0].mxu0 %v461
        %v1191 = vpop.f32.mrb[0].mxu0
        %v1192 = vadd.f32 %v640, %v1191
        %v1193 = vpop.f32.mrb[0].mxu0
        %v1194 = vadd.f32 %v644, %v1193
        %v1195 = vpop.f32.mrb[0].mxu0
        %v1196 = vadd.f32 %v640, %v1195
        %v1197 = vpop.f32.mrb[0].mxu0
        %v1198 = vadd.f32 %v644, %v1197
        %1199 = vmatprep.mubr.bf16.mxu0 %v468
        %1200 = vmatmul.mubr.bf16.gmra.mrb[0].mxu0 %v467
        %v1201 = vpop.f32.mrb[0].mxu0
        %v1202 = vadd.f32 %v640, %v1201
        %v1203 = vpop.f32.mrb[0].mxu0
        %v1204 = vadd.f32 %v644, %v1203
        %v1205 = vpop.f32.mrb[0].mxu0
        %v1206 = vadd.f32 %v640, %v1205
        %v1207 = vpop.f32.mrb[0].mxu0
        %v1208 = vadd.f32 %v644, %v1207
        %1209 = vmatprep.mubr.bf16.mxu0 %v474
        %1210 = vmatmul.mubr.bf16.gmra.mrb[0].mxu0 %v473
        %v1211 = vpop.f32.mrb[0].mxu0
        %v1212 = vadd.f32 %v640, %v1211
        %v1213 = vpop.f32.mrb[0].mxu0
        %v1214 = vadd.f32 %v644, %v1213
        %v1215 = vpop.f32.mrb[0].mxu0
        %v1216 = vadd.f32 %v640, %v1215
        %v1217 = vpop.f32.mrb[0].mxu0
        %v1218 = vadd.f32 %v644, %v1217
        %1219 = vmatprep.mubr.bf16.mxu0 %v480
        %1220 = vmatmul.mubr.bf16.gmra.mrb[0].mxu0 %v479
        %v1221 = vpop.f32.mrb[0].mxu0
        %v1222 = vadd.f32 %v640, %v1221
        %v1223 = vpop.f32.mrb[0].mxu0
        %v1224 = vadd.f32 %v644, %v1223
        %v1225 = vpop.f32.mrb[0].mxu0
        %v1226 = vadd.f32 %v640, %v1225
        %v1227 = vpop.f32.mrb[0].mxu0
        %v1228 = vadd.f32 %v644, %v1227
        %1229 = vmatprep.mubr.bf16.mxu0 %v486
        %1230 = vmatmul.mubr.bf16.gmra.mrb[0].mxu0 %v485
        %v1231 = vpop.f32.mrb[0].mxu0
        %v1232 = vadd.f32 %v640, %v1231
        %v1233 = vpop.f32.mrb[0].mxu0
        %v1234 = vadd.f32 %v644, %v1233
        %v1235 = vpop.f32.mrb[0].mxu0
        %v1236 = vadd.f32 %v640, %v1235
        %v1237 = vpop.f32.mrb[0].mxu0
        %v1238 = vadd.f32 %v644, %v1237
        %1239 = vmatprep.mubr.bf16.mxu0 %v492
        %1240 = vmatmul.mubr.bf16.gmra.mrb[0].mxu0 %v491
        %v1241 = vpop.f32.mrb[0].mxu0
        %v1242 = vadd.f32 %v640, %v1241
        %v1243 = vpop.f32.mrb[0].mxu0
        %v1244 = vadd.f32 %v644, %v1243
        %v1245 = vpop.f32.mrb[0].mxu0
        %v1246 = vadd.f32 %v640, %v1245
        %v1247 = vpop.f32.mrb[0].mxu0
        %v1248 = vadd.f32 %v644, %v1247
        %1249 = vmatprep.mubr.bf16.mxu0 %v498
        %1250 = vmatmul.mubr.bf16.gmra.mrb[0].mxu0 %v497
        %v1251 = vpop.f32.mrb[0].mxu0
        %v1252 = vadd.f32 %v640, %v1251
        %v1253 = vpop.f32.mrb[0].mxu0
        %v1254 = vadd.f32 %v644, %v1253
        %v1255 = vpop.f32.mrb[0].mxu0
        %v1256 = vadd.f32 %v640, %v1255
        %v1257 = vpop.f32.mrb[0].mxu0
        %v1258 = vadd.f32 %v644, %v1257
        %1259 = vmatprep.mubr.bf16.mxu0 %v504
        %1260 = vmatmul.mubr.bf16.gmra.mrb[0].mxu0 %v503
        %v1261 = vpop.f32.mrb[0].mxu0
        %v1262 = vadd.f32 %v640, %v1261
        %v1263 = vpop.f32.mrb[0].mxu0
        %v1264 = vadd.f32 %v644, %v1263
        %v1265 = vpop.f32.mrb[0].mxu0
        %v1266 = vadd.f32 %v640, %v1265
        %v1267 = vpop.f32.mrb[0].mxu0
        %v1268 = vadd.f32 %v644, %v1267
        %1269 = vmatprep.mubr.bf16.mxu0 %v510
        %1270 = vmatmul.mubr.bf16.gmra.mrb[0].mxu0 %v509
        %v1271 = vpop.f32.mrb[0].mxu0
        %v1272 = vadd.f32 %v640, %v1271
        %v1273 = vpop.f32.mrb[0].mxu0
        %v1274 = vadd.f32 %v644, %v1273
        %v1275 = vpop.f32.mrb[0].mxu0
        %v1276 = vadd.f32 %v640, %v1275
        %v1277 = vpop.f32.mrb[0].mxu0
        %v1278 = vadd.f32 %v644, %v1277
        %1279 = vmatprep.mubr.bf16.mxu0 %v516
        %1280 = vmatmul.mubr.bf16.gmra.mrb[0].mxu0 %v515
        %v1281 = vpop.f32.mrb[0].mxu0
        %v1282 = vadd.f32 %v640, %v1281
        %v1283 = vpop.f32.mrb[0].mxu0
        %v1284 = vadd.f32 %v644, %v1283
        %v1285 = vpop.f32.mrb[0].mxu0
        %v1286 = vadd.f32 %v640, %v1285
        %v1287 = vpop.f32.mrb[0].mxu0
        %v1288 = vadd.f32 %v644, %v1287
        %1289 = vmatprep.mubr.bf16.mxu0 %v522
        %1290 = vmatmul.mubr.bf16.gmra.mrb[0].mxu0 %v521
        %v1291 = vpop.f32.mrb[0].mxu0
        %v1292 = vadd.f32 %v640, %v1291
        %v1293 = vpop.f32.mrb[0].mxu0
        %v1294 = vadd.f32 %v644, %v1293
        %v1295 = vpop.f32.mrb[0].mxu0
        %v1296 = vadd.f32 %v640, %v1295
        %v1297 = vpop.f32.mrb[0].mxu0
        %v1298 = vadd.f32 %v644, %v1297
        %1299 = vmatprep.mubr.bf16.mxu0 %v528
        %1300 = vmatmul.mubr.bf16.gmra.mrb[0].mxu0 %v527
        %v1301 = vpop.f32.mrb[0].mxu0
        %v1302 = vadd.f32 %v640, %v1301
        %v1303 = vpop.f32.mrb[0].mxu0
        %v1304 = vadd.f32 %v644, %v1303
        %v1305 = vpop.f32.mrb[0].mxu0
        %v1306 = vadd.f32 %v640, %v1305
        %v1307 = vpop.f32.mrb[0].mxu0
        %v1308 = vadd.f32 %v644, %v1307
        %1309 = vmatprep.mubr.bf16.mxu0 %v534
        %1310 = vmatmul.mubr.bf16.gmra.mrb[0].mxu0 %v533
        %v1311 = vpop.f32.mrb[0].mxu0
        %v1312 = vadd.f32 %v640, %v1311
        %v1313 = vpop.f32.mrb[0].mxu0
        %v1314 = vadd.f32 %v644, %v1313
        %v1315 = vpop.f32.mrb[0].mxu0
        %v1316 = vadd.f32 %v640, %v1315
        %v1317 = vpop.f32.mrb[0].mxu0
        %v1318 = vadd.f32 %v644, %v1317
        %1319 = vdwg.mxu0
        %1320 = vmatprep.subr.bf16.mxu0 %v968
        %1321 = vmatpush1.bf16.msra.mxu0 %v967
        %1322 = vmatprep.subr.bf16.mxu0 %v970
        %1323 = vmatpush1.bf16.msra.mxu0 %v969
        %1324 = vmatprep.subr.bf16.mxu0 %v972
        %1325 = vmatpush1.bf16.msra.mxu0 %v971
        %1326 = vmatprep.subr.bf16.mxu0 %v974
        %1327 = vmatpush1.bf16.msra.mxu0 %v973
        %1328 = vmatprep.subr.bf16.mxu0 %v976
        %1329 = vmatpush1.bf16.msra.mxu0 %v975
        %1330 = vmatprep.subr.bf16.mxu0 %v978
        %1331 = vmatpush1.bf16.msra.mxu0 %v977
        %1332 = vmatprep.subr.bf16.mxu0 %v980
        %1333 = vmatpush1.bf16.msra.mxu0 %v979
        %1334 = vmatprep.subr.bf16.mxu0 %v982
        %1335 = vmatpush1.bf16.msra.mxu0 %v981
        %1336 = vmatprep.subr.bf16.mxu0 %v984
        %1337 = vmatpush1.bf16.msra.mxu0 %v983
        %1338 = vmatprep.subr.bf16.mxu0 %v986
        %1339 = vmatpush1.bf16.msra.mxu0 %v985
        %1340 = vmatprep.subr.bf16.mxu0 %v988
        %1341 = vmatpush1.bf16.msra.mxu0 %v987
        %1342 = vmatprep.subr.bf16.mxu0 %v990
        %1343 = vmatpush1.bf16.msra.mxu0 %v989
        %1344 = vmatprep.subr.bf16.mxu0 %v992
        %1345 = vmatpush1.bf16.msra.mxu0 %v991
        %1346 = vmatprep.subr.bf16.mxu0 %v994
        %1347 = vmatpush1.bf16.msra.mxu0 %v993
        %1348 = vmatprep.subr.bf16.mxu0 %v996
        %1349 = vmatpush1.bf16.msra.mxu0 %v995
        %1350 = vmatprep.subr.bf16.mxu0 %v998
        %1351 = vmatpush1.bf16.msra.mxu0 %v997
        %1352 = vmatprep.mubr.bf16.mxu0 %v446
        %1353 = vmatmul.mubr.bf16.gmra.mrb[0].mxu0 %v445
        %v1354 = vpop.f32.mrb[0].mxu0
        %v1355 = vadd.f32 %v1162, %v1354
        %v1356 = vpop.f32.mrb[0].mxu0
        %v1357 = vadd.f32 %v1164, %v1356
        %v1358 = vpop.f32.mrb[0].mxu0
        %v1359 = vadd.f32 %v1166, %v1358
        %v1360 = vpop.f32.mrb[0].mxu0
        %v1361 = vadd.f32 %v1168, %v1360
        %1362 = vmatprep.mubr.bf16.mxu0 %v452
        %1363 = vmatmul.mubr.bf16.gmra.mrb[0].mxu0 %v451
        %v1364 = vpop.f32.mrb[0].mxu0
        %v1365 = vadd.f32 %v1172, %v1364
        %v1366 = vpop.f32.mrb[0].mxu0
        %v1367 = vadd.f32 %v1174, %v1366
        %v1368 = vpop.f32.mrb[0].mxu0
        %v1369 = vadd.f32 %v1176, %v1368
        %v1370 = vpop.f32.mrb[0].mxu0
        %v1371 = vadd.f32 %v1178, %v1370
        %1372 = vmatprep.mubr.bf16.mxu0 %v458
        %1373 = vmatmul.mubr.bf16.gmra.mrb[0].mxu0 %v457
        %v1374 = vpop.f32.mrb[0].mxu0
        %v1375 = vadd.f32 %v1182, %v1374
        %v1376 = vpop.f32.mrb[0].mxu0
        %v1377 = vadd.f32 %v1184, %v1376
        %v1378 = vpop.f32.mrb[0].mxu0
        %v1379 = vadd.f32 %v1186, %v1378
        %v1380 = vpop.f32.mrb[0].mxu0
        %v1381 = vadd.f32 %v1188, %v1380
        %1382 = vmatprep.mubr.bf16.mxu0 %v464
        %1383 = vmatmul.mubr.bf16.gmra.mrb[0].mxu0 %v463
        %v1384 = vpop.f32.mrb[0].mxu0
        %v1385 = vadd.f32 %v1192, %v1384
        %v1386 = vpop.f32.mrb[0].mxu0
        %v1387 = vadd.f32 %v1194, %v1386
        %v1388 = vpop.f32.mrb[0].mxu0
        %v1389 = vadd.f32 %v1196, %v1388
        %v1390 = vpop.f32.mrb[0].mxu0
        %v1391 = vadd.f32 %v1198, %v1390
        %1392 = vmatprep.mubr.bf16.mxu0 %v470
        %1393 = vmatmul.mubr.bf16.gmra.mrb[0].mxu0 %v469
        %v1394 = vpop.f32.mrb[0].mxu0
        %v1395 = vadd.f32 %v1202, %v1394
        %v1396 = vpop.f32.mrb[0].mxu0
        %v1397 = vadd.f32 %v1204, %v1396
        %v1398 = vpop.f32.mrb[0].mxu0
        %v1399 = vadd.f32 %v1206, %v1398
        %v1400 = vpop.f32.mrb[0].mxu0
        %v1401 = vadd.f32 %v1208, %v1400
        %1402 = vmatprep.mubr.bf16.mxu0 %v476
        %1403 = vmatmul.mubr.bf16.gmra.mrb[0].mxu0 %v475
        %v1404 = vpop.f32.mrb[0].mxu0
        %v1405 = vadd.f32 %v1212, %v1404
        %v1406 = vpop.f32.mrb[0].mxu0
        %v1407 = vadd.f32 %v1214, %v1406
        %v1408 = vpop.f32.mrb[0].mxu0
        %v1409 = vadd.f32 %v1216, %v1408
        %v1410 = vpop.f32.mrb[0].mxu0
        %v1411 = vadd.f32 %v1218, %v1410
        %1412 = vmatprep.mubr.bf16.mxu0 %v482
        %1413 = vmatmul.mubr.bf16.gmra.mrb[0].mxu0 %v481
        %v1414 = vpop.f32.mrb[0].mxu0
        %v1415 = vadd.f32 %v1222, %v1414
        %v1416 = vpop.f32.mrb[0].mxu0
        %v1417 = vadd.f32 %v1224, %v1416
        %v1418 = vpop.f32.mrb[0].mxu0
        %v1419 = vadd.f32 %v1226, %v1418
        %v1420 = vpop.f32.mrb[0].mxu0
        %v1421 = vadd.f32 %v1228, %v1420
        %1422 = vmatprep.mubr.bf16.mxu0 %v488
        %1423 = vmatmul.mubr.bf16.gmra.mrb[0].mxu0 %v487
        %v1424 = vpop.f32.mrb[0].mxu0
        %v1425 = vadd.f32 %v1232, %v1424
        %v1426 = vpop.f32.mrb[0].mxu0
        %v1427 = vadd.f32 %v1234, %v1426
        %v1428 = vpop.f32.mrb[0].mxu0
        %v1429 = vadd.f32 %v1236, %v1428
        %v1430 = vpop.f32.mrb[0].mxu0
        %v1431 = vadd.f32 %v1238, %v1430
        %1432 = vmatprep.mubr.bf16.mxu0 %v494
        %1433 = vmatmul.mubr.bf16.gmra.mrb[0].mxu0 %v493
        %v1434 = vpop.f32.mrb[0].mxu0
        %v1435 = vadd.f32 %v1242, %v1434
        %v1436 = vpop.f32.mrb[0].mxu0
        %v1437 = vadd.f32 %v1244, %v1436
        %v1438 = vpop.f32.mrb[0].mxu0
        %v1439 = vadd.f32 %v1246, %v1438
        %v1440 = vpop.f32.mrb[0].mxu0
        %v1441 = vadd.f32 %v1248, %v1440
        %1442 = vmatprep.mubr.bf16.mxu0 %v500
        %1443 = vmatmul.mubr.bf16.gmra.mrb[0].mxu0 %v499
        %v1444 = vpop.f32.mrb[0].mxu0
        %v1445 = vadd.f32 %v1252, %v1444
        %v1446 = vpop.f32.mrb[0].mxu0
        %v1447 = vadd.f32 %v1254, %v1446
        %v1448 = vpop.f32.mrb[0].mxu0
        %v1449 = vadd.f32 %v1256, %v1448
        %v1450 = vpop.f32.mrb[0].mxu0
        %v1451 = vadd.f32 %v1258, %v1450
        %1452 = vmatprep.mubr.bf16.mxu0 %v506
        %1453 = vmatmul.mubr.bf16.gmra.mrb[0].mxu0 %v505
        %v1454 = vpop.f32.mrb[0].mxu0
        %v1455 = vadd.f32 %v1262, %v1454
        %v1456 = vpop.f32.mrb[0].mxu0
        %v1457 = vadd.f32 %v1264, %v1456
        %v1458 = vpop.f32.mrb[0].mxu0
        %v1459 = vadd.f32 %v1266, %v1458
        %v1460 = vpop.f32.mrb[0].mxu0
        %v1461 = vadd.f32 %v1268, %v1460
        %1462 = vmatprep.mubr.bf16.mxu0 %v512
        %1463 = vmatmul.mubr.bf16.gmra.mrb[0].mxu0 %v511
        %v1464 = vpop.f32.mrb[0].mxu0
        %v1465 = vadd.f32 %v1272, %v1464
        %v1466 = vpop.f32.mrb[0].mxu0
        %v1467 = vadd.f32 %v1274, %v1466
        %v1468 = vpop.f32.mrb[0].mxu0
        %v1469 = vadd.f32 %v1276, %v1468
        %v1470 = vpop.f32.mrb[0].mxu0
        %v1471 = vadd.f32 %v1278, %v1470
        %1472 = vmatprep.mubr.bf16.mxu0 %v518
        %1473 = vmatmul.mubr.bf16.gmra.mrb[0].mxu0 %v517
        %v1474 = vpop.f32.mrb[0].mxu0
        %v1475 = vadd.f32 %v1282, %v1474
        %v1476 = vpop.f32.mrb[0].mxu0
        %v1477 = vadd.f32 %v1284, %v1476
        %v1478 = vpop.f32.mrb[0].mxu0
        %v1479 = vadd.f32 %v1286, %v1478
        %v1480 = vpop.f32.mrb[0].mxu0
        %v1481 = vadd.f32 %v1288, %v1480
        %1482 = vmatprep.mubr.bf16.mxu0 %v524
        %1483 = vmatmul.mubr.bf16.gmra.mrb[0].mxu0 %v523
        %v1484 = vpop.f32.mrb[0].mxu0
        %v1485 = vadd.f32 %v1292, %v1484
        %v1486 = vpop.f32.mrb[0].mxu0
        %v1487 = vadd.f32 %v1294, %v1486
        %v1488 = vpop.f32.mrb[0].mxu0
        %v1489 = vadd.f32 %v1296, %v1488
        %v1490 = vpop.f32.mrb[0].mxu0
        %v1491 = vadd.f32 %v1298, %v1490
        %1492 = vmatprep.mubr.bf16.mxu0 %v530
        %1493 = vmatmul.mubr.bf16.gmra.mrb[0].mxu0 %v529
        %v1494 = vpop.f32.mrb[0].mxu0
        %v1495 = vadd.f32 %v1302, %v1494
        %v1496 = vpop.f32.mrb[0].mxu0
        %v1497 = vadd.f32 %v1304, %v1496
        %v1498 = vpop.f32.mrb[0].mxu0
        %v1499 = vadd.f32 %v1306, %v1498
        %v1500 = vpop.f32.mrb[0].mxu0
        %v1501 = vadd.f32 %v1308, %v1500
        %1502 = vmatprep.mubr.bf16.mxu0 %v536
        %1503 = vmatmul.mubr.bf16.gmra.mrb[0].mxu0 %v535
        %v1504 = vpop.f32.mrb[0].mxu0
        %v1505 = vadd.f32 %v1312, %v1504
        %v1506 = vpop.f32.mrb[0].mxu0
        %v1507 = vadd.f32 %v1314, %v1506
        %v1508 = vpop.f32.mrb[0].mxu0
        %v1509 = vadd.f32 %v1316, %v1508
        %v1510 = vpop.f32.mrb[0].mxu0
        %v1511 = vadd.f32 %v1318, %v1510
        %1512 = vdwg.mxu0
        %1513 = vmatprep.subr.bf16.mxu0 %v1000
        %1514 = vmatpush1.bf16.msra.mxu0 %v999
        %1515 = vmatprep.subr.bf16.mxu0 %v1002
        %1516 = vmatpush1.bf16.msra.mxu0 %v1001
        %1517 = vmatprep.subr.bf16.mxu0 %v1004
        %1518 = vmatpush1.bf16.msra.mxu0 %v1003
        %1519 = vmatprep.subr.bf16.mxu0 %v1006
        %1520 = vmatpush1.bf16.msra.mxu0 %v1005
        %1521 = vmatprep.subr.bf16.mxu0 %v1008
        %1522 = vmatpush1.bf16.msra.mxu0 %v1007
        %1523 = vmatprep.subr.bf16.mxu0 %v1010
        %1524 = vmatpush1.bf16.msra.mxu0 %v1009
        %1525 = vmatprep.subr.bf16.mxu0 %v1012
        %1526 = vmatpush1.bf16.msra.mxu0 %v1011
        %1527 = vmatprep.subr.bf16.mxu0 %v1014
        %1528 = vmatpush1.bf16.msra.mxu0 %v1013
        %1529 = vmatprep.subr.bf16.mxu0 %v1016
        %1530 = vmatpush1.bf16.msra.mxu0 %v1015
        %1531 = vmatprep.subr.bf16.mxu0 %v1018
        %1532 = vmatpush1.bf16.msra.mxu0 %v1017
        %1533 = vmatprep.subr.bf16.mxu0 %v1020
        %1534 = vmatpush1.bf16.msra.mxu0 %v1019
        %1535 = vmatprep.subr.bf16.mxu0 %v1022
        %1536 = vmatpush1.bf16.msra.mxu0 %v1021
        %1537 = vmatprep.subr.bf16.mxu0 %v1024
        %1538 = vmatpush1.bf16.msra.mxu0 %v1023
        %1539 = vmatprep.subr.bf16.mxu0 %v1026
        %1540 = vmatpush1.bf16.msra.mxu0 %v1025
        %1541 = vmatprep.subr.bf16.mxu0 %v1028
        %1542 = vmatpush1.bf16.msra.mxu0 %v1027
        %1543 = vmatprep.subr.bf16.mxu0 %v1030
        %1544 = vmatpush1.bf16.msra.mxu0 %v1029
        %1545 = vmatprep.mubr.bf16.mxu0 %v448
        %1546 = vmatmul.mubr.bf16.gmra.mrb[0].mxu0 %v447
        %v1547 = vpop.f32.mrb[0].mxu0
        %v1548 = vadd.f32 %v1355, %v1547
        %v1549 = vpop.f32.mrb[0].mxu0
        %v1550 = vadd.f32 %v1357, %v1549
        %v1551 = vpop.f32.mrb[0].mxu0
        %v1552 = vadd.f32 %v1359, %v1551
        %v1553 = vpop.f32.mrb[0].mxu0
        %v1554 = vadd.f32 %v1361, %v1553
        %1555 = vmatprep.mubr.bf16.mxu0 %v454
        %1556 = vmatmul.mubr.bf16.gmra.mrb[0].mxu0 %v453
        %v1557 = vpop.f32.mrb[0].mxu0
        %v1558 = vadd.f32 %v1365, %v1557
        %v1559 = vpop.f32.mrb[0].mxu0
        %v1560 = vadd.f32 %v1367, %v1559
        %v1561 = vpop.f32.mrb[0].mxu0
        %v1562 = vadd.f32 %v1369, %v1561
        %v1563 = vpop.f32.mrb[0].mxu0
        %v1564 = vadd.f32 %v1371, %v1563
        %1565 = vmatprep.mubr.bf16.mxu0 %v460
        %1566 = vmatmul.mubr.bf16.gmra.mrb[0].mxu0 %v459
        %v1567 = vpop.f32.mrb[0].mxu0
        %v1568 = vadd.f32 %v1375, %v1567
        %v1569 = vpop.f32.mrb[0].mxu0
        %v1570 = vadd.f32 %v1377, %v1569
        %v1571 = vpop.f32.mrb[0].mxu0
        %v1572 = vadd.f32 %v1379, %v1571
        %v1573 = vpop.f32.mrb[0].mxu0
        %v1574 = vadd.f32 %v1381, %v1573
        %1575 = vmatprep.mubr.bf16.mxu0 %v466
        %1576 = vmatmul.mubr.bf16.gmra.mrb[0].mxu0 %v465
        %v1577 = vpop.f32.mrb[0].mxu0
        %v1578 = vadd.f32 %v1385, %v1577
        %v1579 = vpop.f32.mrb[0].mxu0
        %v1580 = vadd.f32 %v1387, %v1579
        %v1581 = vpop.f32.mrb[0].mxu0
        %v1582 = vadd.f32 %v1389, %v1581
        %v1583 = vpop.f32.mrb[0].mxu0
        %v1584 = vadd.f32 %v1391, %v1583
        %1585 = vmatprep.mubr.bf16.mxu0 %v472
        %1586 = vmatmul.mubr.bf16.gmra.mrb[0].mxu0 %v471
        %v1587 = vpop.f32.mrb[0].mxu0
        %v1588 = vadd.f32 %v1395, %v1587
        %v1589 = vpop.f32.mrb[0].mxu0
        %v1590 = vadd.f32 %v1397, %v1589
        %v1591 = vpop.f32.mrb[0].mxu0
        %v1592 = vadd.f32 %v1399, %v1591
        %v1593 = vpop.f32.mrb[0].mxu0
        %v1594 = vadd.f32 %v1401, %v1593
        %1595 = vmatprep.mubr.bf16.mxu0 %v478
        %1596 = vmatmul.mubr.bf16.gmra.mrb[0].mxu0 %v477
        %v1597 = vpop.f32.mrb[0].mxu0
        %v1598 = vadd.f32 %v1405, %v1597
        %v1599 = vpop.f32.mrb[0].mxu0
        %v1600 = vadd.f32 %v1407, %v1599
        %v1601 = vpop.f32.mrb[0].mxu0
        %v1602 = vadd.f32 %v1409, %v1601
        %v1603 = vpop.f32.mrb[0].mxu0
        %v1604 = vadd.f32 %v1411, %v1603
        %1605 = vmatprep.mubr.bf16.mxu0 %v484
        %1606 = vmatmul.mubr.bf16.gmra.mrb[0].mxu0 %v483
        %v1607 = vpop.f32.mrb[0].mxu0
        %v1608 = vadd.f32 %v1415, %v1607
        %v1609 = vpop.f32.mrb[0].mxu0
        %v1610 = vadd.f32 %v1417, %v1609
        %v1611 = vpop.f32.mrb[0].mxu0
        %v1612 = vadd.f32 %v1419, %v1611
        %v1613 = vpop.f32.mrb[0].mxu0
        %v1614 = vadd.f32 %v1421, %v1613
        %1615 = vmatprep.mubr.bf16.mxu0 %v490
        %1616 = vmatmul.mubr.bf16.gmra.mrb[0].mxu0 %v489
        %v1617 = vpop.f32.mrb[0].mxu0
        %v1618 = vadd.f32 %v1425, %v1617
        %v1619 = vpop.f32.mrb[0].mxu0
        %v1620 = vadd.f32 %v1427, %v1619
        %v1621 = vpop.f32.mrb[0].mxu0
        %v1622 = vadd.f32 %v1429, %v1621
        %v1623 = vpop.f32.mrb[0].mxu0
        %v1624 = vadd.f32 %v1431, %v1623
        %1625 = vmatprep.mubr.bf16.mxu0 %v496
        %1626 = vmatmul.mubr.bf16.gmra.mrb[0].mxu0 %v495
        %v1627 = vpop.f32.mrb[0].mxu0
        %v1628 = vadd.f32 %v1435, %v1627
        %v1629 = vpop.f32.mrb[0].mxu0
        %v1630 = vadd.f32 %v1437, %v1629
        %v1631 = vpop.f32.mrb[0].mxu0
        %v1632 = vadd.f32 %v1439, %v1631
        %v1633 = vpop.f32.mrb[0].mxu0
        %v1634 = vadd.f32 %v1441, %v1633
        %1635 = vmatprep.mubr.bf16.mxu0 %v502
        %1636 = vmatmul.mubr.bf16.gmra.mrb[0].mxu0 %v501
        %v1637 = vpop.f32.mrb[0].mxu0
        %v1638 = vadd.f32 %v1445, %v1637
        %v1639 = vpop.f32.mrb[0].mxu0
        %v1640 = vadd.f32 %v1447, %v1639
        %v1641 = vpop.f32.mrb[0].mxu0
        %v1642 = vadd.f32 %v1449, %v1641
        %v1643 = vpop.f32.mrb[0].mxu0
        %v1644 = vadd.f32 %v1451, %v1643
        %1645 = vmatprep.mubr.bf16.mxu0 %v508
        %1646 = vmatmul.mubr.bf16.gmra.mrb[0].mxu0 %v507
        %v1647 = vpop.f32.mrb[0].mxu0
        %v1648 = vadd.f32 %v1455, %v1647
        %v1649 = vpop.f32.mrb[0].mxu0
        %v1650 = vadd.f32 %v1457, %v1649
        %v1651 = vpop.f32.mrb[0].mxu0
        %v1652 = vadd.f32 %v1459, %v1651
        %v1653 = vpop.f32.mrb[0].mxu0
        %v1654 = vadd.f32 %v1461, %v1653
        %1655 = vmatprep.mubr.bf16.mxu0 %v514
        %1656 = vmatmul.mubr.bf16.gmra.mrb[0].mxu0 %v513
        %v1657 = vpop.f32.mrb[0].mxu0
        %v1658 = vadd.f32 %v1465, %v1657
        %v1659 = vpop.f32.mrb[0].mxu0
        %v1660 = vadd.f32 %v1467, %v1659
        %v1661 = vpop.f32.mrb[0].mxu0
        %v1662 = vadd.f32 %v1469, %v1661
        %v1663 = vpop.f32.mrb[0].mxu0
        %v1664 = vadd.f32 %v1471, %v1663
        %1665 = vmatprep.mubr.bf16.mxu0 %v520
        %1666 = vmatmul.mubr.bf16.gmra.mrb[0].mxu0 %v519
        %v1667 = vpop.f32.mrb[0].mxu0
        %v1668 = vadd.f32 %v1475, %v1667
        %v1669 = vpop.f32.mrb[0].mxu0
        %v1670 = vadd.f32 %v1477, %v1669
        %v1671 = vpop.f32.mrb[0].mxu0
        %v1672 = vadd.f32 %v1479, %v1671
        %v1673 = vpop.f32.mrb[0].mxu0
        %v1674 = vadd.f32 %v1481, %v1673
        %1675 = vmatprep.mubr.bf16.mxu0 %v526
        %1676 = vmatmul.mubr.bf16.gmra.mrb[0].mxu0 %v525
        %v1677 = vpop.f32.mrb[0].mxu0
        %v1678 = vadd.f32 %v1485, %v1677
        %v1679 = vpop.f32.mrb[0].mxu0
        %v1680 = vadd.f32 %v1487, %v1679
        %v1681 = vpop.f32.mrb[0].mxu0
        %v1682 = vadd.f32 %v1489, %v1681
        %v1683 = vpop.f32.mrb[0].mxu0
        %v1684 = vadd.f32 %v1491, %v1683
        %1685 = vmatprep.mubr.bf16.mxu0 %v532
        %1686 = vmatmul.mubr.bf16.gmra.mrb[0].mxu0 %v531
        %v1687 = vpop.f32.mrb[0].mxu0
        %v1688 = vadd.f32 %v1495, %v1687
        %v1689 = vpop.f32.mrb[0].mxu0
        %v1690 = vadd.f32 %v1497, %v1689
        %v1691 = vpop.f32.mrb[0].mxu0
        %v1692 = vadd.f32 %v1499, %v1691
        %v1693 = vpop.f32.mrb[0].mxu0
        %v1694 = vadd.f32 %v1501, %v1693
        %1695 = vmatprep.mubr.bf16.mxu0 %v538
        %1696 = vmatmul.mubr.bf16.gmra.mrb[0].mxu0 %v537
        %v1697 = vpop.f32.mrb[0].mxu0
        %v1698 = vadd.f32 %v1505, %v1697
        %v1699 = vpop.f32.mrb[0].mxu0
        %v1700 = vadd.f32 %v1507, %v1699
        %v1701 = vpop.f32.mrb[0].mxu0
        %v1702 = vadd.f32 %v1509, %v1701
        %v1703 = vpop.f32.mrb[0].mxu0
        %v1704 = vadd.f32 %v1511, %v1703
        %1705 = vdwg.mxu0
        %v1706 = vmax.f32 %v1548, 0.0
        %v1707 = vmax.f32 %v1550, 0.0
        %v1708 = vmax.f32 %v1552, 0.0
        %v1709 = vmax.f32 %v1554, 0.0
        %v1710 = vmax.f32 %v1558, 0.0
        %v1711 = vmax.f32 %v1560, 0.0
        %v1712 = vmax.f32 %v1562, 0.0
        %v1713 = vmax.f32 %v1564, 0.0
        %v1714 = vmax.f32 %v1568, 0.0
        %v1715 = vmax.f32 %v1570, 0.0
        %v1716 = vmax.f32 %v1572, 0.0
        %v1717 = vmax.f32 %v1574, 0.0
        %v1718 = vmax.f32 %v1578, 0.0
        %v1719 = vmax.f32 %v1580, 0.0
        %v1720 = vmax.f32 %v1582, 0.0
        %v1721 = vmax.f32 %v1584, 0.0
        %v1722 = vmax.f32 %v1588, 0.0
        %v1723 = vmax.f32 %v1590, 0.0
        %v1724 = vmax.f32 %v1592, 0.0
        %v1725 = vmax.f32 %v1594, 0.0
        %v1726 = vmax.f32 %v1598, 0.0
        %v1727 = vmax.f32 %v1600, 0.0
        %v1728 = vmax.f32 %v1602, 0.0
        %v1729 = vmax.f32 %v1604, 0.0
        %v1730 = vmax.f32 %v1608, 0.0
        %v1731 = vmax.f32 %v1610, 0.0
        %v1732 = vmax.f32 %v1612, 0.0
        %v1733 = vmax.f32 %v1614, 0.0
        %v1734 = vmax.f32 %v1618, 0.0
        %v1735 = vmax.f32 %v1620, 0.0
        %v1736 = vmax.f32 %v1622, 0.0
        %v1737 = vmax.f32 %v1624, 0.0
        %v1738 = vmax.f32 %v1628, 0.0
        %v1739 = vmax.f32 %v1630, 0.0
        %v1740 = vmax.f32 %v1632, 0.0
        %v1741 = vmax.f32 %v1634, 0.0
        %v1742 = vmax.f32 %v1638, 0.0
        %v1743 = vmax.f32 %v1640, 0.0
        %v1744 = vmax.f32 %v1642, 0.0
        %v1745 = vmax.f32 %v1644, 0.0
        %v1746 = vmax.f32 %v1648, 0.0
        %v1747 = vmax.f32 %v1650, 0.0
        %v1748 = vmax.f32 %v1652, 0.0
        %v1749 = vmax.f32 %v1654, 0.0
        %v1750 = vmax.f32 %v1658, 0.0
        %v1751 = vmax.f32 %v1660, 0.0
        %v1752 = vmax.f32 %v1662, 0.0
        %v1753 = vmax.f32 %v1664, 0.0
        %v1754 = vmax.f32 %v1668, 0.0
        %v1755 = vmax.f32 %v1670, 0.0
        %v1756 = vmax.f32 %v1672, 0.0
        %v1757 = vmax.f32 %v1674, 0.0
        %v1758 = vmax.f32 %v1678, 0.0
        %v1759 = vmax.f32 %v1680, 0.0
        %v1760 = vmax.f32 %v1682, 0.0
        %v1761 = vmax.f32 %v1684, 0.0
        %v1762 = vmax.f32 %v1688, 0.0
        %v1763 = vmax.f32 %v1690, 0.0
        %v1764 = vmax.f32 %v1692, 0.0
        %v1765 = vmax.f32 %v1694, 0.0
        %v1766 = vmax.f32 %v1698, 0.0
        %v1767 = vmax.f32 %v1700, 0.0
        %v1768 = vmax.f32 %v1702, 0.0
        %v1769 = vmax.f32 %v1704, 0.0
        %s1770 = scalar_lea.vmem %s2, 1
        %v1771 = vld [vmem:[%s1770] ss:$2 sm:$0x3]
        %v1773 = vlaneseq
        %v1774 = vshrl.u32 %v1773, 7
        %v1775 = vsub.s32 0, %v1774
        %v1776 = vrot.slane %v1771, %v1775
        %v1777 = vlaneseq
        %v1778 = vshrl.u32 %v1777, 7
        %v1779 = vsub.s32 1, %v1778
        %v1780 = vrot.slane %v1771, %v1779
        %v1783 = vmul.f32 %v1706, %v1776
        %v1784 = vmul.f32 %v1707, %v1780
        %v1785 = vmul.f32 %v1708, %v1776
        %v1786 = vmul.f32 %v1709, %v1780
        %v1787 = vmul.f32 %v1710, %v1776
        %v1788 = vmul.f32 %v1711, %v1780
        %v1789 = vmul.f32 %v1712, %v1776
        %v1790 = vmul.f32 %v1713, %v1780
        %v1791 = vmul.f32 %v1714, %v1776
        %v1792 = vmul.f32 %v1715, %v1780
        %v1793 = vmul.f32 %v1716, %v1776
        %v1794 = vmul.f32 %v1717, %v1780
        %v1795 = vmul.f32 %v1718, %v1776
        %v1796 = vmul.f32 %v1719, %v1780
        %v1797 = vmul.f32 %v1720, %v1776
        %v1798 = vmul.f32 %v1721, %v1780
        %v1799 = vmul.f32 %v1722, %v1776
        %v1800 = vmul.f32 %v1723, %v1780
        %v1801 = vmul.f32 %v1724, %v1776
        %v1802 = vmul.f32 %v1725, %v1780
        %v1803 = vmul.f32 %v1726, %v1776
        %v1804 = vmul.f32 %v1727, %v1780
        %v1805 = vmul.f32 %v1728, %v1776
        %v1806 = vmul.f32 %v1729, %v1780
        %v1807 = vmul.f32 %v1730, %v1776
        %v1808 = vmul.f32 %v1731, %v1780
        %v1809 = vmul.f32 %v1732, %v1776
        %v1810 = vmul.f32 %v1733, %v1780
        %v1811 = vmul.f32 %v1734, %v1776
        %v1812 = vmul.f32 %v1735, %v1780
        %v1813 = vmul.f32 %v1736, %v1776
        %v1814 = vmul.f32 %v1737, %v1780
        %v1815 = vmul.f32 %v1738, %v1776
        %v1816 = vmul.f32 %v1739, %v1780
        %v1817 = vmul.f32 %v1740, %v1776
        %v1818 = vmul.f32 %v1741, %v1780
        %v1819 = vmul.f32 %v1742, %v1776
        %v1820 = vmul.f32 %v1743, %v1780
        %v1821 = vmul.f32 %v1744, %v1776
        %v1822 = vmul.f32 %v1745, %v1780
        %v1823 = vmul.f32 %v1746, %v1776
        %v1824 = vmul.f32 %v1747, %v1780
        %v1825 = vmul.f32 %v1748, %v1776
        %v1826 = vmul.f32 %v1749, %v1780
        %v1827 = vmul.f32 %v1750, %v1776
        %v1828 = vmul.f32 %v1751, %v1780
        %v1829 = vmul.f32 %v1752, %v1776
        %v1830 = vmul.f32 %v1753, %v1780
        %v1831 = vmul.f32 %v1754, %v1776
        %v1832 = vmul.f32 %v1755, %v1780
        %v1833 = vmul.f32 %v1756, %v1776
        %v1834 = vmul.f32 %v1757, %v1780
        %v1835 = vmul.f32 %v1758, %v1776
        %v1836 = vmul.f32 %v1759, %v1780
        %v1837 = vmul.f32 %v1760, %v1776
        %v1838 = vmul.f32 %v1761, %v1780
        %v1839 = vmul.f32 %v1762, %v1776
        %v1840 = vmul.f32 %v1763, %v1780
        %v1841 = vmul.f32 %v1764, %v1776
        %v1842 = vmul.f32 %v1765, %v1780
        %v1843 = vmul.f32 %v1766, %v1776
        %v1844 = vmul.f32 %v1767, %v1780
        %v1845 = vmul.f32 %v1768, %v1776
        %v1846 = vmul.f32 %v1769, %v1780
        %v1847 = vadd.f32 %v1783, %v1784
        %1848 = vadd.xlane.f32.xlu0 %v1847
        %v1849 = vpop.xlane.xlu0 %1848
        %v1850 = vadd.f32 %v1785, %v1786
        %1851 = vadd.xlane.f32.xlu0 %v1850
        %v1852 = vpop.xlane.xlu0 %1851
        %v1853 = vadd.f32 %v1787, %v1788
        %1854 = vadd.xlane.f32.xlu0 %v1853
        %v1855 = vpop.xlane.xlu0 %1854
        %v1856 = vadd.f32 %v1789, %v1790
        %1857 = vadd.xlane.f32.xlu0 %v1856
        %v1858 = vpop.xlane.xlu0 %1857
        %v1859 = vadd.f32 %v1791, %v1792
        %1860 = vadd.xlane.f32.xlu0 %v1859
        %v1861 = vpop.xlane.xlu0 %1860
        %v1862 = vadd.f32 %v1793, %v1794
        %1863 = vadd.xlane.f32.xlu0 %v1862
        %v1864 = vpop.xlane.xlu0 %1863
        %v1865 = vadd.f32 %v1795, %v1796
        %1866 = vadd.xlane.f32.xlu0 %v1865
        %v1867 = vpop.xlane.xlu0 %1866
        %v1868 = vadd.f32 %v1797, %v1798
        %1869 = vadd.xlane.f32.xlu0 %v1868
        %v1870 = vpop.xlane.xlu0 %1869
        %v1871 = vadd.f32 %v1799, %v1800
        %1872 = vadd.xlane.f32.xlu0 %v1871
        %v1873 = vpop.xlane.xlu0 %1872
        %v1874 = vadd.f32 %v1801, %v1802
        %1875 = vadd.xlane.f32.xlu0 %v1874
        %v1876 = vpop.xlane.xlu0 %1875
        %v1877 = vadd.f32 %v1803, %v1804
        %1878 = vadd.xlane.f32.xlu0 %v1877
        %v1879 = vpop.xlane.xlu0 %1878
        %v1880 = vadd.f32 %v1805, %v1806
        %1881 = vadd.xlane.f32.xlu0 %v1880
        %v1882 = vpop.xlane.xlu0 %1881
        %v1883 = vadd.f32 %v1807, %v1808
        %1884 = vadd.xlane.f32.xlu0 %v1883
        %v1885 = vpop.xlane.xlu0 %1884
        %v1886 = vadd.f32 %v1809, %v1810
        %1887 = vadd.xlane.f32.xlu0 %v1886
        %v1888 = vpop.xlane.xlu0 %1887
        %v1889 = vadd.f32 %v1811, %v1812
        %1890 = vadd.xlane.f32.xlu0 %v1889
        %v1891 = vpop.xlane.xlu0 %1890
        %v1892 = vadd.f32 %v1813, %v1814
        %1893 = vadd.xlane.f32.xlu0 %v1892
        %v1894 = vpop.xlane.xlu0 %1893
        %v1895 = vadd.f32 %v1815, %v1816
        %1896 = vadd.xlane.f32.xlu0 %v1895
        %v1897 = vpop.xlane.xlu0 %1896
        %v1898 = vadd.f32 %v1817, %v1818
        %1899 = vadd.xlane.f32.xlu0 %v1898
        %v1900 = vpop.xlane.xlu0 %1899
        %v1901 = vadd.f32 %v1819, %v1820
        %1902 = vadd.xlane.f32.xlu0 %v1901
        %v1903 = vpop.xlane.xlu0 %1902
        %v1904 = vadd.f32 %v1821, %v1822
        %1905 = vadd.xlane.f32.xlu0 %v1904
        %v1906 = vpop.xlane.xlu0 %1905
        %v1907 = vadd.f32 %v1823, %v1824
        %1908 = vadd.xlane.f32.xlu0 %v1907
        %v1909 = vpop.xlane.xlu0 %1908
        %v1910 = vadd.f32 %v1825, %v1826
        %1911 = vadd.xlane.f32.xlu0 %v1910
        %v1912 = vpop.xlane.xlu0 %1911
        %v1913 = vadd.f32 %v1827, %v1828
        %1914 = vadd.xlane.f32.xlu0 %v1913
        %v1915 = vpop.xlane.xlu0 %1914
        %v1916 = vadd.f32 %v1829, %v1830
        %1917 = vadd.xlane.f32.xlu0 %v1916
        %v1918 = vpop.xlane.xlu0 %1917
        %v1919 = vadd.f32 %v1831, %v1832
        %1920 = vadd.xlane.f32.xlu0 %v1919
        %v1921 = vpop.xlane.xlu0 %1920
        %v1922 = vadd.f32 %v1833, %v1834
        %1923 = vadd.xlane.f32.xlu0 %v1922
        %v1924 = vpop.xlane.xlu0 %1923
        %v1925 = vadd.f32 %v1835, %v1836
        %1926 = vadd.xlane.f32.xlu0 %v1925
        %v1927 = vpop.xlane.xlu0 %1926
        %v1928 = vadd.f32 %v1837, %v1838
        %1929 = vadd.xlane.f32.xlu0 %v1928
        %v1930 = vpop.xlane.xlu0 %1929
        %v1931 = vadd.f32 %v1839, %v1840
        %1932 = vadd.xlane.f32.xlu0 %v1931
        %v1933 = vpop.xlane.xlu0 %1932
        %v1934 = vadd.f32 %v1841, %v1842
        %1935 = vadd.xlane.f32.xlu0 %v1934
        %v1936 = vpop.xlane.xlu0 %1935
        %v1937 = vadd.f32 %v1843, %v1844
        %1938 = vadd.xlane.f32.xlu0 %v1937
        %v1939 = vpop.xlane.xlu0 %1938
        %v1940 = vadd.f32 %v1845, %v1846
        %1941 = vadd.xlane.f32.xlu0 %v1940
        %v1942 = vpop.xlane.xlu0 %1941
        %s1943 = sld [smem:[#allocation2]]
        %v1944 = vstv %s1943
        %v1945 = vadd.f32 %v1849, %v1944
        %v1946 = vadd.f32 %v1852, %v1944
        %v1947 = vadd.f32 %v1855, %v1944
        %v1948 = vadd.f32 %v1858, %v1944
        %v1949 = vadd.f32 %v1861, %v1944
        %v1950 = vadd.f32 %v1864, %v1944
        %v1951 = vadd.f32 %v1867, %v1944
        %v1952 = vadd.f32 %v1870, %v1944
        %v1953 = vadd.f32 %v1873, %v1944
        %v1954 = vadd.f32 %v1876, %v1944
        %v1955 = vadd.f32 %v1879, %v1944
        %v1956 = vadd.f32 %v1882, %v1944
        %v1957 = vadd.f32 %v1885, %v1944
        %v1958 = vadd.f32 %v1888, %v1944
        %v1959 = vadd.f32 %v1891, %v1944
        %v1960 = vadd.f32 %v1894, %v1944
        %v1961 = vadd.f32 %v1897, %v1944
        %v1962 = vadd.f32 %v1900, %v1944
        %v1963 = vadd.f32 %v1903, %v1944
        %v1964 = vadd.f32 %v1906, %v1944
        %v1965 = vadd.f32 %v1909, %v1944
        %v1966 = vadd.f32 %v1912, %v1944
        %v1967 = vadd.f32 %v1915, %v1944
        %v1968 = vadd.f32 %v1918, %v1944
        %v1969 = vadd.f32 %v1921, %v1944
        %v1970 = vadd.f32 %v1924, %v1944
        %v1971 = vadd.f32 %v1927, %v1944
        %v1972 = vadd.f32 %v1930, %v1944
        %v1973 = vadd.f32 %v1933, %v1944
        %v1974 = vadd.f32 %v1936, %v1944
        %v1975 = vadd.f32 %v1939, %v1944
        %v1976 = vadd.f32 %v1942, %v1944
        %v1977 = vsub.f32 0.0, %v1945
        %v1978 = vsub.f32 0.0, %v1946
        %v1979 = vsub.f32 0.0, %v1947
        %v1980 = vsub.f32 0.0, %v1948
        %v1981 = vsub.f32 0.0, %v1949
        %v1982 = vsub.f32 0.0, %v1950
        %v1983 = vsub.f32 0.0, %v1951
        %v1984 = vsub.f32 0.0, %v1952
        %v1985 = vsub.f32 0.0, %v1953
        %v1986 = vsub.f32 0.0, %v1954
        %v1987 = vsub.f32 0.0, %v1955
        %v1988 = vsub.f32 0.0, %v1956
        %v1989 = vsub.f32 0.0, %v1957
        %v1990 = vsub.f32 0.0, %v1958
        %v1991 = vsub.f32 0.0, %v1959
        %v1992 = vsub.f32 0.0, %v1960
        %v1993 = vsub.f32 0.0, %v1961
        %v1994 = vsub.f32 0.0, %v1962
        %v1995 = vsub.f32 0.0, %v1963
        %v1996 = vsub.f32 0.0, %v1964
        %v1997 = vsub.f32 0.0, %v1965
        %v1998 = vsub.f32 0.0, %v1966
        %v1999 = vsub.f32 0.0, %v1967
        %v2000 = vsub.f32 0.0, %v1968
        %v2001 = vsub.f32 0.0, %v1969
        %v2002 = vsub.f32 0.0, %v1970
        %v2003 = vsub.f32 0.0, %v1971
        %v2004 = vsub.f32 0.0, %v1972
        %v2005 = vsub.f32 0.0, %v1973
        %v2006 = vsub.f32 0.0, %v1974
        %v2007 = vsub.f32 0.0, %v1975
        %v2008 = vsub.f32 0.0, %v1976
        %v2009 = vmul.f32 %v1977, 1.442695
        %v2010 = vpow.pop %v2009
        %v2011 = vmul.f32 %v1978, 1.442695
        %v2012 = vpow.pop %v2011
        %v2013 = vmul.f32 %v1979, 1.442695
        %v2014 = vpow.pop %v2013
        %v2015 = vmul.f32 %v1980, 1.442695
        %v2016 = vpow.pop %v2015
        %v2017 = vmul.f32 %v1981, 1.442695
        %v2018 = vpow.pop %v2017
        %v2019 = vmul.f32 %v1982, 1.442695
        %v2020 = vpow.pop %v2019
        %v2021 = vmul.f32 %v1983, 1.442695
        %v2022 = vpow.pop %v2021
        %v2023 = vmul.f32 %v1984, 1.442695
        %v2024 = vpow.pop %v2023
        %v2025 = vmul.f32 %v1985, 1.442695
        %v2026 = vpow.pop %v2025
        %v2027 = vmul.f32 %v1986, 1.442695
        %v2028 = vpow.pop %v2027
        %v2029 = vmul.f32 %v1987, 1.442695
        %v2030 = vpow.pop %v2029
        %v2031 = vmul.f32 %v1988, 1.442695
        %v2032 = vpow.pop %v2031
        %v2033 = vmul.f32 %v1989, 1.442695
        %v2034 = vpow.pop %v2033
        %v2035 = vmul.f32 %v1990, 1.442695
        %v2036 = vpow.pop %v2035
        %v2037 = vmul.f32 %v1991, 1.442695
        %v2038 = vpow.pop %v2037
        %v2039 = vmul.f32 %v1992, 1.442695
        %v2040 = vpow.pop %v2039
        %v2041 = vmul.f32 %v1993, 1.442695
        %v2042 = vpow.pop %v2041
        %v2043 = vmul.f32 %v1994, 1.442695
        %v2044 = vpow.pop %v2043
        %v2045 = vmul.f32 %v1995, 1.442695
        %v2046 = vpow.pop %v2045
        %v2047 = vmul.f32 %v1996, 1.442695
        %v2048 = vpow.pop %v2047
        %v2049 = vmul.f32 %v1997, 1.442695
        %v2050 = vpow.pop %v2049
        %v2051 = vmul.f32 %v1998, 1.442695
        %v2052 = vpow.pop %v2051
        %v2053 = vmul.f32 %v1999, 1.442695
        %v2054 = vpow.pop %v2053
        %v2055 = vmul.f32 %v2000, 1.442695
        %v2056 = vpow.pop %v2055
        %v2057 = vmul.f32 %v2001, 1.442695
        %v2058 = vpow.pop %v2057
        %v2059 = vmul.f32 %v2002, 1.442695
        %v2060 = vpow.pop %v2059
        %v2061 = vmul.f32 %v2003, 1.442695
        %v2062 = vpow.pop %v2061
        %v2063 = vmul.f32 %v2004, 1.442695
        %v2064 = vpow.pop %v2063
        %v2065 = vmul.f32 %v2005, 1.442695
        %v2066 = vpow.pop %v2065
        %v2067 = vmul.f32 %v2006, 1.442695
        %v2068 = vpow.pop %v2067
        %v2069 = vmul.f32 %v2007, 1.442695
        %v2070 = vpow.pop %v2069
        %v2071 = vmul.f32 %v2008, 1.442695
        %v2072 = vpow.pop %v2071
        %v2073 = vadd.f32 %v2010, 1.0
        %v2074 = vadd.f32 %v2012, 1.0
        %v2075 = vadd.f32 %v2014, 1.0
        %v2076 = vadd.f32 %v2016, 1.0
        %v2077 = vadd.f32 %v2018, 1.0
        %v2078 = vadd.f32 %v2020, 1.0
        %v2079 = vadd.f32 %v2022, 1.0
        %v2080 = vadd.f32 %v2024, 1.0
        %v2081 = vadd.f32 %v2026, 1.0
        %v2082 = vadd.f32 %v2028, 1.0
        %v2083 = vadd.f32 %v2030, 1.0
        %v2084 = vadd.f32 %v2032, 1.0
        %v2085 = vadd.f32 %v2034, 1.0
        %v2086 = vadd.f32 %v2036, 1.0
        %v2087 = vadd.f32 %v2038, 1.0
        %v2088 = vadd.f32 %v2040, 1.0
        %v2089 = vadd.f32 %v2042, 1.0
        %v2090 = vadd.f32 %v2044, 1.0
        %v2091 = vadd.f32 %v2046, 1.0
        %v2092 = vadd.f32 %v2048, 1.0
        %v2093 = vadd.f32 %v2050, 1.0
        %v2094 = vadd.f32 %v2052, 1.0
        %v2095 = vadd.f32 %v2054, 1.0
        %v2096 = vadd.f32 %v2056, 1.0
        %v2097 = vadd.f32 %v2058, 1.0
        %v2098 = vadd.f32 %v2060, 1.0
        %v2099 = vadd.f32 %v2062, 1.0
        %v2100 = vadd.f32 %v2064, 1.0
        %v2101 = vadd.f32 %v2066, 1.0
        %v2102 = vadd.f32 %v2068, 1.0
        %v2103 = vadd.f32 %v2070, 1.0
        %v2104 = vadd.f32 %v2072, 1.0
        %v2105 = vrcp.pop %v2073
        %v2106 = vrcp.pop %v2074
        %v2107 = vrcp.pop %v2075
        %v2108 = vrcp.pop %v2076
        %v2109 = vrcp.pop %v2077
        %v2110 = vrcp.pop %v2078
        %v2111 = vrcp.pop %v2079
        %v2112 = vrcp.pop %v2080
        %v2113 = vrcp.pop %v2081
        %v2114 = vrcp.pop %v2082
        %v2115 = vrcp.pop %v2083
        %v2116 = vrcp.pop %v2084
        %v2117 = vrcp.pop %v2085
        %v2118 = vrcp.pop %v2086
        %v2119 = vrcp.pop %v2087
        %v2120 = vrcp.pop %v2088
        %v2121 = vrcp.pop %v2089
        %v2122 = vrcp.pop %v2090
        %v2123 = vrcp.pop %v2091
        %v2124 = vrcp.pop %v2092
        %v2125 = vrcp.pop %v2093
        %v2126 = vrcp.pop %v2094
        %v2127 = vrcp.pop %v2095
        %v2128 = vrcp.pop %v2096
        %v2129 = vrcp.pop %v2097
        %v2130 = vrcp.pop %v2098
        %v2131 = vrcp.pop %v2099
        %v2132 = vrcp.pop %v2100
        %v2133 = vrcp.pop %v2101
        %v2134 = vrcp.pop %v2102
        %v2135 = vrcp.pop %v2103
        %v2136 = vrcp.pop %v2104
        %v2169 = vlaneseq
        %v2170 = vshrl.u32 %v2169, 7
        %v2171 = vsub.s32 0, %v2170
        %v2172 = vrot.slane %v2105, %v2171
        %v2173 = vlaneseq
        %v2174 = vshrl.u32 %v2173, 7
        %v2175 = vsub.s32 1, %v2174
        %v2176 = vrot.slane %v2105, %v2175
        %v2177 = vlaneseq
        %v2178 = vshrl.u32 %v2177, 7
        %v2179 = vsub.s32 2, %v2178
        %v2180 = vrot.slane %v2105, %v2179
        %v2181 = vlaneseq
        %v2182 = vshrl.u32 %v2181, 7
        %v2183 = vsub.s32 3, %v2182
        %v2184 = vrot.slane %v2105, %v2183
        %v2185 = vlaneseq
        %v2186 = vshrl.u32 %v2185, 7
        %v2187 = vsub.s32 4, %v2186
        %v2188 = vrot.slane %v2105, %v2187
        %v2189 = vlaneseq
        %v2190 = vshrl.u32 %v2189, 7
        %v2191 = vsub.s32 5, %v2190
        %v2192 = vrot.slane %v2105, %v2191
        %v2193 = vlaneseq
        %v2194 = vshrl.u32 %v2193, 7
        %v2195 = vsub.s32 6, %v2194
        %v2196 = vrot.slane %v2105, %v2195
        %v2197 = vlaneseq
        %v2198 = vshrl.u32 %v2197, 7
        %v2199 = vsub.s32 7, %v2198
        %v2200 = vrot.slane %v2105, %v2199
        %v2201 = vlaneseq
        %v2202 = vshrl.u32 %v2201, 7
        %v2203 = vsub.s32 0, %v2202
        %v2204 = vrot.slane %v2106, %v2203
        %v2205 = vlaneseq
        %v2206 = vshrl.u32 %v2205, 7
        %v2207 = vsub.s32 1, %v2206
        %v2208 = vrot.slane %v2106, %v2207
        %v2209 = vlaneseq
        %v2210 = vshrl.u32 %v2209, 7
        %v2211 = vsub.s32 2, %v2210
        %v2212 = vrot.slane %v2106, %v2211
        %v2213 = vlaneseq
        %v2214 = vshrl.u32 %v2213, 7
        %v2215 = vsub.s32 3, %v2214
        %v2216 = vrot.slane %v2106, %v2215
        %v2217 = vlaneseq
        %v2218 = vshrl.u32 %v2217, 7
        %v2219 = vsub.s32 4, %v2218
        %v2220 = vrot.slane %v2106, %v2219
        %v2221 = vlaneseq
        %v2222 = vshrl.u32 %v2221, 7
        %v2223 = vsub.s32 5, %v2222
        %v2224 = vrot.slane %v2106, %v2223
        %v2225 = vlaneseq
        %v2226 = vshrl.u32 %v2225, 7
        %v2227 = vsub.s32 6, %v2226
        %v2228 = vrot.slane %v2106, %v2227
        %v2229 = vlaneseq
        %v2230 = vshrl.u32 %v2229, 7
        %v2231 = vsub.s32 7, %v2230
        %v2232 = vrot.slane %v2106, %v2231
        %v2233 = vlaneseq
        %v2234 = vshrl.u32 %v2233, 7
        %v2235 = vsub.s32 0, %v2234
        %v2236 = vrot.slane %v2107, %v2235
        %v2237 = vlaneseq
        %v2238 = vshrl.u32 %v2237, 7
        %v2239 = vsub.s32 1, %v2238
        %v2240 = vrot.slane %v2107, %v2239
        %v2241 = vlaneseq
        %v2242 = vshrl.u32 %v2241, 7
        %v2243 = vsub.s32 2, %v2242
        %v2244 = vrot.slane %v2107, %v2243
        %v2245 = vlaneseq
        %v2246 = vshrl.u32 %v2245, 7
        %v2247 = vsub.s32 3, %v2246
        %v2248 = vrot.slane %v2107, %v2247
        %v2249 = vlaneseq
        %v2250 = vshrl.u32 %v2249, 7
        %v2251 = vsub.s32 4, %v2250
        %v2252 = vrot.slane %v2107, %v2251
        %v2253 = vlaneseq
        %v2254 = vshrl.u32 %v2253, 7
        %v2255 = vsub.s32 5, %v2254
        %v2256 = vrot.slane %v2107, %v2255
        %v2257 = vlaneseq
        %v2258 = vshrl.u32 %v2257, 7
        %v2259 = vsub.s32 6, %v2258
        %v2260 = vrot.slane %v2107, %v2259
        %v2261 = vlaneseq
        %v2262 = vshrl.u32 %v2261, 7
        %v2263 = vsub.s32 7, %v2262
        %v2264 = vrot.slane %v2107, %v2263
        %v2265 = vlaneseq
        %v2266 = vshrl.u32 %v2265, 7
        %v2267 = vsub.s32 0, %v2266
        %v2268 = vrot.slane %v2108, %v2267
        %v2269 = vlaneseq
        %v2270 = vshrl.u32 %v2269, 7
        %v2271 = vsub.s32 1, %v2270
        %v2272 = vrot.slane %v2108, %v2271
        %v2273 = vlaneseq
        %v2274 = vshrl.u32 %v2273, 7
        %v2275 = vsub.s32 2, %v2274
        %v2276 = vrot.slane %v2108, %v2275
        %v2277 = vlaneseq
        %v2278 = vshrl.u32 %v2277, 7
        %v2279 = vsub.s32 3, %v2278
        %v2280 = vrot.slane %v2108, %v2279
        %v2281 = vlaneseq
        %v2282 = vshrl.u32 %v2281, 7
        %v2283 = vsub.s32 4, %v2282
        %v2284 = vrot.slane %v2108, %v2283
        %v2285 = vlaneseq
        %v2286 = vshrl.u32 %v2285, 7
        %v2287 = vsub.s32 5, %v2286
        %v2288 = vrot.slane %v2108, %v2287
        %v2289 = vlaneseq
        %v2290 = vshrl.u32 %v2289, 7
        %v2291 = vsub.s32 6, %v2290
        %v2292 = vrot.slane %v2108, %v2291
        %v2293 = vlaneseq
        %v2294 = vshrl.u32 %v2293, 7
        %v2295 = vsub.s32 7, %v2294
        %v2296 = vrot.slane %v2108, %v2295
        %v2297 = vlaneseq
        %v2298 = vshrl.u32 %v2297, 7
        %v2299 = vsub.s32 0, %v2298
        %v2300 = vrot.slane %v2109, %v2299
        %v2301 = vlaneseq
        %v2302 = vshrl.u32 %v2301, 7
        %v2303 = vsub.s32 1, %v2302
        %v2304 = vrot.slane %v2109, %v2303
        %v2305 = vlaneseq
        %v2306 = vshrl.u32 %v2305, 7
        %v2307 = vsub.s32 2, %v2306
        %v2308 = vrot.slane %v2109, %v2307
        %v2309 = vlaneseq
        %v2310 = vshrl.u32 %v2309, 7
        %v2311 = vsub.s32 3, %v2310
        %v2312 = vrot.slane %v2109, %v2311
        %v2313 = vlaneseq
        %v2314 = vshrl.u32 %v2313, 7
        %v2315 = vsub.s32 4, %v2314
        %v2316 = vrot.slane %v2109, %v2315
        %v2317 = vlaneseq
        %v2318 = vshrl.u32 %v2317, 7
        %v2319 = vsub.s32 5, %v2318
        %v2320 = vrot.slane %v2109, %v2319
        %v2321 = vlaneseq
        %v2322 = vshrl.u32 %v2321, 7
        %v2323 = vsub.s32 6, %v2322
        %v2324 = vrot.slane %v2109, %v2323
        %v2325 = vlaneseq
        %v2326 = vshrl.u32 %v2325, 7
        %v2327 = vsub.s32 7, %v2326
        %v2328 = vrot.slane %v2109, %v2327
        %v2329 = vlaneseq
        %v2330 = vshrl.u32 %v2329, 7
        %v2331 = vsub.s32 0, %v2330
        %v2332 = vrot.slane %v2110, %v2331
        %v2333 = vlaneseq
        %v2334 = vshrl.u32 %v2333, 7
        %v2335 = vsub.s32 1, %v2334
        %v2336 = vrot.slane %v2110, %v2335
        %v2337 = vlaneseq
        %v2338 = vshrl.u32 %v2337, 7
        %v2339 = vsub.s32 2, %v2338
        %v2340 = vrot.slane %v2110, %v2339
        %v2341 = vlaneseq
        %v2342 = vshrl.u32 %v2341, 7
        %v2343 = vsub.s32 3, %v2342
        %v2344 = vrot.slane %v2110, %v2343
        %v2345 = vlaneseq
        %v2346 = vshrl.u32 %v2345, 7
        %v2347 = vsub.s32 4, %v2346
        %v2348 = vrot.slane %v2110, %v2347
        %v2349 = vlaneseq
        %v2350 = vshrl.u32 %v2349, 7
        %v2351 = vsub.s32 5, %v2350
        %v2352 = vrot.slane %v2110, %v2351
        %v2353 = vlaneseq
        %v2354 = vshrl.u32 %v2353, 7
        %v2355 = vsub.s32 6, %v2354
        %v2356 = vrot.slane %v2110, %v2355
        %v2357 = vlaneseq
        %v2358 = vshrl.u32 %v2357, 7
        %v2359 = vsub.s32 7, %v2358
        %v2360 = vrot.slane %v2110, %v2359
        %v2361 = vlaneseq
        %v2362 = vshrl.u32 %v2361, 7
        %v2363 = vsub.s32 0, %v2362
        %v2364 = vrot.slane %v2111, %v2363
        %v2365 = vlaneseq
        %v2366 = vshrl.u32 %v2365, 7
        %v2367 = vsub.s32 1, %v2366
        %v2368 = vrot.slane %v2111, %v2367
        %v2369 = vlaneseq
        %v2370 = vshrl.u32 %v2369, 7
        %v2371 = vsub.s32 2, %v2370
        %v2372 = vrot.slane %v2111, %v2371
        %v2373 = vlaneseq
        %v2374 = vshrl.u32 %v2373, 7
        %v2375 = vsub.s32 3, %v2374
        %v2376 = vrot.slane %v2111, %v2375
        %v2377 = vlaneseq
        %v2378 = vshrl.u32 %v2377, 7
        %v2379 = vsub.s32 4, %v2378
        %v2380 = vrot.slane %v2111, %v2379
        %v2381 = vlaneseq
        %v2382 = vshrl.u32 %v2381, 7
        %v2383 = vsub.s32 5, %v2382
        %v2384 = vrot.slane %v2111, %v2383
        %v2385 = vlaneseq
        %v2386 = vshrl.u32 %v2385, 7
        %v2387 = vsub.s32 6, %v2386
        %v2388 = vrot.slane %v2111, %v2387
        %v2389 = vlaneseq
        %v2390 = vshrl.u32 %v2389, 7
        %v2391 = vsub.s32 7, %v2390
        %v2392 = vrot.slane %v2111, %v2391
        %v2393 = vlaneseq
        %v2394 = vshrl.u32 %v2393, 7
        %v2395 = vsub.s32 0, %v2394
        %v2396 = vrot.slane %v2112, %v2395
        %v2397 = vlaneseq
        %v2398 = vshrl.u32 %v2397, 7
        %v2399 = vsub.s32 1, %v2398
        %v2400 = vrot.slane %v2112, %v2399
        %v2401 = vlaneseq
        %v2402 = vshrl.u32 %v2401, 7
        %v2403 = vsub.s32 2, %v2402
        %v2404 = vrot.slane %v2112, %v2403
        %v2405 = vlaneseq
        %v2406 = vshrl.u32 %v2405, 7
        %v2407 = vsub.s32 3, %v2406
        %v2408 = vrot.slane %v2112, %v2407
        %v2409 = vlaneseq
        %v2410 = vshrl.u32 %v2409, 7
        %v2411 = vsub.s32 4, %v2410
        %v2412 = vrot.slane %v2112, %v2411
        %v2413 = vlaneseq
        %v2414 = vshrl.u32 %v2413, 7
        %v2415 = vsub.s32 5, %v2414
        %v2416 = vrot.slane %v2112, %v2415
        %v2417 = vlaneseq
        %v2418 = vshrl.u32 %v2417, 7
        %v2419 = vsub.s32 6, %v2418
        %v2420 = vrot.slane %v2112, %v2419
        %v2421 = vlaneseq
        %v2422 = vshrl.u32 %v2421, 7
        %v2423 = vsub.s32 7, %v2422
        %v2424 = vrot.slane %v2112, %v2423
        %v2425 = vlaneseq
        %v2426 = vshrl.u32 %v2425, 7
        %v2427 = vsub.s32 0, %v2426
        %v2428 = vrot.slane %v2113, %v2427
        %v2429 = vlaneseq
        %v2430 = vshrl.u32 %v2429, 7
        %v2431 = vsub.s32 1, %v2430
        %v2432 = vrot.slane %v2113, %v2431
        %v2433 = vlaneseq
        %v2434 = vshrl.u32 %v2433, 7
        %v2435 = vsub.s32 2, %v2434
        %v2436 = vrot.slane %v2113, %v2435
        %v2437 = vlaneseq
        %v2438 = vshrl.u32 %v2437, 7
        %v2439 = vsub.s32 3, %v2438
        %v2440 = vrot.slane %v2113, %v2439
        %v2441 = vlaneseq
        %v2442 = vshrl.u32 %v2441, 7
        %v2443 = vsub.s32 4, %v2442
        %v2444 = vrot.slane %v2113, %v2443
        %v2445 = vlaneseq
        %v2446 = vshrl.u32 %v2445, 7
        %v2447 = vsub.s32 5, %v2446
        %v2448 = vrot.slane %v2113, %v2447
        %v2449 = vlaneseq
        %v2450 = vshrl.u32 %v2449, 7
        %v2451 = vsub.s32 6, %v2450
        %v2452 = vrot.slane %v2113, %v2451
        %v2453 = vlaneseq
        %v2454 = vshrl.u32 %v2453, 7
        %v2455 = vsub.s32 7, %v2454
        %v2456 = vrot.slane %v2113, %v2455
        %v2457 = vlaneseq
        %v2458 = vshrl.u32 %v2457, 7
        %v2459 = vsub.s32 0, %v2458
        %v2460 = vrot.slane %v2114, %v2459
        %v2461 = vlaneseq
        %v2462 = vshrl.u32 %v2461, 7
        %v2463 = vsub.s32 1, %v2462
        %v2464 = vrot.slane %v2114, %v2463
        %v2465 = vlaneseq
        %v2466 = vshrl.u32 %v2465, 7
        %v2467 = vsub.s32 2, %v2466
        %v2468 = vrot.slane %v2114, %v2467
        %v2469 = vlaneseq
        %v2470 = vshrl.u32 %v2469, 7
        %v2471 = vsub.s32 3, %v2470
        %v2472 = vrot.slane %v2114, %v2471
        %v2473 = vlaneseq
        %v2474 = vshrl.u32 %v2473, 7
        %v2475 = vsub.s32 4, %v2474
        %v2476 = vrot.slane %v2114, %v2475
        %v2477 = vlaneseq
        %v2478 = vshrl.u32 %v2477, 7
        %v2479 = vsub.s32 5, %v2478
        %v2480 = vrot.slane %v2114, %v2479
        %v2481 = vlaneseq
        %v2482 = vshrl.u32 %v2481, 7
        %v2483 = vsub.s32 6, %v2482
        %v2484 = vrot.slane %v2114, %v2483
        %v2485 = vlaneseq
        %v2486 = vshrl.u32 %v2485, 7
        %v2487 = vsub.s32 7, %v2486
        %v2488 = vrot.slane %v2114, %v2487
        %v2489 = vlaneseq
        %v2490 = vshrl.u32 %v2489, 7
        %v2491 = vsub.s32 0, %v2490
        %v2492 = vrot.slane %v2115, %v2491
        %v2493 = vlaneseq
        %v2494 = vshrl.u32 %v2493, 7
        %v2495 = vsub.s32 1, %v2494
        %v2496 = vrot.slane %v2115, %v2495
        %v2497 = vlaneseq
        %v2498 = vshrl.u32 %v2497, 7
        %v2499 = vsub.s32 2, %v2498
        %v2500 = vrot.slane %v2115, %v2499
        %v2501 = vlaneseq
        %v2502 = vshrl.u32 %v2501, 7
        %v2503 = vsub.s32 3, %v2502
        %v2504 = vrot.slane %v2115, %v2503
        %v2505 = vlaneseq
        %v2506 = vshrl.u32 %v2505, 7
        %v2507 = vsub.s32 4, %v2506
        %v2508 = vrot.slane %v2115, %v2507
        %v2509 = vlaneseq
        %v2510 = vshrl.u32 %v2509, 7
        %v2511 = vsub.s32 5, %v2510
        %v2512 = vrot.slane %v2115, %v2511
        %v2513 = vlaneseq
        %v2514 = vshrl.u32 %v2513, 7
        %v2515 = vsub.s32 6, %v2514
        %v2516 = vrot.slane %v2115, %v2515
        %v2517 = vlaneseq
        %v2518 = vshrl.u32 %v2517, 7
        %v2519 = vsub.s32 7, %v2518
        %v2520 = vrot.slane %v2115, %v2519
        %v2521 = vlaneseq
        %v2522 = vshrl.u32 %v2521, 7
        %v2523 = vsub.s32 0, %v2522
        %v2524 = vrot.slane %v2116, %v2523
        %v2525 = vlaneseq
        %v2526 = vshrl.u32 %v2525, 7
        %v2527 = vsub.s32 1, %v2526
        %v2528 = vrot.slane %v2116, %v2527
        %v2529 = vlaneseq
        %v2530 = vshrl.u32 %v2529, 7
        %v2531 = vsub.s32 2, %v2530
        %v2532 = vrot.slane %v2116, %v2531
        %v2533 = vlaneseq
        %v2534 = vshrl.u32 %v2533, 7
        %v2535 = vsub.s32 3, %v2534
        %v2536 = vrot.slane %v2116, %v2535
        %v2537 = vlaneseq
        %v2538 = vshrl.u32 %v2537, 7
        %v2539 = vsub.s32 4, %v2538
        %v2540 = vrot.slane %v2116, %v2539
        %v2541 = vlaneseq
        %v2542 = vshrl.u32 %v2541, 7
        %v2543 = vsub.s32 5, %v2542
        %v2544 = vrot.slane %v2116, %v2543
        %v2545 = vlaneseq
        %v2546 = vshrl.u32 %v2545, 7
        %v2547 = vsub.s32 6, %v2546
        %v2548 = vrot.slane %v2116, %v2547
        %v2549 = vlaneseq
        %v2550 = vshrl.u32 %v2549, 7
        %v2551 = vsub.s32 7, %v2550
        %v2552 = vrot.slane %v2116, %v2551
        %v2553 = vlaneseq
        %v2554 = vshrl.u32 %v2553, 7
        %v2555 = vsub.s32 0, %v2554
        %v2556 = vrot.slane %v2117, %v2555
        %v2557 = vlaneseq
        %v2558 = vshrl.u32 %v2557, 7
        %v2559 = vsub.s32 1, %v2558
        %v2560 = vrot.slane %v2117, %v2559
        %v2561 = vlaneseq
        %v2562 = vshrl.u32 %v2561, 7
        %v2563 = vsub.s32 2, %v2562
        %v2564 = vrot.slane %v2117, %v2563
        %v2565 = vlaneseq
        %v2566 = vshrl.u32 %v2565, 7
        %v2567 = vsub.s32 3, %v2566
        %v2568 = vrot.slane %v2117, %v2567
        %v2569 = vlaneseq
        %v2570 = vshrl.u32 %v2569, 7
        %v2571 = vsub.s32 4, %v2570
        %v2572 = vrot.slane %v2117, %v2571
        %v2573 = vlaneseq
        %v2574 = vshrl.u32 %v2573, 7
        %v2575 = vsub.s32 5, %v2574
        %v2576 = vrot.slane %v2117, %v2575
        %v2577 = vlaneseq
        %v2578 = vshrl.u32 %v2577, 7
        %v2579 = vsub.s32 6, %v2578
        %v2580 = vrot.slane %v2117, %v2579
        %v2581 = vlaneseq
        %v2582 = vshrl.u32 %v2581, 7
        %v2583 = vsub.s32 7, %v2582
        %v2584 = vrot.slane %v2117, %v2583
        %v2585 = vlaneseq
        %v2586 = vshrl.u32 %v2585, 7
        %v2587 = vsub.s32 0, %v2586
        %v2588 = vrot.slane %v2118, %v2587
        %v2589 = vlaneseq
        %v2590 = vshrl.u32 %v2589, 7
        %v2591 = vsub.s32 1, %v2590
        %v2592 = vrot.slane %v2118, %v2591
        %v2593 = vlaneseq
        %v2594 = vshrl.u32 %v2593, 7
        %v2595 = vsub.s32 2, %v2594
        %v2596 = vrot.slane %v2118, %v2595
        %v2597 = vlaneseq
        %v2598 = vshrl.u32 %v2597, 7
        %v2599 = vsub.s32 3, %v2598
        %v2600 = vrot.slane %v2118, %v2599
        %v2601 = vlaneseq
        %v2602 = vshrl.u32 %v2601, 7
        %v2603 = vsub.s32 4, %v2602
        %v2604 = vrot.slane %v2118, %v2603
        %v2605 = vlaneseq
        %v2606 = vshrl.u32 %v2605, 7
        %v2607 = vsub.s32 5, %v2606
        %v2608 = vrot.slane %v2118, %v2607
        %v2609 = vlaneseq
        %v2610 = vshrl.u32 %v2609, 7
        %v2611 = vsub.s32 6, %v2610
        %v2612 = vrot.slane %v2118, %v2611
        %v2613 = vlaneseq
        %v2614 = vshrl.u32 %v2613, 7
        %v2615 = vsub.s32 7, %v2614
        %v2616 = vrot.slane %v2118, %v2615
        %v2617 = vlaneseq
        %v2618 = vshrl.u32 %v2617, 7
        %v2619 = vsub.s32 0, %v2618
        %v2620 = vrot.slane %v2119, %v2619
        %v2621 = vlaneseq
        %v2622 = vshrl.u32 %v2621, 7
        %v2623 = vsub.s32 1, %v2622
        %v2624 = vrot.slane %v2119, %v2623
        %v2625 = vlaneseq
        %v2626 = vshrl.u32 %v2625, 7
        %v2627 = vsub.s32 2, %v2626
        %v2628 = vrot.slane %v2119, %v2627
        %v2629 = vlaneseq
        %v2630 = vshrl.u32 %v2629, 7
        %v2631 = vsub.s32 3, %v2630
        %v2632 = vrot.slane %v2119, %v2631
        %v2633 = vlaneseq
        %v2634 = vshrl.u32 %v2633, 7
        %v2635 = vsub.s32 4, %v2634
        %v2636 = vrot.slane %v2119, %v2635
        %v2637 = vlaneseq
        %v2638 = vshrl.u32 %v2637, 7
        %v2639 = vsub.s32 5, %v2638
        %v2640 = vrot.slane %v2119, %v2639
        %v2641 = vlaneseq
        %v2642 = vshrl.u32 %v2641, 7
        %v2643 = vsub.s32 6, %v2642
        %v2644 = vrot.slane %v2119, %v2643
        %v2645 = vlaneseq
        %v2646 = vshrl.u32 %v2645, 7
        %v2647 = vsub.s32 7, %v2646
        %v2648 = vrot.slane %v2119, %v2647
        %v2649 = vlaneseq
        %v2650 = vshrl.u32 %v2649, 7
        %v2651 = vsub.s32 0, %v2650
        %v2652 = vrot.slane %v2120, %v2651
        %v2653 = vlaneseq
        %v2654 = vshrl.u32 %v2653, 7
        %v2655 = vsub.s32 1, %v2654
        %v2656 = vrot.slane %v2120, %v2655
        %v2657 = vlaneseq
        %v2658 = vshrl.u32 %v2657, 7
        %v2659 = vsub.s32 2, %v2658
        %v2660 = vrot.slane %v2120, %v2659
        %v2661 = vlaneseq
        %v2662 = vshrl.u32 %v2661, 7
        %v2663 = vsub.s32 3, %v2662
        %v2664 = vrot.slane %v2120, %v2663
        %v2665 = vlaneseq
        %v2666 = vshrl.u32 %v2665, 7
        %v2667 = vsub.s32 4, %v2666
        %v2668 = vrot.slane %v2120, %v2667
        %v2669 = vlaneseq
        %v2670 = vshrl.u32 %v2669, 7
        %v2671 = vsub.s32 5, %v2670
        %v2672 = vrot.slane %v2120, %v2671
        %v2673 = vlaneseq
        %v2674 = vshrl.u32 %v2673, 7
        %v2675 = vsub.s32 6, %v2674
        %v2676 = vrot.slane %v2120, %v2675
        %v2677 = vlaneseq
        %v2678 = vshrl.u32 %v2677, 7
        %v2679 = vsub.s32 7, %v2678
        %v2680 = vrot.slane %v2120, %v2679
        %v2681 = vlaneseq
        %v2682 = vshrl.u32 %v2681, 7
        %v2683 = vsub.s32 0, %v2682
        %v2684 = vrot.slane %v2121, %v2683
        %v2685 = vlaneseq
        %v2686 = vshrl.u32 %v2685, 7
        %v2687 = vsub.s32 1, %v2686
        %v2688 = vrot.slane %v2121, %v2687
        %v2689 = vlaneseq
        %v2690 = vshrl.u32 %v2689, 7
        %v2691 = vsub.s32 2, %v2690
        %v2692 = vrot.slane %v2121, %v2691
        %v2693 = vlaneseq
        %v2694 = vshrl.u32 %v2693, 7
        %v2695 = vsub.s32 3, %v2694
        %v2696 = vrot.slane %v2121, %v2695
        %v2697 = vlaneseq
        %v2698 = vshrl.u32 %v2697, 7
        %v2699 = vsub.s32 4, %v2698
        %v2700 = vrot.slane %v2121, %v2699
        %v2701 = vlaneseq
        %v2702 = vshrl.u32 %v2701, 7
        %v2703 = vsub.s32 5, %v2702
        %v2704 = vrot.slane %v2121, %v2703
        %v2705 = vlaneseq
        %v2706 = vshrl.u32 %v2705, 7
        %v2707 = vsub.s32 6, %v2706
        %v2708 = vrot.slane %v2121, %v2707
        %v2709 = vlaneseq
        %v2710 = vshrl.u32 %v2709, 7
        %v2711 = vsub.s32 7, %v2710
        %v2712 = vrot.slane %v2121, %v2711
        %v2713 = vlaneseq
        %v2714 = vshrl.u32 %v2713, 7
        %v2715 = vsub.s32 0, %v2714
        %v2716 = vrot.slane %v2122, %v2715
        %v2717 = vlaneseq
        %v2718 = vshrl.u32 %v2717, 7
        %v2719 = vsub.s32 1, %v2718
        %v2720 = vrot.slane %v2122, %v2719
        %v2721 = vlaneseq
        %v2722 = vshrl.u32 %v2721, 7
        %v2723 = vsub.s32 2, %v2722
        %v2724 = vrot.slane %v2122, %v2723
        %v2725 = vlaneseq
        %v2726 = vshrl.u32 %v2725, 7
        %v2727 = vsub.s32 3, %v2726
        %v2728 = vrot.slane %v2122, %v2727
        %v2729 = vlaneseq
        %v2730 = vshrl.u32 %v2729, 7
        %v2731 = vsub.s32 4, %v2730
        %v2732 = vrot.slane %v2122, %v2731
        %v2733 = vlaneseq
        %v2734 = vshrl.u32 %v2733, 7
        %v2735 = vsub.s32 5, %v2734
        %v2736 = vrot.slane %v2122, %v2735
        %v2737 = vlaneseq
        %v2738 = vshrl.u32 %v2737, 7
        %v2739 = vsub.s32 6, %v2738
        %v2740 = vrot.slane %v2122, %v2739
        %v2741 = vlaneseq
        %v2742 = vshrl.u32 %v2741, 7
        %v2743 = vsub.s32 7, %v2742
        %v2744 = vrot.slane %v2122, %v2743
        %v2745 = vlaneseq
        %v2746 = vshrl.u32 %v2745, 7
        %v2747 = vsub.s32 0, %v2746
        %v2748 = vrot.slane %v2123, %v2747
        %v2749 = vlaneseq
        %v2750 = vshrl.u32 %v2749, 7
        %v2751 = vsub.s32 1, %v2750
        %v2752 = vrot.slane %v2123, %v2751
        %v2753 = vlaneseq
        %v2754 = vshrl.u32 %v2753, 7
        %v2755 = vsub.s32 2, %v2754
        %v2756 = vrot.slane %v2123, %v2755
        %v2757 = vlaneseq
        %v2758 = vshrl.u32 %v2757, 7
        %v2759 = vsub.s32 3, %v2758
        %v2760 = vrot.slane %v2123, %v2759
        %v2761 = vlaneseq
        %v2762 = vshrl.u32 %v2761, 7
        %v2763 = vsub.s32 4, %v2762
        %v2764 = vrot.slane %v2123, %v2763
        %v2765 = vlaneseq
        %v2766 = vshrl.u32 %v2765, 7
        %v2767 = vsub.s32 5, %v2766
        %v2768 = vrot.slane %v2123, %v2767
        %v2769 = vlaneseq
        %v2770 = vshrl.u32 %v2769, 7
        %v2771 = vsub.s32 6, %v2770
        %v2772 = vrot.slane %v2123, %v2771
        %v2773 = vlaneseq
        %v2774 = vshrl.u32 %v2773, 7
        %v2775 = vsub.s32 7, %v2774
        %v2776 = vrot.slane %v2123, %v2775
        %v2777 = vlaneseq
        %v2778 = vshrl.u32 %v2777, 7
        %v2779 = vsub.s32 0, %v2778
        %v2780 = vrot.slane %v2124, %v2779
        %v2781 = vlaneseq
        %v2782 = vshrl.u32 %v2781, 7
        %v2783 = vsub.s32 1, %v2782
        %v2784 = vrot.slane %v2124, %v2783
        %v2785 = vlaneseq
        %v2786 = vshrl.u32 %v2785, 7
        %v2787 = vsub.s32 2, %v2786
        %v2788 = vrot.slane %v2124, %v2787
        %v2789 = vlaneseq
        %v2790 = vshrl.u32 %v2789, 7
        %v2791 = vsub.s32 3, %v2790
        %v2792 = vrot.slane %v2124, %v2791
        %v2793 = vlaneseq
        %v2794 = vshrl.u32 %v2793, 7
        %v2795 = vsub.s32 4, %v2794
        %v2796 = vrot.slane %v2124, %v2795
        %v2797 = vlaneseq
        %v2798 = vshrl.u32 %v2797, 7
        %v2799 = vsub.s32 5, %v2798
        %v2800 = vrot.slane %v2124, %v2799
        %v2801 = vlaneseq
        %v2802 = vshrl.u32 %v2801, 7
        %v2803 = vsub.s32 6, %v2802
        %v2804 = vrot.slane %v2124, %v2803
        %v2805 = vlaneseq
        %v2806 = vshrl.u32 %v2805, 7
        %v2807 = vsub.s32 7, %v2806
        %v2808 = vrot.slane %v2124, %v2807
        %v2809 = vlaneseq
        %v2810 = vshrl.u32 %v2809, 7
        %v2811 = vsub.s32 0, %v2810
        %v2812 = vrot.slane %v2125, %v2811
        %v2813 = vlaneseq
        %v2814 = vshrl.u32 %v2813, 7
        %v2815 = vsub.s32 1, %v2814
        %v2816 = vrot.slane %v2125, %v2815
        %v2817 = vlaneseq
        %v2818 = vshrl.u32 %v2817, 7
        %v2819 = vsub.s32 2, %v2818
        %v2820 = vrot.slane %v2125, %v2819
        %v2821 = vlaneseq
        %v2822 = vshrl.u32 %v2821, 7
        %v2823 = vsub.s32 3, %v2822
        %v2824 = vrot.slane %v2125, %v2823
        %v2825 = vlaneseq
        %v2826 = vshrl.u32 %v2825, 7
        %v2827 = vsub.s32 4, %v2826
        %v2828 = vrot.slane %v2125, %v2827
        %v2829 = vlaneseq
        %v2830 = vshrl.u32 %v2829, 7
        %v2831 = vsub.s32 5, %v2830
        %v2832 = vrot.slane %v2125, %v2831
        %v2833 = vlaneseq
        %v2834 = vshrl.u32 %v2833, 7
        %v2835 = vsub.s32 6, %v2834
        %v2836 = vrot.slane %v2125, %v2835
        %v2837 = vlaneseq
        %v2838 = vshrl.u32 %v2837, 7
        %v2839 = vsub.s32 7, %v2838
        %v2840 = vrot.slane %v2125, %v2839
        %v2841 = vlaneseq
        %v2842 = vshrl.u32 %v2841, 7
        %v2843 = vsub.s32 0, %v2842
        %v2844 = vrot.slane %v2126, %v2843
        %v2845 = vlaneseq
        %v2846 = vshrl.u32 %v2845, 7
        %v2847 = vsub.s32 1, %v2846
        %v2848 = vrot.slane %v2126, %v2847
        %v2849 = vlaneseq
        %v2850 = vshrl.u32 %v2849, 7
        %v2851 = vsub.s32 2, %v2850
        %v2852 = vrot.slane %v2126, %v2851
        %v2853 = vlaneseq
        %v2854 = vshrl.u32 %v2853, 7
        %v2855 = vsub.s32 3, %v2854
        %v2856 = vrot.slane %v2126, %v2855
        %v2857 = vlaneseq
        %v2858 = vshrl.u32 %v2857, 7
        %v2859 = vsub.s32 4, %v2858
        %v2860 = vrot.slane %v2126, %v2859
        %v2861 = vlaneseq
        %v2862 = vshrl.u32 %v2861, 7
        %v2863 = vsub.s32 5, %v2862
        %v2864 = vrot.slane %v2126, %v2863
        %v2865 = vlaneseq
        %v2866 = vshrl.u32 %v2865, 7
        %v2867 = vsub.s32 6, %v2866
        %v2868 = vrot.slane %v2126, %v2867
        %v2869 = vlaneseq
        %v2870 = vshrl.u32 %v2869, 7
        %v2871 = vsub.s32 7, %v2870
        %v2872 = vrot.slane %v2126, %v2871
        %v2873 = vlaneseq
        %v2874 = vshrl.u32 %v2873, 7
        %v2875 = vsub.s32 0, %v2874
        %v2876 = vrot.slane %v2127, %v2875
        %v2877 = vlaneseq
        %v2878 = vshrl.u32 %v2877, 7
        %v2879 = vsub.s32 1, %v2878
        %v2880 = vrot.slane %v2127, %v2879
        %v2881 = vlaneseq
        %v2882 = vshrl.u32 %v2881, 7
        %v2883 = vsub.s32 2, %v2882
        %v2884 = vrot.slane %v2127, %v2883
        %v2885 = vlaneseq
        %v2886 = vshrl.u32 %v2885, 7
        %v2887 = vsub.s32 3, %v2886
        %v2888 = vrot.slane %v2127, %v2887
        %v2889 = vlaneseq
        %v2890 = vshrl.u32 %v2889, 7
        %v2891 = vsub.s32 4, %v2890
        %v2892 = vrot.slane %v2127, %v2891
        %v2893 = vlaneseq
        %v2894 = vshrl.u32 %v2893, 7
        %v2895 = vsub.s32 5, %v2894
        %v2896 = vrot.slane %v2127, %v2895
        %v2897 = vlaneseq
        %v2898 = vshrl.u32 %v2897, 7
        %v2899 = vsub.s32 6, %v2898
        %v2900 = vrot.slane %v2127, %v2899
        %v2901 = vlaneseq
        %v2902 = vshrl.u32 %v2901, 7
        %v2903 = vsub.s32 7, %v2902
        %v2904 = vrot.slane %v2127, %v2903
        %v2905 = vlaneseq
        %v2906 = vshrl.u32 %v2905, 7
        %v2907 = vsub.s32 0, %v2906
        %v2908 = vrot.slane %v2128, %v2907
        %v2909 = vlaneseq
        %v2910 = vshrl.u32 %v2909, 7
        %v2911 = vsub.s32 1, %v2910
        %v2912 = vrot.slane %v2128, %v2911
        %v2913 = vlaneseq
        %v2914 = vshrl.u32 %v2913, 7
        %v2915 = vsub.s32 2, %v2914
        %v2916 = vrot.slane %v2128, %v2915
        %v2917 = vlaneseq
        %v2918 = vshrl.u32 %v2917, 7
        %v2919 = vsub.s32 3, %v2918
        %v2920 = vrot.slane %v2128, %v2919
        %v2921 = vlaneseq
        %v2922 = vshrl.u32 %v2921, 7
        %v2923 = vsub.s32 4, %v2922
        %v2924 = vrot.slane %v2128, %v2923
        %v2925 = vlaneseq
        %v2926 = vshrl.u32 %v2925, 7
        %v2927 = vsub.s32 5, %v2926
        %v2928 = vrot.slane %v2128, %v2927
        %v2929 = vlaneseq
        %v2930 = vshrl.u32 %v2929, 7
        %v2931 = vsub.s32 6, %v2930
        %v2932 = vrot.slane %v2128, %v2931
        %v2933 = vlaneseq
        %v2934 = vshrl.u32 %v2933, 7
        %v2935 = vsub.s32 7, %v2934
        %v2936 = vrot.slane %v2128, %v2935
        %v2937 = vlaneseq
        %v2938 = vshrl.u32 %v2937, 7
        %v2939 = vsub.s32 0, %v2938
        %v2940 = vrot.slane %v2129, %v2939
        %v2941 = vlaneseq
        %v2942 = vshrl.u32 %v2941, 7
        %v2943 = vsub.s32 1, %v2942
        %v2944 = vrot.slane %v2129, %v2943
        %v2945 = vlaneseq
        %v2946 = vshrl.u32 %v2945, 7
        %v2947 = vsub.s32 2, %v2946
        %v2948 = vrot.slane %v2129, %v2947
        %v2949 = vlaneseq
        %v2950 = vshrl.u32 %v2949, 7
        %v2951 = vsub.s32 3, %v2950
        %v2952 = vrot.slane %v2129, %v2951
        %v2953 = vlaneseq
        %v2954 = vshrl.u32 %v2953, 7
        %v2955 = vsub.s32 4, %v2954
        %v2956 = vrot.slane %v2129, %v2955
        %v2957 = vlaneseq
        %v2958 = vshrl.u32 %v2957, 7
        %v2959 = vsub.s32 5, %v2958
        %v2960 = vrot.slane %v2129, %v2959
        %v2961 = vlaneseq
        %v2962 = vshrl.u32 %v2961, 7
        %v2963 = vsub.s32 6, %v2962
        %v2964 = vrot.slane %v2129, %v2963
        %v2965 = vlaneseq
        %v2966 = vshrl.u32 %v2965, 7
        %v2967 = vsub.s32 7, %v2966
        %v2968 = vrot.slane %v2129, %v2967
        %v2969 = vlaneseq
        %v2970 = vshrl.u32 %v2969, 7
        %v2971 = vsub.s32 0, %v2970
        %v2972 = vrot.slane %v2130, %v2971
        %v2973 = vlaneseq
        %v2974 = vshrl.u32 %v2973, 7
        %v2975 = vsub.s32 1, %v2974
        %v2976 = vrot.slane %v2130, %v2975
        %v2977 = vlaneseq
        %v2978 = vshrl.u32 %v2977, 7
        %v2979 = vsub.s32 2, %v2978
        %v2980 = vrot.slane %v2130, %v2979
        %v2981 = vlaneseq
        %v2982 = vshrl.u32 %v2981, 7
        %v2983 = vsub.s32 3, %v2982
        %v2984 = vrot.slane %v2130, %v2983
        %v2985 = vlaneseq
        %v2986 = vshrl.u32 %v2985, 7
        %v2987 = vsub.s32 4, %v2986
        %v2988 = vrot.slane %v2130, %v2987
        %v2989 = vlaneseq
        %v2990 = vshrl.u32 %v2989, 7
        %v2991 = vsub.s32 5, %v2990
        %v2992 = vrot.slane %v2130, %v2991
        %v2993 = vlaneseq
        %v2994 = vshrl.u32 %v2993, 7
        %v2995 = vsub.s32 6, %v2994
        %v2996 = vrot.slane %v2130, %v2995
        %v2997 = vlaneseq
        %v2998 = vshrl.u32 %v2997, 7
        %v2999 = vsub.s32 7, %v2998
        %v3000 = vrot.slane %v2130, %v2999
        %v3001 = vlaneseq
        %v3002 = vshrl.u32 %v3001, 7
        %v3003 = vsub.s32 0, %v3002
        %v3004 = vrot.slane %v2131, %v3003
        %v3005 = vlaneseq
        %v3006 = vshrl.u32 %v3005, 7
        %v3007 = vsub.s32 1, %v3006
        %v3008 = vrot.slane %v2131, %v3007
        %v3009 = vlaneseq
        %v3010 = vshrl.u32 %v3009, 7
        %v3011 = vsub.s32 2, %v3010
        %v3012 = vrot.slane %v2131, %v3011
        %v3013 = vlaneseq
        %v3014 = vshrl.u32 %v3013, 7
        %v3015 = vsub.s32 3, %v3014
        %v3016 = vrot.slane %v2131, %v3015
        %v3017 = vlaneseq
        %v3018 = vshrl.u32 %v3017, 7
        %v3019 = vsub.s32 4, %v3018
        %v3020 = vrot.slane %v2131, %v3019
        %v3021 = vlaneseq
        %v3022 = vshrl.u32 %v3021, 7
        %v3023 = vsub.s32 5, %v3022
        %v3024 = vrot.slane %v2131, %v3023
        %v3025 = vlaneseq
        %v3026 = vshrl.u32 %v3025, 7
        %v3027 = vsub.s32 6, %v3026
        %v3028 = vrot.slane %v2131, %v3027
        %v3029 = vlaneseq
        %v3030 = vshrl.u32 %v3029, 7
        %v3031 = vsub.s32 7, %v3030
        %v3032 = vrot.slane %v2131, %v3031
        %v3033 = vlaneseq
        %v3034 = vshrl.u32 %v3033, 7
        %v3035 = vsub.s32 0, %v3034
        %v3036 = vrot.slane %v2132, %v3035
        %v3037 = vlaneseq
        %v3038 = vshrl.u32 %v3037, 7
        %v3039 = vsub.s32 1, %v3038
        %v3040 = vrot.slane %v2132, %v3039
        %v3041 = vlaneseq
        %v3042 = vshrl.u32 %v3041, 7
        %v3043 = vsub.s32 2, %v3042
        %v3044 = vrot.slane %v2132, %v3043
        %v3045 = vlaneseq
        %v3046 = vshrl.u32 %v3045, 7
        %v3047 = vsub.s32 3, %v3046
        %v3048 = vrot.slane %v2132, %v3047
        %v3049 = vlaneseq
        %v3050 = vshrl.u32 %v3049, 7
        %v3051 = vsub.s32 4, %v3050
        %v3052 = vrot.slane %v2132, %v3051
        %v3053 = vlaneseq
        %v3054 = vshrl.u32 %v3053, 7
        %v3055 = vsub.s32 5, %v3054
        %v3056 = vrot.slane %v2132, %v3055
        %v3057 = vlaneseq
        %v3058 = vshrl.u32 %v3057, 7
        %v3059 = vsub.s32 6, %v3058
        %v3060 = vrot.slane %v2132, %v3059
        %v3061 = vlaneseq
        %v3062 = vshrl.u32 %v3061, 7
        %v3063 = vsub.s32 7, %v3062
        %v3064 = vrot.slane %v2132, %v3063
        %v3065 = vlaneseq
        %v3066 = vshrl.u32 %v3065, 7
        %v3067 = vsub.s32 0, %v3066
        %v3068 = vrot.slane %v2133, %v3067
        %v3069 = vlaneseq
        %v3070 = vshrl.u32 %v3069, 7
        %v3071 = vsub.s32 1, %v3070
        %v3072 = vrot.slane %v2133, %v3071
        %v3073 = vlaneseq
        %v3074 = vshrl.u32 %v3073, 7
        %v3075 = vsub.s32 2, %v3074
        %v3076 = vrot.slane %v2133, %v3075
        %v3077 = vlaneseq
        %v3078 = vshrl.u32 %v3077, 7
        %v3079 = vsub.s32 3, %v3078
        %v3080 = vrot.slane %v2133, %v3079
        %v3081 = vlaneseq
        %v3082 = vshrl.u32 %v3081, 7
        %v3083 = vsub.s32 4, %v3082
        %v3084 = vrot.slane %v2133, %v3083
        %v3085 = vlaneseq
        %v3086 = vshrl.u32 %v3085, 7
        %v3087 = vsub.s32 5, %v3086
        %v3088 = vrot.slane %v2133, %v3087
        %v3089 = vlaneseq
        %v3090 = vshrl.u32 %v3089, 7
        %v3091 = vsub.s32 6, %v3090
        %v3092 = vrot.slane %v2133, %v3091
        %v3093 = vlaneseq
        %v3094 = vshrl.u32 %v3093, 7
        %v3095 = vsub.s32 7, %v3094
        %v3096 = vrot.slane %v2133, %v3095
        %v3097 = vlaneseq
        %v3098 = vshrl.u32 %v3097, 7
        %v3099 = vsub.s32 0, %v3098
        %v3100 = vrot.slane %v2134, %v3099
        %v3101 = vlaneseq
        %v3102 = vshrl.u32 %v3101, 7
        %v3103 = vsub.s32 1, %v3102
        %v3104 = vrot.slane %v2134, %v3103
        %v3105 = vlaneseq
        %v3106 = vshrl.u32 %v3105, 7
        %v3107 = vsub.s32 2, %v3106
        %v3108 = vrot.slane %v2134, %v3107
        %v3109 = vlaneseq
        %v3110 = vshrl.u32 %v3109, 7
        %v3111 = vsub.s32 3, %v3110
        %v3112 = vrot.slane %v2134, %v3111
        %v3113 = vlaneseq
        %v3114 = vshrl.u32 %v3113, 7
        %v3115 = vsub.s32 4, %v3114
        %v3116 = vrot.slane %v2134, %v3115
        %v3117 = vlaneseq
        %v3118 = vshrl.u32 %v3117, 7
        %v3119 = vsub.s32 5, %v3118
        %v3120 = vrot.slane %v2134, %v3119
        %v3121 = vlaneseq
        %v3122 = vshrl.u32 %v3121, 7
        %v3123 = vsub.s32 6, %v3122
        %v3124 = vrot.slane %v2134, %v3123
        %v3125 = vlaneseq
        %v3126 = vshrl.u32 %v3125, 7
        %v3127 = vsub.s32 7, %v3126
        %v3128 = vrot.slane %v2134, %v3127
        %v3129 = vlaneseq
        %v3130 = vshrl.u32 %v3129, 7
        %v3131 = vsub.s32 0, %v3130
        %v3132 = vrot.slane %v2135, %v3131
        %v3133 = vlaneseq
        %v3134 = vshrl.u32 %v3133, 7
        %v3135 = vsub.s32 1, %v3134
        %v3136 = vrot.slane %v2135, %v3135
        %v3137 = vlaneseq
        %v3138 = vshrl.u32 %v3137, 7
        %v3139 = vsub.s32 2, %v3138
        %v3140 = vrot.slane %v2135, %v3139
        %v3141 = vlaneseq
        %v3142 = vshrl.u32 %v3141, 7
        %v3143 = vsub.s32 3, %v3142
        %v3144 = vrot.slane %v2135, %v3143
        %v3145 = vlaneseq
        %v3146 = vshrl.u32 %v3145, 7
        %v3147 = vsub.s32 4, %v3146
        %v3148 = vrot.slane %v2135, %v3147
        %v3149 = vlaneseq
        %v3150 = vshrl.u32 %v3149, 7
        %v3151 = vsub.s32 5, %v3150
        %v3152 = vrot.slane %v2135, %v3151
        %v3153 = vlaneseq
        %v3154 = vshrl.u32 %v3153, 7
        %v3155 = vsub.s32 6, %v3154
        %v3156 = vrot.slane %v2135, %v3155
        %v3157 = vlaneseq
        %v3158 = vshrl.u32 %v3157, 7
        %v3159 = vsub.s32 7, %v3158
        %v3160 = vrot.slane %v2135, %v3159
        %v3161 = vlaneseq
        %v3162 = vshrl.u32 %v3161, 7
        %v3163 = vsub.s32 0, %v3162
        %v3164 = vrot.slane %v2136, %v3163
        %v3165 = vlaneseq
        %v3166 = vshrl.u32 %v3165, 7
        %v3167 = vsub.s32 1, %v3166
        %v3168 = vrot.slane %v2136, %v3167
        %v3169 = vlaneseq
        %v3170 = vshrl.u32 %v3169, 7
        %v3171 = vsub.s32 2, %v3170
        %v3172 = vrot.slane %v2136, %v3171
        %v3173 = vlaneseq
        %v3174 = vshrl.u32 %v3173, 7
        %v3175 = vsub.s32 3, %v3174
        %v3176 = vrot.slane %v2136, %v3175
        %v3177 = vlaneseq
        %v3178 = vshrl.u32 %v3177, 7
        %v3179 = vsub.s32 4, %v3178
        %v3180 = vrot.slane %v2136, %v3179
        %v3181 = vlaneseq
        %v3182 = vshrl.u32 %v3181, 7
        %v3183 = vsub.s32 5, %v3182
        %v3184 = vrot.slane %v2136, %v3183
        %v3185 = vlaneseq
        %v3186 = vshrl.u32 %v3185, 7
        %v3187 = vsub.s32 6, %v3186
        %v3188 = vrot.slane %v2136, %v3187
        %v3189 = vlaneseq
        %v3190 = vshrl.u32 %v3189, 7
        %v3191 = vsub.s32 7, %v3190
        %v3192 = vrot.slane %v2136, %v3191
        %v3193 = vcombine.low %v2172, %v2176
        %v3194 = vcombine.low %v2180, %v2184
        %v3195 = vcombine.low %v2188, %v2192
        %v3196 = vcombine.low %v2196, %v2200
        %v3198 = vunpack.c.l.s4 1966171168
        %v3199 = vunpack.c.0.s8 %v3198
        %v3200 = vlaneseq
        %v3201 = vshrl.u32 %v3200, 7
        %v3202 = vsub.s32 %v3199, %v3201
        %v3203 = vrot.slane %v3193, %v3202
        %v3205 = vunpack.c.l.s4 1966171168
        %v3206 = vunpack.c.0.s8 %v3205
        %v3207 = vlaneseq
        %v3208 = vshrl.u32 %v3207, 7
        %v3209 = vsub.s32 %v3206, %v3208
        %v3210 = vrot.slane %v3194, %v3209
        %v3212 = vunpack.c.l.s4 1966171168
        %v3213 = vunpack.c.0.s8 %v3212
        %v3214 = vlaneseq
        %v3215 = vshrl.u32 %v3214, 7
        %v3216 = vsub.s32 %v3213, %v3215
        %v3217 = vrot.slane %v3195, %v3216
        %v3219 = vunpack.c.l.s4 1966171168
        %v3220 = vunpack.c.0.s8 %v3219
        %v3221 = vlaneseq
        %v3222 = vshrl.u32 %v3221, 7
        %v3223 = vsub.s32 %v3220, %v3222
        %v3224 = vrot.slane %v3196, %v3223
        %v3225 = vcombine.low %v3203, %v3210
        %v3226 = vcombine.low %v3217, %v3224
        %v3228 = vunpack.c.l.s4 1966171168
        %v3229 = vunpack.c.0.s8 %v3228
        %v3230 = vlaneseq
        %v3231 = vshrl.u32 %v3230, 7
        %v3232 = vsub.s32 %v3229, %v3231
        %v3233 = vrot.slane %v3225, %v3232
        %v3235 = vunpack.c.l.s4 1966171168
        %v3236 = vunpack.c.0.s8 %v3235
        %v3237 = vlaneseq
        %v3238 = vshrl.u32 %v3237, 7
        %v3239 = vsub.s32 %v3236, %v3238
        %v3240 = vrot.slane %v3226, %v3239
        %v3241 = vcombine.low %v3233, %v3240
        %v3242 = vcombine.low %v2204, %v2208
        %v3243 = vcombine.low %v2212, %v2216
        %v3244 = vcombine.low %v2220, %v2224
        %v3245 = vcombine.low %v2228, %v2232
        %v3247 = vunpack.c.l.s4 1966171168
        %v3248 = vunpack.c.0.s8 %v3247
        %v3249 = vlaneseq
        %v3250 = vshrl.u32 %v3249, 7
        %v3251 = vsub.s32 %v3248, %v3250
        %v3252 = vrot.slane %v3242, %v3251
        %v3254 = vunpack.c.l.s4 1966171168
        %v3255 = vunpack.c.0.s8 %v3254
        %v3256 = vlaneseq
        %v3257 = vshrl.u32 %v3256, 7
        %v3258 = vsub.s32 %v3255, %v3257
        %v3259 = vrot.slane %v3243, %v3258
        %v3261 = vunpack.c.l.s4 1966171168
        %v3262 = vunpack.c.0.s8 %v3261
        %v3263 = vlaneseq
        %v3264 = vshrl.u32 %v3263, 7
        %v3265 = vsub.s32 %v3262, %v3264
        %v3266 = vrot.slane %v3244, %v3265
        %v3268 = vunpack.c.l.s4 1966171168
        %v3269 = vunpack.c.0.s8 %v3268
        %v3270 = vlaneseq
        %v3271 = vshrl.u32 %v3270, 7
        %v3272 = vsub.s32 %v3269, %v3271
        %v3273 = vrot.slane %v3245, %v3272
        %v3274 = vcombine.low %v3252, %v3259
        %v3275 = vcombine.low %v3266, %v3273
        %v3277 = vunpack.c.l.s4 1966171168
        %v3278 = vunpack.c.0.s8 %v3277
        %v3279 = vlaneseq
        %v3280 = vshrl.u32 %v3279, 7
        %v3281 = vsub.s32 %v3278, %v3280
        %v3282 = vrot.slane %v3274, %v3281
        %v3284 = vunpack.c.l.s4 1966171168
        %v3285 = vunpack.c.0.s8 %v3284
        %v3286 = vlaneseq
        %v3287 = vshrl.u32 %v3286, 7
        %v3288 = vsub.s32 %v3285, %v3287
        %v3289 = vrot.slane %v3275, %v3288
        %v3290 = vcombine.low %v3282, %v3289
        %v3291 = vcombine.low %v2236, %v2240
        %v3292 = vcombine.low %v2244, %v2248
        %v3293 = vcombine.low %v2252, %v2256
        %v3294 = vcombine.low %v2260, %v2264
        %v3296 = vunpack.c.l.s4 1966171168
        %v3297 = vunpack.c.0.s8 %v3296
        %v3298 = vlaneseq
        %v3299 = vshrl.u32 %v3298, 7
        %v3300 = vsub.s32 %v3297, %v3299
        %v3301 = vrot.slane %v3291, %v3300
        %v3303 = vunpack.c.l.s4 1966171168
        %v3304 = vunpack.c.0.s8 %v3303
        %v3305 = vlaneseq
        %v3306 = vshrl.u32 %v3305, 7
        %v3307 = vsub.s32 %v3304, %v3306
        %v3308 = vrot.slane %v3292, %v3307
        %v3310 = vunpack.c.l.s4 1966171168
        %v3311 = vunpack.c.0.s8 %v3310
        %v3312 = vlaneseq
        %v3313 = vshrl.u32 %v3312, 7
        %v3314 = vsub.s32 %v3311, %v3313
        %v3315 = vrot.slane %v3293, %v3314
        %v3317 = vunpack.c.l.s4 1966171168
        %v3318 = vunpack.c.0.s8 %v3317
        %v3319 = vlaneseq
        %v3320 = vshrl.u32 %v3319, 7
        %v3321 = vsub.s32 %v3318, %v3320
        %v3322 = vrot.slane %v3294, %v3321
        %v3323 = vcombine.low %v3301, %v3308
        %v3324 = vcombine.low %v3315, %v3322
        %v3326 = vunpack.c.l.s4 1966171168
        %v3327 = vunpack.c.0.s8 %v3326
        %v3328 = vlaneseq
        %v3329 = vshrl.u32 %v3328, 7
        %v3330 = vsub.s32 %v3327, %v3329
        %v3331 = vrot.slane %v3323, %v3330
        %v3333 = vunpack.c.l.s4 1966171168
        %v3334 = vunpack.c.0.s8 %v3333
        %v3335 = vlaneseq
        %v3336 = vshrl.u32 %v3335, 7
        %v3337 = vsub.s32 %v3334, %v3336
        %v3338 = vrot.slane %v3324, %v3337
        %v3339 = vcombine.low %v3331, %v3338
        %v3340 = vcombine.low %v2268, %v2272
        %v3341 = vcombine.low %v2276, %v2280
        %v3342 = vcombine.low %v2284, %v2288
        %v3343 = vcombine.low %v2292, %v2296
        %v3345 = vunpack.c.l.s4 1966171168
        %v3346 = vunpack.c.0.s8 %v3345
        %v3347 = vlaneseq
        %v3348 = vshrl.u32 %v3347, 7
        %v3349 = vsub.s32 %v3346, %v3348
        %v3350 = vrot.slane %v3340, %v3349
        %v3352 = vunpack.c.l.s4 1966171168
        %v3353 = vunpack.c.0.s8 %v3352
        %v3354 = vlaneseq
        %v3355 = vshrl.u32 %v3354, 7
        %v3356 = vsub.s32 %v3353, %v3355
        %v3357 = vrot.slane %v3341, %v3356
        %v3359 = vunpack.c.l.s4 1966171168
        %v3360 = vunpack.c.0.s8 %v3359
        %v3361 = vlaneseq
        %v3362 = vshrl.u32 %v3361, 7
        %v3363 = vsub.s32 %v3360, %v3362
        %v3364 = vrot.slane %v3342, %v3363
        %v3366 = vunpack.c.l.s4 1966171168
        %v3367 = vunpack.c.0.s8 %v3366
        %v3368 = vlaneseq
        %v3369 = vshrl.u32 %v3368, 7
        %v3370 = vsub.s32 %v3367, %v3369
        %v3371 = vrot.slane %v3343, %v3370
        %v3372 = vcombine.low %v3350, %v3357
        %v3373 = vcombine.low %v3364, %v3371
        %v3375 = vunpack.c.l.s4 1966171168
        %v3376 = vunpack.c.0.s8 %v3375
        %v3377 = vlaneseq
        %v3378 = vshrl.u32 %v3377, 7
        %v3379 = vsub.s32 %v3376, %v3378
        %v3380 = vrot.slane %v3372, %v3379
        %v3382 = vunpack.c.l.s4 1966171168
        %v3383 = vunpack.c.0.s8 %v3382
        %v3384 = vlaneseq
        %v3385 = vshrl.u32 %v3384, 7
        %v3386 = vsub.s32 %v3383, %v3385
        %v3387 = vrot.slane %v3373, %v3386
        %v3388 = vcombine.low %v3380, %v3387
        %v3389 = vcombine.low %v2300, %v2304
        %v3390 = vcombine.low %v2308, %v2312
        %v3391 = vcombine.low %v2316, %v2320
        %v3392 = vcombine.low %v2324, %v2328
        %v3394 = vunpack.c.l.s4 1966171168
        %v3395 = vunpack.c.0.s8 %v3394
        %v3396 = vlaneseq
        %v3397 = vshrl.u32 %v3396, 7
        %v3398 = vsub.s32 %v3395, %v3397
        %v3399 = vrot.slane %v3389, %v3398
        %v3401 = vunpack.c.l.s4 1966171168
        %v3402 = vunpack.c.0.s8 %v3401
        %v3403 = vlaneseq
        %v3404 = vshrl.u32 %v3403, 7
        %v3405 = vsub.s32 %v3402, %v3404
        %v3406 = vrot.slane %v3390, %v3405
        %v3408 = vunpack.c.l.s4 1966171168
        %v3409 = vunpack.c.0.s8 %v3408
        %v3410 = vlaneseq
        %v3411 = vshrl.u32 %v3410, 7
        %v3412 = vsub.s32 %v3409, %v3411
        %v3413 = vrot.slane %v3391, %v3412
        %v3415 = vunpack.c.l.s4 1966171168
        %v3416 = vunpack.c.0.s8 %v3415
        %v3417 = vlaneseq
        %v3418 = vshrl.u32 %v3417, 7
        %v3419 = vsub.s32 %v3416, %v3418
        %v3420 = vrot.slane %v3392, %v3419
        %v3421 = vcombine.low %v3399, %v3406
        %v3422 = vcombine.low %v3413, %v3420
        %v3424 = vunpack.c.l.s4 1966171168
        %v3425 = vunpack.c.0.s8 %v3424
        %v3426 = vlaneseq
        %v3427 = vshrl.u32 %v3426, 7
        %v3428 = vsub.s32 %v3425, %v3427
        %v3429 = vrot.slane %v3421, %v3428
        %v3431 = vunpack.c.l.s4 1966171168
        %v3432 = vunpack.c.0.s8 %v3431
        %v3433 = vlaneseq
        %v3434 = vshrl.u32 %v3433, 7
        %v3435 = vsub.s32 %v3432, %v3434
        %v3436 = vrot.slane %v3422, %v3435
        %v3437 = vcombine.low %v3429, %v3436
        %v3438 = vcombine.low %v2332, %v2336
        %v3439 = vcombine.low %v2340, %v2344
        %v3440 = vcombine.low %v2348, %v2352
        %v3441 = vcombine.low %v2356, %v2360
        %v3443 = vunpack.c.l.s4 1966171168
        %v3444 = vunpack.c.0.s8 %v3443
        %v3445 = vlaneseq
        %v3446 = vshrl.u32 %v3445, 7
        %v3447 = vsub.s32 %v3444, %v3446
        %v3448 = vrot.slane %v3438, %v3447
        %v3450 = vunpack.c.l.s4 1966171168
        %v3451 = vunpack.c.0.s8 %v3450
        %v3452 = vlaneseq
        %v3453 = vshrl.u32 %v3452, 7
        %v3454 = vsub.s32 %v3451, %v3453
        %v3455 = vrot.slane %v3439, %v3454
        %v3457 = vunpack.c.l.s4 1966171168
        %v3458 = vunpack.c.0.s8 %v3457
        %v3459 = vlaneseq
        %v3460 = vshrl.u32 %v3459, 7
        %v3461 = vsub.s32 %v3458, %v3460
        %v3462 = vrot.slane %v3440, %v3461
        %v3464 = vunpack.c.l.s4 1966171168
        %v3465 = vunpack.c.0.s8 %v3464
        %v3466 = vlaneseq
        %v3467 = vshrl.u32 %v3466, 7
        %v3468 = vsub.s32 %v3465, %v3467
        %v3469 = vrot.slane %v3441, %v3468
        %v3470 = vcombine.low %v3448, %v3455
        %v3471 = vcombine.low %v3462, %v3469
        %v3473 = vunpack.c.l.s4 1966171168
        %v3474 = vunpack.c.0.s8 %v3473
        %v3475 = vlaneseq
        %v3476 = vshrl.u32 %v3475, 7
        %v3477 = vsub.s32 %v3474, %v3476
        %v3478 = vrot.slane %v3470, %v3477
        %v3480 = vunpack.c.l.s4 1966171168
        %v3481 = vunpack.c.0.s8 %v3480
        %v3482 = vlaneseq
        %v3483 = vshrl.u32 %v3482, 7
        %v3484 = vsub.s32 %v3481, %v3483
        %v3485 = vrot.slane %v3471, %v3484
        %v3486 = vcombine.low %v3478, %v3485
        %v3487 = vcombine.low %v2364, %v2368
        %v3488 = vcombine.low %v2372, %v2376
        %v3489 = vcombine.low %v2380, %v2384
        %v3490 = vcombine.low %v2388, %v2392
        %v3492 = vunpack.c.l.s4 1966171168
        %v3493 = vunpack.c.0.s8 %v3492
        %v3494 = vlaneseq
        %v3495 = vshrl.u32 %v3494, 7
        %v3496 = vsub.s32 %v3493, %v3495
        %v3497 = vrot.slane %v3487, %v3496
        %v3499 = vunpack.c.l.s4 1966171168
        %v3500 = vunpack.c.0.s8 %v3499
        %v3501 = vlaneseq
        %v3502 = vshrl.u32 %v3501, 7
        %v3503 = vsub.s32 %v3500, %v3502
        %v3504 = vrot.slane %v3488, %v3503
        %v3506 = vunpack.c.l.s4 1966171168
        %v3507 = vunpack.c.0.s8 %v3506
        %v3508 = vlaneseq
        %v3509 = vshrl.u32 %v3508, 7
        %v3510 = vsub.s32 %v3507, %v3509
        %v3511 = vrot.slane %v3489, %v3510
        %v3513 = vunpack.c.l.s4 1966171168
        %v3514 = vunpack.c.0.s8 %v3513
        %v3515 = vlaneseq
        %v3516 = vshrl.u32 %v3515, 7
        %v3517 = vsub.s32 %v3514, %v3516
        %v3518 = vrot.slane %v3490, %v3517
        %v3519 = vcombine.low %v3497, %v3504
        %v3520 = vcombine.low %v3511, %v3518
        %v3522 = vunpack.c.l.s4 1966171168
        %v3523 = vunpack.c.0.s8 %v3522
        %v3524 = vlaneseq
        %v3525 = vshrl.u32 %v3524, 7
        %v3526 = vsub.s32 %v3523, %v3525
        %v3527 = vrot.slane %v3519, %v3526
        %v3529 = vunpack.c.l.s4 1966171168
        %v3530 = vunpack.c.0.s8 %v3529
        %v3531 = vlaneseq
        %v3532 = vshrl.u32 %v3531, 7
        %v3533 = vsub.s32 %v3530, %v3532
        %v3534 = vrot.slane %v3520, %v3533
        %v3535 = vcombine.low %v3527, %v3534
        %v3536 = vcombine.low %v2396, %v2400
        %v3537 = vcombine.low %v2404, %v2408
        %v3538 = vcombine.low %v2412, %v2416
        %v3539 = vcombine.low %v2420, %v2424
        %v3541 = vunpack.c.l.s4 1966171168
        %v3542 = vunpack.c.0.s8 %v3541
        %v3543 = vlaneseq
        %v3544 = vshrl.u32 %v3543, 7
        %v3545 = vsub.s32 %v3542, %v3544
        %v3546 = vrot.slane %v3536, %v3545
        %v3548 = vunpack.c.l.s4 1966171168
        %v3549 = vunpack.c.0.s8 %v3548
        %v3550 = vlaneseq
        %v3551 = vshrl.u32 %v3550, 7
        %v3552 = vsub.s32 %v3549, %v3551
        %v3553 = vrot.slane %v3537, %v3552
        %v3555 = vunpack.c.l.s4 1966171168
        %v3556 = vunpack.c.0.s8 %v3555
        %v3557 = vlaneseq
        %v3558 = vshrl.u32 %v3557, 7
        %v3559 = vsub.s32 %v3556, %v3558
        %v3560 = vrot.slane %v3538, %v3559
        %v3562 = vunpack.c.l.s4 1966171168
        %v3563 = vunpack.c.0.s8 %v3562
        %v3564 = vlaneseq
        %v3565 = vshrl.u32 %v3564, 7
        %v3566 = vsub.s32 %v3563, %v3565
        %v3567 = vrot.slane %v3539, %v3566
        %v3568 = vcombine.low %v3546, %v3553
        %v3569 = vcombine.low %v3560, %v3567
        %v3571 = vunpack.c.l.s4 1966171168
        %v3572 = vunpack.c.0.s8 %v3571
        %v3573 = vlaneseq
        %v3574 = vshrl.u32 %v3573, 7
        %v3575 = vsub.s32 %v3572, %v3574
        %v3576 = vrot.slane %v3568, %v3575
        %v3578 = vunpack.c.l.s4 1966171168
        %v3579 = vunpack.c.0.s8 %v3578
        %v3580 = vlaneseq
        %v3581 = vshrl.u32 %v3580, 7
        %v3582 = vsub.s32 %v3579, %v3581
        %v3583 = vrot.slane %v3569, %v3582
        %v3584 = vcombine.low %v3576, %v3583
        %v3585 = vcombine.low %v2428, %v2432
        %v3586 = vcombine.low %v2436, %v2440
        %v3587 = vcombine.low %v2444, %v2448
        %v3588 = vcombine.low %v2452, %v2456
        %v3590 = vunpack.c.l.s4 1966171168
        %v3591 = vunpack.c.0.s8 %v3590
        %v3592 = vlaneseq
        %v3593 = vshrl.u32 %v3592, 7
        %v3594 = vsub.s32 %v3591, %v3593
        %v3595 = vrot.slane %v3585, %v3594
        %v3597 = vunpack.c.l.s4 1966171168
        %v3598 = vunpack.c.0.s8 %v3597
        %v3599 = vlaneseq
        %v3600 = vshrl.u32 %v3599, 7
        %v3601 = vsub.s32 %v3598, %v3600
        %v3602 = vrot.slane %v3586, %v3601
        %v3604 = vunpack.c.l.s4 1966171168
        %v3605 = vunpack.c.0.s8 %v3604
        %v3606 = vlaneseq
        %v3607 = vshrl.u32 %v3606, 7
        %v3608 = vsub.s32 %v3605, %v3607
        %v3609 = vrot.slane %v3587, %v3608
        %v3611 = vunpack.c.l.s4 1966171168
        %v3612 = vunpack.c.0.s8 %v3611
        %v3613 = vlaneseq
        %v3614 = vshrl.u32 %v3613, 7
        %v3615 = vsub.s32 %v3612, %v3614
        %v3616 = vrot.slane %v3588, %v3615
        %v3617 = vcombine.low %v3595, %v3602
        %v3618 = vcombine.low %v3609, %v3616
        %v3620 = vunpack.c.l.s4 1966171168
        %v3621 = vunpack.c.0.s8 %v3620
        %v3622 = vlaneseq
        %v3623 = vshrl.u32 %v3622, 7
        %v3624 = vsub.s32 %v3621, %v3623
        %v3625 = vrot.slane %v3617, %v3624
        %v3627 = vunpack.c.l.s4 1966171168
        %v3628 = vunpack.c.0.s8 %v3627
        %v3629 = vlaneseq
        %v3630 = vshrl.u32 %v3629, 7
        %v3631 = vsub.s32 %v3628, %v3630
        %v3632 = vrot.slane %v3618, %v3631
        %v3633 = vcombine.low %v3625, %v3632
        %v3634 = vcombine.low %v2460, %v2464
        %v3635 = vcombine.low %v2468, %v2472
        %v3636 = vcombine.low %v2476, %v2480
        %v3637 = vcombine.low %v2484, %v2488
        %v3639 = vunpack.c.l.s4 1966171168
        %v3640 = vunpack.c.0.s8 %v3639
        %v3641 = vlaneseq
        %v3642 = vshrl.u32 %v3641, 7
        %v3643 = vsub.s32 %v3640, %v3642
        %v3644 = vrot.slane %v3634, %v3643
        %v3646 = vunpack.c.l.s4 1966171168
        %v3647 = vunpack.c.0.s8 %v3646
        %v3648 = vlaneseq
        %v3649 = vshrl.u32 %v3648, 7
        %v3650 = vsub.s32 %v3647, %v3649
        %v3651 = vrot.slane %v3635, %v3650
        %v3653 = vunpack.c.l.s4 1966171168
        %v3654 = vunpack.c.0.s8 %v3653
        %v3655 = vlaneseq
        %v3656 = vshrl.u32 %v3655, 7
        %v3657 = vsub.s32 %v3654, %v3656
        %v3658 = vrot.slane %v3636, %v3657
        %v3660 = vunpack.c.l.s4 1966171168
        %v3661 = vunpack.c.0.s8 %v3660
        %v3662 = vlaneseq
        %v3663 = vshrl.u32 %v3662, 7
        %v3664 = vsub.s32 %v3661, %v3663
        %v3665 = vrot.slane %v3637, %v3664
        %v3666 = vcombine.low %v3644, %v3651
        %v3667 = vcombine.low %v3658, %v3665
        %v3669 = vunpack.c.l.s4 1966171168
        %v3670 = vunpack.c.0.s8 %v3669
        %v3671 = vlaneseq
        %v3672 = vshrl.u32 %v3671, 7
        %v3673 = vsub.s32 %v3670, %v3672
        %v3674 = vrot.slane %v3666, %v3673
        %v3676 = vunpack.c.l.s4 1966171168
        %v3677 = vunpack.c.0.s8 %v3676
        %v3678 = vlaneseq
        %v3679 = vshrl.u32 %v3678, 7
        %v3680 = vsub.s32 %v3677, %v3679
        %v3681 = vrot.slane %v3667, %v3680
        %v3682 = vcombine.low %v3674, %v3681
        %v3683 = vcombine.low %v2492, %v2496
        %v3684 = vcombine.low %v2500, %v2504
        %v3685 = vcombine.low %v2508, %v2512
        %v3686 = vcombine.low %v2516, %v2520
        %v3688 = vunpack.c.l.s4 1966171168
        %v3689 = vunpack.c.0.s8 %v3688
        %v3690 = vlaneseq
        %v3691 = vshrl.u32 %v3690, 7
        %v3692 = vsub.s32 %v3689, %v3691
        %v3693 = vrot.slane %v3683, %v3692
        %v3695 = vunpack.c.l.s4 1966171168
        %v3696 = vunpack.c.0.s8 %v3695
        %v3697 = vlaneseq
        %v3698 = vshrl.u32 %v3697, 7
        %v3699 = vsub.s32 %v3696, %v3698
        %v3700 = vrot.slane %v3684, %v3699
        %v3702 = vunpack.c.l.s4 1966171168
        %v3703 = vunpack.c.0.s8 %v3702
        %v3704 = vlaneseq
        %v3705 = vshrl.u32 %v3704, 7
        %v3706 = vsub.s32 %v3703, %v3705
        %v3707 = vrot.slane %v3685, %v3706
        %v3709 = vunpack.c.l.s4 1966171168
        %v3710 = vunpack.c.0.s8 %v3709
        %v3711 = vlaneseq
        %v3712 = vshrl.u32 %v3711, 7
        %v3713 = vsub.s32 %v3710, %v3712
        %v3714 = vrot.slane %v3686, %v3713
        %v3715 = vcombine.low %v3693, %v3700
        %v3716 = vcombine.low %v3707, %v3714
        %v3718 = vunpack.c.l.s4 1966171168
        %v3719 = vunpack.c.0.s8 %v3718
        %v3720 = vlaneseq
        %v3721 = vshrl.u32 %v3720, 7
        %v3722 = vsub.s32 %v3719, %v3721
        %v3723 = vrot.slane %v3715, %v3722
        %v3725 = vunpack.c.l.s4 1966171168
        %v3726 = vunpack.c.0.s8 %v3725
        %v3727 = vlaneseq
        %v3728 = vshrl.u32 %v3727, 7
        %v3729 = vsub.s32 %v3726, %v3728
        %v3730 = vrot.slane %v3716, %v3729
        %v3731 = vcombine.low %v3723, %v3730
        %v3732 = vcombine.low %v2524, %v2528
        %v3733 = vcombine.low %v2532, %v2536
        %v3734 = vcombine.low %v2540, %v2544
        %v3735 = vcombine.low %v2548, %v2552
        %v3737 = vunpack.c.l.s4 1966171168
        %v3738 = vunpack.c.0.s8 %v3737
        %v3739 = vlaneseq
        %v3740 = vshrl.u32 %v3739, 7
        %v3741 = vsub.s32 %v3738, %v3740
        %v3742 = vrot.slane %v3732, %v3741
        %v3744 = vunpack.c.l.s4 1966171168
        %v3745 = vunpack.c.0.s8 %v3744
        %v3746 = vlaneseq
        %v3747 = vshrl.u32 %v3746, 7
        %v3748 = vsub.s32 %v3745, %v3747
        %v3749 = vrot.slane %v3733, %v3748
        %v3751 = vunpack.c.l.s4 1966171168
        %v3752 = vunpack.c.0.s8 %v3751
        %v3753 = vlaneseq
        %v3754 = vshrl.u32 %v3753, 7
        %v3755 = vsub.s32 %v3752, %v3754
        %v3756 = vrot.slane %v3734, %v3755
        %v3758 = vunpack.c.l.s4 1966171168
        %v3759 = vunpack.c.0.s8 %v3758
        %v3760 = vlaneseq
        %v3761 = vshrl.u32 %v3760, 7
        %v3762 = vsub.s32 %v3759, %v3761
        %v3763 = vrot.slane %v3735, %v3762
        %v3764 = vcombine.low %v3742, %v3749
        %v3765 = vcombine.low %v3756, %v3763
        %v3767 = vunpack.c.l.s4 1966171168
        %v3768 = vunpack.c.0.s8 %v3767
        %v3769 = vlaneseq
        %v3770 = vshrl.u32 %v3769, 7
        %v3771 = vsub.s32 %v3768, %v3770
        %v3772 = vrot.slane %v3764, %v3771
        %v3774 = vunpack.c.l.s4 1966171168
        %v3775 = vunpack.c.0.s8 %v3774
        %v3776 = vlaneseq
        %v3777 = vshrl.u32 %v3776, 7
        %v3778 = vsub.s32 %v3775, %v3777
        %v3779 = vrot.slane %v3765, %v3778
        %v3780 = vcombine.low %v3772, %v3779
        %v3781 = vcombine.low %v2556, %v2560
        %v3782 = vcombine.low %v2564, %v2568
        %v3783 = vcombine.low %v2572, %v2576
        %v3784 = vcombine.low %v2580, %v2584
        %v3786 = vunpack.c.l.s4 1966171168
        %v3787 = vunpack.c.0.s8 %v3786
        %v3788 = vlaneseq
        %v3789 = vshrl.u32 %v3788, 7
        %v3790 = vsub.s32 %v3787, %v3789
        %v3791 = vrot.slane %v3781, %v3790
        %v3793 = vunpack.c.l.s4 1966171168
        %v3794 = vunpack.c.0.s8 %v3793
        %v3795 = vlaneseq
        %v3796 = vshrl.u32 %v3795, 7
        %v3797 = vsub.s32 %v3794, %v3796
        %v3798 = vrot.slane %v3782, %v3797
        %v3800 = vunpack.c.l.s4 1966171168
        %v3801 = vunpack.c.0.s8 %v3800
        %v3802 = vlaneseq
        %v3803 = vshrl.u32 %v3802, 7
        %v3804 = vsub.s32 %v3801, %v3803
        %v3805 = vrot.slane %v3783, %v3804
        %v3807 = vunpack.c.l.s4 1966171168
        %v3808 = vunpack.c.0.s8 %v3807
        %v3809 = vlaneseq
        %v3810 = vshrl.u32 %v3809, 7
        %v3811 = vsub.s32 %v3808, %v3810
        %v3812 = vrot.slane %v3784, %v3811
        %v3813 = vcombine.low %v3791, %v3798
        %v3814 = vcombine.low %v3805, %v3812
        %v3816 = vunpack.c.l.s4 1966171168
        %v3817 = vunpack.c.0.s8 %v3816
        %v3818 = vlaneseq
        %v3819 = vshrl.u32 %v3818, 7
        %v3820 = vsub.s32 %v3817, %v3819
        %v3821 = vrot.slane %v3813, %v3820
        %v3823 = vunpack.c.l.s4 1966171168
        %v3824 = vunpack.c.0.s8 %v3823
        %v3825 = vlaneseq
        %v3826 = vshrl.u32 %v3825, 7
        %v3827 = vsub.s32 %v3824, %v3826
        %v3828 = vrot.slane %v3814, %v3827
        %v3829 = vcombine.low %v3821, %v3828
        %v3830 = vcombine.low %v2588, %v2592
        %v3831 = vcombine.low %v2596, %v2600
        %v3832 = vcombine.low %v2604, %v2608
        %v3833 = vcombine.low %v2612, %v2616
        %v3835 = vunpack.c.l.s4 1966171168
        %v3836 = vunpack.c.0.s8 %v3835
        %v3837 = vlaneseq
        %v3838 = vshrl.u32 %v3837, 7
        %v3839 = vsub.s32 %v3836, %v3838
        %v3840 = vrot.slane %v3830, %v3839
        %v3842 = vunpack.c.l.s4 1966171168
        %v3843 = vunpack.c.0.s8 %v3842
        %v3844 = vlaneseq
        %v3845 = vshrl.u32 %v3844, 7
        %v3846 = vsub.s32 %v3843, %v3845
        %v3847 = vrot.slane %v3831, %v3846
        %v3849 = vunpack.c.l.s4 1966171168
        %v3850 = vunpack.c.0.s8 %v3849
        %v3851 = vlaneseq
        %v3852 = vshrl.u32 %v3851, 7
        %v3853 = vsub.s32 %v3850, %v3852
        %v3854 = vrot.slane %v3832, %v3853
        %v3856 = vunpack.c.l.s4 1966171168
        %v3857 = vunpack.c.0.s8 %v3856
        %v3858 = vlaneseq
        %v3859 = vshrl.u32 %v3858, 7
        %v3860 = vsub.s32 %v3857, %v3859
        %v3861 = vrot.slane %v3833, %v3860
        %v3862 = vcombine.low %v3840, %v3847
        %v3863 = vcombine.low %v3854, %v3861
        %v3865 = vunpack.c.l.s4 1966171168
        %v3866 = vunpack.c.0.s8 %v3865
        %v3867 = vlaneseq
        %v3868 = vshrl.u32 %v3867, 7
        %v3869 = vsub.s32 %v3866, %v3868
        %v3870 = vrot.slane %v3862, %v3869
        %v3872 = vunpack.c.l.s4 1966171168
        %v3873 = vunpack.c.0.s8 %v3872
        %v3874 = vlaneseq
        %v3875 = vshrl.u32 %v3874, 7
        %v3876 = vsub.s32 %v3873, %v3875
        %v3877 = vrot.slane %v3863, %v3876
        %v3878 = vcombine.low %v3870, %v3877
        %v3879 = vcombine.low %v2620, %v2624
        %v3880 = vcombine.low %v2628, %v2632
        %v3881 = vcombine.low %v2636, %v2640
        %v3882 = vcombine.low %v2644, %v2648
        %v3884 = vunpack.c.l.s4 1966171168
        %v3885 = vunpack.c.0.s8 %v3884
        %v3886 = vlaneseq
        %v3887 = vshrl.u32 %v3886, 7
        %v3888 = vsub.s32 %v3885, %v3887
        %v3889 = vrot.slane %v3879, %v3888
        %v3891 = vunpack.c.l.s4 1966171168
        %v3892 = vunpack.c.0.s8 %v3891
        %v3893 = vlaneseq
        %v3894 = vshrl.u32 %v3893, 7
        %v3895 = vsub.s32 %v3892, %v3894
        %v3896 = vrot.slane %v3880, %v3895
        %v3898 = vunpack.c.l.s4 1966171168
        %v3899 = vunpack.c.0.s8 %v3898
        %v3900 = vlaneseq
        %v3901 = vshrl.u32 %v3900, 7
        %v3902 = vsub.s32 %v3899, %v3901
        %v3903 = vrot.slane %v3881, %v3902
        %v3905 = vunpack.c.l.s4 1966171168
        %v3906 = vunpack.c.0.s8 %v3905
        %v3907 = vlaneseq
        %v3908 = vshrl.u32 %v3907, 7
        %v3909 = vsub.s32 %v3906, %v3908
        %v3910 = vrot.slane %v3882, %v3909
        %v3911 = vcombine.low %v3889, %v3896
        %v3912 = vcombine.low %v3903, %v3910
        %v3914 = vunpack.c.l.s4 1966171168
        %v3915 = vunpack.c.0.s8 %v3914
        %v3916 = vlaneseq
        %v3917 = vshrl.u32 %v3916, 7
        %v3918 = vsub.s32 %v3915, %v3917
        %v3919 = vrot.slane %v3911, %v3918
        %v3921 = vunpack.c.l.s4 1966171168
        %v3922 = vunpack.c.0.s8 %v3921
        %v3923 = vlaneseq
        %v3924 = vshrl.u32 %v3923, 7
        %v3925 = vsub.s32 %v3922, %v3924
        %v3926 = vrot.slane %v3912, %v3925
        %v3927 = vcombine.low %v3919, %v3926
        %v3928 = vcombine.low %v2652, %v2656
        %v3929 = vcombine.low %v2660, %v2664
        %v3930 = vcombine.low %v2668, %v2672
        %v3931 = vcombine.low %v2676, %v2680
        %v3933 = vunpack.c.l.s4 1966171168
        %v3934 = vunpack.c.0.s8 %v3933
        %v3935 = vlaneseq
        %v3936 = vshrl.u32 %v3935, 7
        %v3937 = vsub.s32 %v3934, %v3936
        %v3938 = vrot.slane %v3928, %v3937
        %v3940 = vunpack.c.l.s4 1966171168
        %v3941 = vunpack.c.0.s8 %v3940
        %v3942 = vlaneseq
        %v3943 = vshrl.u32 %v3942, 7
        %v3944 = vsub.s32 %v3941, %v3943
        %v3945 = vrot.slane %v3929, %v3944
        %v3947 = vunpack.c.l.s4 1966171168
        %v3948 = vunpack.c.0.s8 %v3947
        %v3949 = vlaneseq
        %v3950 = vshrl.u32 %v3949, 7
        %v3951 = vsub.s32 %v3948, %v3950
        %v3952 = vrot.slane %v3930, %v3951
        %v3954 = vunpack.c.l.s4 1966171168
        %v3955 = vunpack.c.0.s8 %v3954
        %v3956 = vlaneseq
        %v3957 = vshrl.u32 %v3956, 7
        %v3958 = vsub.s32 %v3955, %v3957
        %v3959 = vrot.slane %v3931, %v3958
        %v3960 = vcombine.low %v3938, %v3945
        %v3961 = vcombine.low %v3952, %v3959
        %v3963 = vunpack.c.l.s4 1966171168
        %v3964 = vunpack.c.0.s8 %v3963
        %v3965 = vlaneseq
        %v3966 = vshrl.u32 %v3965, 7
        %v3967 = vsub.s32 %v3964, %v3966
        %v3968 = vrot.slane %v3960, %v3967
        %v3970 = vunpack.c.l.s4 1966171168
        %v3971 = vunpack.c.0.s8 %v3970
        %v3972 = vlaneseq
        %v3973 = vshrl.u32 %v3972, 7
        %v3974 = vsub.s32 %v3971, %v3973
        %v3975 = vrot.slane %v3961, %v3974
        %v3976 = vcombine.low %v3968, %v3975
        %v3977 = vcombine.low %v2684, %v2688
        %v3978 = vcombine.low %v2692, %v2696
        %v3979 = vcombine.low %v2700, %v2704
        %v3980 = vcombine.low %v2708, %v2712
        %v3982 = vunpack.c.l.s4 1966171168
        %v3983 = vunpack.c.0.s8 %v3982
        %v3984 = vlaneseq
        %v3985 = vshrl.u32 %v3984, 7
        %v3986 = vsub.s32 %v3983, %v3985
        %v3987 = vrot.slane %v3977, %v3986
        %v3989 = vunpack.c.l.s4 1966171168
        %v3990 = vunpack.c.0.s8 %v3989
        %v3991 = vlaneseq
        %v3992 = vshrl.u32 %v3991, 7
        %v3993 = vsub.s32 %v3990, %v3992
        %v3994 = vrot.slane %v3978, %v3993
        %v3996 = vunpack.c.l.s4 1966171168
        %v3997 = vunpack.c.0.s8 %v3996
        %v3998 = vlaneseq
        %v3999 = vshrl.u32 %v3998, 7
        %v4000 = vsub.s32 %v3997, %v3999
        %v4001 = vrot.slane %v3979, %v4000
        %v4003 = vunpack.c.l.s4 1966171168
        %v4004 = vunpack.c.0.s8 %v4003
        %v4005 = vlaneseq
        %v4006 = vshrl.u32 %v4005, 7
        %v4007 = vsub.s32 %v4004, %v4006
        %v4008 = vrot.slane %v3980, %v4007
        %v4009 = vcombine.low %v3987, %v3994
        %v4010 = vcombine.low %v4001, %v4008
        %v4012 = vunpack.c.l.s4 1966171168
        %v4013 = vunpack.c.0.s8 %v4012
        %v4014 = vlaneseq
        %v4015 = vshrl.u32 %v4014, 7
        %v4016 = vsub.s32 %v4013, %v4015
        %v4017 = vrot.slane %v4009, %v4016
        %v4019 = vunpack.c.l.s4 1966171168
        %v4020 = vunpack.c.0.s8 %v4019
        %v4021 = vlaneseq
        %v4022 = vshrl.u32 %v4021, 7
        %v4023 = vsub.s32 %v4020, %v4022
        %v4024 = vrot.slane %v4010, %v4023
        %v4025 = vcombine.low %v4017, %v4024
        %v4026 = vcombine.low %v2716, %v2720
        %v4027 = vcombine.low %v2724, %v2728
        %v4028 = vcombine.low %v2732, %v2736
        %v4029 = vcombine.low %v2740, %v2744
        %v4031 = vunpack.c.l.s4 1966171168
        %v4032 = vunpack.c.0.s8 %v4031
        %v4033 = vlaneseq
        %v4034 = vshrl.u32 %v4033, 7
        %v4035 = vsub.s32 %v4032, %v4034
        %v4036 = vrot.slane %v4026, %v4035
        %v4038 = vunpack.c.l.s4 1966171168
        %v4039 = vunpack.c.0.s8 %v4038
        %v4040 = vlaneseq
        %v4041 = vshrl.u32 %v4040, 7
        %v4042 = vsub.s32 %v4039, %v4041
        %v4043 = vrot.slane %v4027, %v4042
        %v4045 = vunpack.c.l.s4 1966171168
        %v4046 = vunpack.c.0.s8 %v4045
        %v4047 = vlaneseq
        %v4048 = vshrl.u32 %v4047, 7
        %v4049 = vsub.s32 %v4046, %v4048
        %v4050 = vrot.slane %v4028, %v4049
        %v4052 = vunpack.c.l.s4 1966171168
        %v4053 = vunpack.c.0.s8 %v4052
        %v4054 = vlaneseq
        %v4055 = vshrl.u32 %v4054, 7
        %v4056 = vsub.s32 %v4053, %v4055
        %v4057 = vrot.slane %v4029, %v4056
        %v4058 = vcombine.low %v4036, %v4043
        %v4059 = vcombine.low %v4050, %v4057
        %v4061 = vunpack.c.l.s4 1966171168
        %v4062 = vunpack.c.0.s8 %v4061
        %v4063 = vlaneseq
        %v4064 = vshrl.u32 %v4063, 7
        %v4065 = vsub.s32 %v4062, %v4064
        %v4066 = vrot.slane %v4058, %v4065
        %v4068 = vunpack.c.l.s4 1966171168
        %v4069 = vunpack.c.0.s8 %v4068
        %v4070 = vlaneseq
        %v4071 = vshrl.u32 %v4070, 7
        %v4072 = vsub.s32 %v4069, %v4071
        %v4073 = vrot.slane %v4059, %v4072
        %v4074 = vcombine.low %v4066, %v4073
        %v4075 = vcombine.low %v2748, %v2752
        %v4076 = vcombine.low %v2756, %v2760
        %v4077 = vcombine.low %v2764, %v2768
        %v4078 = vcombine.low %v2772, %v2776
        %v4080 = vunpack.c.l.s4 1966171168
        %v4081 = vunpack.c.0.s8 %v4080
        %v4082 = vlaneseq
        %v4083 = vshrl.u32 %v4082, 7
        %v4084 = vsub.s32 %v4081, %v4083
        %v4085 = vrot.slane %v4075, %v4084
        %v4087 = vunpack.c.l.s4 1966171168
        %v4088 = vunpack.c.0.s8 %v4087
        %v4089 = vlaneseq
        %v4090 = vshrl.u32 %v4089, 7
        %v4091 = vsub.s32 %v4088, %v4090
        %v4092 = vrot.slane %v4076, %v4091
        %v4094 = vunpack.c.l.s4 1966171168
        %v4095 = vunpack.c.0.s8 %v4094
        %v4096 = vlaneseq
        %v4097 = vshrl.u32 %v4096, 7
        %v4098 = vsub.s32 %v4095, %v4097
        %v4099 = vrot.slane %v4077, %v4098
        %v4101 = vunpack.c.l.s4 1966171168
        %v4102 = vunpack.c.0.s8 %v4101
        %v4103 = vlaneseq
        %v4104 = vshrl.u32 %v4103, 7
        %v4105 = vsub.s32 %v4102, %v4104
        %v4106 = vrot.slane %v4078, %v4105
        %v4107 = vcombine.low %v4085, %v4092
        %v4108 = vcombine.low %v4099, %v4106
        %v4110 = vunpack.c.l.s4 1966171168
        %v4111 = vunpack.c.0.s8 %v4110
        %v4112 = vlaneseq
        %v4113 = vshrl.u32 %v4112, 7
        %v4114 = vsub.s32 %v4111, %v4113
        %v4115 = vrot.slane %v4107, %v4114
        %v4117 = vunpack.c.l.s4 1966171168
        %v4118 = vunpack.c.0.s8 %v4117
        %v4119 = vlaneseq
        %v4120 = vshrl.u32 %v4119, 7
        %v4121 = vsub.s32 %v4118, %v4120
        %v4122 = vrot.slane %v4108, %v4121
        %v4123 = vcombine.low %v4115, %v4122
        %v4124 = vcombine.low %v2780, %v2784
        %v4125 = vcombine.low %v2788, %v2792
        %v4126 = vcombine.low %v2796, %v2800
        %v4127 = vcombine.low %v2804, %v2808
        %v4129 = vunpack.c.l.s4 1966171168
        %v4130 = vunpack.c.0.s8 %v4129
        %v4131 = vlaneseq
        %v4132 = vshrl.u32 %v4131, 7
        %v4133 = vsub.s32 %v4130, %v4132
        %v4134 = vrot.slane %v4124, %v4133
        %v4136 = vunpack.c.l.s4 1966171168
        %v4137 = vunpack.c.0.s8 %v4136
        %v4138 = vlaneseq
        %v4139 = vshrl.u32 %v4138, 7
        %v4140 = vsub.s32 %v4137, %v4139
        %v4141 = vrot.slane %v4125, %v4140
        %v4143 = vunpack.c.l.s4 1966171168
        %v4144 = vunpack.c.0.s8 %v4143
        %v4145 = vlaneseq
        %v4146 = vshrl.u32 %v4145, 7
        %v4147 = vsub.s32 %v4144, %v4146
        %v4148 = vrot.slane %v4126, %v4147
        %v4150 = vunpack.c.l.s4 1966171168
        %v4151 = vunpack.c.0.s8 %v4150
        %v4152 = vlaneseq
        %v4153 = vshrl.u32 %v4152, 7
        %v4154 = vsub.s32 %v4151, %v4153
        %v4155 = vrot.slane %v4127, %v4154
        %v4156 = vcombine.low %v4134, %v4141
        %v4157 = vcombine.low %v4148, %v4155
        %v4159 = vunpack.c.l.s4 1966171168
        %v4160 = vunpack.c.0.s8 %v4159
        %v4161 = vlaneseq
        %v4162 = vshrl.u32 %v4161, 7
        %v4163 = vsub.s32 %v4160, %v4162
        %v4164 = vrot.slane %v4156, %v4163
        %v4166 = vunpack.c.l.s4 1966171168
        %v4167 = vunpack.c.0.s8 %v4166
        %v4168 = vlaneseq
        %v4169 = vshrl.u32 %v4168, 7
        %v4170 = vsub.s32 %v4167, %v4169
        %v4171 = vrot.slane %v4157, %v4170
        %v4172 = vcombine.low %v4164, %v4171
        %v4173 = vcombine.low %v2812, %v2816
        %v4174 = vcombine.low %v2820, %v2824
        %v4175 = vcombine.low %v2828, %v2832
        %v4176 = vcombine.low %v2836, %v2840
        %v4178 = vunpack.c.l.s4 1966171168
        %v4179 = vunpack.c.0.s8 %v4178
        %v4180 = vlaneseq
        %v4181 = vshrl.u32 %v4180, 7
        %v4182 = vsub.s32 %v4179, %v4181
        %v4183 = vrot.slane %v4173, %v4182
        %v4185 = vunpack.c.l.s4 1966171168
        %v4186 = vunpack.c.0.s8 %v4185
        %v4187 = vlaneseq
        %v4188 = vshrl.u32 %v4187, 7
        %v4189 = vsub.s32 %v4186, %v4188
        %v4190 = vrot.slane %v4174, %v4189
        %v4192 = vunpack.c.l.s4 1966171168
        %v4193 = vunpack.c.0.s8 %v4192
        %v4194 = vlaneseq
        %v4195 = vshrl.u32 %v4194, 7
        %v4196 = vsub.s32 %v4193, %v4195
        %v4197 = vrot.slane %v4175, %v4196
        %v4199 = vunpack.c.l.s4 1966171168
        %v4200 = vunpack.c.0.s8 %v4199
        %v4201 = vlaneseq
        %v4202 = vshrl.u32 %v4201, 7
        %v4203 = vsub.s32 %v4200, %v4202
        %v4204 = vrot.slane %v4176, %v4203
        %v4205 = vcombine.low %v4183, %v4190
        %v4206 = vcombine.low %v4197, %v4204
        %v4208 = vunpack.c.l.s4 1966171168
        %v4209 = vunpack.c.0.s8 %v4208
        %v4210 = vlaneseq
        %v4211 = vshrl.u32 %v4210, 7
        %v4212 = vsub.s32 %v4209, %v4211
        %v4213 = vrot.slane %v4205, %v4212
        %v4215 = vunpack.c.l.s4 1966171168
        %v4216 = vunpack.c.0.s8 %v4215
        %v4217 = vlaneseq
        %v4218 = vshrl.u32 %v4217, 7
        %v4219 = vsub.s32 %v4216, %v4218
        %v4220 = vrot.slane %v4206, %v4219
        %v4221 = vcombine.low %v4213, %v4220
        %v4222 = vcombine.low %v2844, %v2848
        %v4223 = vcombine.low %v2852, %v2856
        %v4224 = vcombine.low %v2860, %v2864
        %v4225 = vcombine.low %v2868, %v2872
        %v4227 = vunpack.c.l.s4 1966171168
        %v4228 = vunpack.c.0.s8 %v4227
        %v4229 = vlaneseq
        %v4230 = vshrl.u32 %v4229, 7
        %v4231 = vsub.s32 %v4228, %v4230
        %v4232 = vrot.slane %v4222, %v4231
        %v4234 = vunpack.c.l.s4 1966171168
        %v4235 = vunpack.c.0.s8 %v4234
        %v4236 = vlaneseq
        %v4237 = vshrl.u32 %v4236, 7
        %v4238 = vsub.s32 %v4235, %v4237
        %v4239 = vrot.slane %v4223, %v4238
        %v4241 = vunpack.c.l.s4 1966171168
        %v4242 = vunpack.c.0.s8 %v4241
        %v4243 = vlaneseq
        %v4244 = vshrl.u32 %v4243, 7
        %v4245 = vsub.s32 %v4242, %v4244
        %v4246 = vrot.slane %v4224, %v4245
        %v4248 = vunpack.c.l.s4 1966171168
        %v4249 = vunpack.c.0.s8 %v4248
        %v4250 = vlaneseq
        %v4251 = vshrl.u32 %v4250, 7
        %v4252 = vsub.s32 %v4249, %v4251
        %v4253 = vrot.slane %v4225, %v4252
        %v4254 = vcombine.low %v4232, %v4239
        %v4255 = vcombine.low %v4246, %v4253
        %v4257 = vunpack.c.l.s4 1966171168
        %v4258 = vunpack.c.0.s8 %v4257
        %v4259 = vlaneseq
        %v4260 = vshrl.u32 %v4259, 7
        %v4261 = vsub.s32 %v4258, %v4260
        %v4262 = vrot.slane %v4254, %v4261
        %v4264 = vunpack.c.l.s4 1966171168
        %v4265 = vunpack.c.0.s8 %v4264
        %v4266 = vlaneseq
        %v4267 = vshrl.u32 %v4266, 7
        %v4268 = vsub.s32 %v4265, %v4267
        %v4269 = vrot.slane %v4255, %v4268
        %v4270 = vcombine.low %v4262, %v4269
        %v4271 = vcombine.low %v2876, %v2880
        %v4272 = vcombine.low %v2884, %v2888
        %v4273 = vcombine.low %v2892, %v2896
        %v4274 = vcombine.low %v2900, %v2904
        %v4276 = vunpack.c.l.s4 1966171168
        %v4277 = vunpack.c.0.s8 %v4276
        %v4278 = vlaneseq
        %v4279 = vshrl.u32 %v4278, 7
        %v4280 = vsub.s32 %v4277, %v4279
        %v4281 = vrot.slane %v4271, %v4280
        %v4283 = vunpack.c.l.s4 1966171168
        %v4284 = vunpack.c.0.s8 %v4283
        %v4285 = vlaneseq
        %v4286 = vshrl.u32 %v4285, 7
        %v4287 = vsub.s32 %v4284, %v4286
        %v4288 = vrot.slane %v4272, %v4287
        %v4290 = vunpack.c.l.s4 1966171168
        %v4291 = vunpack.c.0.s8 %v4290
        %v4292 = vlaneseq
        %v4293 = vshrl.u32 %v4292, 7
        %v4294 = vsub.s32 %v4291, %v4293
        %v4295 = vrot.slane %v4273, %v4294
        %v4297 = vunpack.c.l.s4 1966171168
        %v4298 = vunpack.c.0.s8 %v4297
        %v4299 = vlaneseq
        %v4300 = vshrl.u32 %v4299, 7
        %v4301 = vsub.s32 %v4298, %v4300
        %v4302 = vrot.slane %v4274, %v4301
        %v4303 = vcombine.low %v4281, %v4288
        %v4304 = vcombine.low %v4295, %v4302
        %v4306 = vunpack.c.l.s4 1966171168
        %v4307 = vunpack.c.0.s8 %v4306
        %v4308 = vlaneseq
        %v4309 = vshrl.u32 %v4308, 7
        %v4310 = vsub.s32 %v4307, %v4309
        %v4311 = vrot.slane %v4303, %v4310
        %v4313 = vunpack.c.l.s4 1966171168
        %v4314 = vunpack.c.0.s8 %v4313
        %v4315 = vlaneseq
        %v4316 = vshrl.u32 %v4315, 7
        %v4317 = vsub.s32 %v4314, %v4316
        %v4318 = vrot.slane %v4304, %v4317
        %v4319 = vcombine.low %v4311, %v4318
        %v4320 = vcombine.low %v2908, %v2912
        %v4321 = vcombine.low %v2916, %v2920
        %v4322 = vcombine.low %v2924, %v2928
        %v4323 = vcombine.low %v2932, %v2936
        %v4325 = vunpack.c.l.s4 1966171168
        %v4326 = vunpack.c.0.s8 %v4325
        %v4327 = vlaneseq
        %v4328 = vshrl.u32 %v4327, 7
        %v4329 = vsub.s32 %v4326, %v4328
        %v4330 = vrot.slane %v4320, %v4329
        %v4332 = vunpack.c.l.s4 1966171168
        %v4333 = vunpack.c.0.s8 %v4332
        %v4334 = vlaneseq
        %v4335 = vshrl.u32 %v4334, 7
        %v4336 = vsub.s32 %v4333, %v4335
        %v4337 = vrot.slane %v4321, %v4336
        %v4339 = vunpack.c.l.s4 1966171168
        %v4340 = vunpack.c.0.s8 %v4339
        %v4341 = vlaneseq
        %v4342 = vshrl.u32 %v4341, 7
        %v4343 = vsub.s32 %v4340, %v4342
        %v4344 = vrot.slane %v4322, %v4343
        %v4346 = vunpack.c.l.s4 1966171168
        %v4347 = vunpack.c.0.s8 %v4346
        %v4348 = vlaneseq
        %v4349 = vshrl.u32 %v4348, 7
        %v4350 = vsub.s32 %v4347, %v4349
        %v4351 = vrot.slane %v4323, %v4350
        %v4352 = vcombine.low %v4330, %v4337
        %v4353 = vcombine.low %v4344, %v4351
        %v4355 = vunpack.c.l.s4 1966171168
        %v4356 = vunpack.c.0.s8 %v4355
        %v4357 = vlaneseq
        %v4358 = vshrl.u32 %v4357, 7
        %v4359 = vsub.s32 %v4356, %v4358
        %v4360 = vrot.slane %v4352, %v4359
        %v4362 = vunpack.c.l.s4 1966171168
        %v4363 = vunpack.c.0.s8 %v4362
        %v4364 = vlaneseq
        %v4365 = vshrl.u32 %v4364, 7
        %v4366 = vsub.s32 %v4363, %v4365
        %v4367 = vrot.slane %v4353, %v4366
        %v4368 = vcombine.low %v4360, %v4367
        %v4369 = vcombine.low %v2940, %v2944
        %v4370 = vcombine.low %v2948, %v2952
        %v4371 = vcombine.low %v2956, %v2960
        %v4372 = vcombine.low %v2964, %v2968
        %v4374 = vunpack.c.l.s4 1966171168
        %v4375 = vunpack.c.0.s8 %v4374
        %v4376 = vlaneseq
        %v4377 = vshrl.u32 %v4376, 7
        %v4378 = vsub.s32 %v4375, %v4377
        %v4379 = vrot.slane %v4369, %v4378
        %v4381 = vunpack.c.l.s4 1966171168
        %v4382 = vunpack.c.0.s8 %v4381
        %v4383 = vlaneseq
        %v4384 = vshrl.u32 %v4383, 7
        %v4385 = vsub.s32 %v4382, %v4384
        %v4386 = vrot.slane %v4370, %v4385
        %v4388 = vunpack.c.l.s4 1966171168
        %v4389 = vunpack.c.0.s8 %v4388
        %v4390 = vlaneseq
        %v4391 = vshrl.u32 %v4390, 7
        %v4392 = vsub.s32 %v4389, %v4391
        %v4393 = vrot.slane %v4371, %v4392
        %v4395 = vunpack.c.l.s4 1966171168
        %v4396 = vunpack.c.0.s8 %v4395
        %v4397 = vlaneseq
        %v4398 = vshrl.u32 %v4397, 7
        %v4399 = vsub.s32 %v4396, %v4398
        %v4400 = vrot.slane %v4372, %v4399
        %v4401 = vcombine.low %v4379, %v4386
        %v4402 = vcombine.low %v4393, %v4400
        %v4404 = vunpack.c.l.s4 1966171168
        %v4405 = vunpack.c.0.s8 %v4404
        %v4406 = vlaneseq
        %v4407 = vshrl.u32 %v4406, 7
        %v4408 = vsub.s32 %v4405, %v4407
        %v4409 = vrot.slane %v4401, %v4408
        %v4411 = vunpack.c.l.s4 1966171168
        %v4412 = vunpack.c.0.s8 %v4411
        %v4413 = vlaneseq
        %v4414 = vshrl.u32 %v4413, 7
        %v4415 = vsub.s32 %v4412, %v4414
        %v4416 = vrot.slane %v4402, %v4415
        %v4417 = vcombine.low %v4409, %v4416
        %v4418 = vcombine.low %v2972, %v2976
        %v4419 = vcombine.low %v2980, %v2984
        %v4420 = vcombine.low %v2988, %v2992
        %v4421 = vcombine.low %v2996, %v3000
        %v4423 = vunpack.c.l.s4 1966171168
        %v4424 = vunpack.c.0.s8 %v4423
        %v4425 = vlaneseq
        %v4426 = vshrl.u32 %v4425, 7
        %v4427 = vsub.s32 %v4424, %v4426
        %v4428 = vrot.slane %v4418, %v4427
        %v4430 = vunpack.c.l.s4 1966171168
        %v4431 = vunpack.c.0.s8 %v4430
        %v4432 = vlaneseq
        %v4433 = vshrl.u32 %v4432, 7
        %v4434 = vsub.s32 %v4431, %v4433
        %v4435 = vrot.slane %v4419, %v4434
        %v4437 = vunpack.c.l.s4 1966171168
        %v4438 = vunpack.c.0.s8 %v4437
        %v4439 = vlaneseq
        %v4440 = vshrl.u32 %v4439, 7
        %v4441 = vsub.s32 %v4438, %v4440
        %v4442 = vrot.slane %v4420, %v4441
        %v4444 = vunpack.c.l.s4 1966171168
        %v4445 = vunpack.c.0.s8 %v4444
        %v4446 = vlaneseq
        %v4447 = vshrl.u32 %v4446, 7
        %v4448 = vsub.s32 %v4445, %v4447
        %v4449 = vrot.slane %v4421, %v4448
        %v4450 = vcombine.low %v4428, %v4435
        %v4451 = vcombine.low %v4442, %v4449
        %v4453 = vunpack.c.l.s4 1966171168
        %v4454 = vunpack.c.0.s8 %v4453
        %v4455 = vlaneseq
        %v4456 = vshrl.u32 %v4455, 7
        %v4457 = vsub.s32 %v4454, %v4456
        %v4458 = vrot.slane %v4450, %v4457
        %v4460 = vunpack.c.l.s4 1966171168
        %v4461 = vunpack.c.0.s8 %v4460
        %v4462 = vlaneseq
        %v4463 = vshrl.u32 %v4462, 7
        %v4464 = vsub.s32 %v4461, %v4463
        %v4465 = vrot.slane %v4451, %v4464
        %v4466 = vcombine.low %v4458, %v4465
        %v4467 = vcombine.low %v3004, %v3008
        %v4468 = vcombine.low %v3012, %v3016
        %v4469 = vcombine.low %v3020, %v3024
        %v4470 = vcombine.low %v3028, %v3032
        %v4472 = vunpack.c.l.s4 1966171168
        %v4473 = vunpack.c.0.s8 %v4472
        %v4474 = vlaneseq
        %v4475 = vshrl.u32 %v4474, 7
        %v4476 = vsub.s32 %v4473, %v4475
        %v4477 = vrot.slane %v4467, %v4476
        %v4479 = vunpack.c.l.s4 1966171168
        %v4480 = vunpack.c.0.s8 %v4479
        %v4481 = vlaneseq
        %v4482 = vshrl.u32 %v4481, 7
        %v4483 = vsub.s32 %v4480, %v4482
        %v4484 = vrot.slane %v4468, %v4483
        %v4486 = vunpack.c.l.s4 1966171168
        %v4487 = vunpack.c.0.s8 %v4486
        %v4488 = vlaneseq
        %v4489 = vshrl.u32 %v4488, 7
        %v4490 = vsub.s32 %v4487, %v4489
        %v4491 = vrot.slane %v4469, %v4490
        %v4493 = vunpack.c.l.s4 1966171168
        %v4494 = vunpack.c.0.s8 %v4493
        %v4495 = vlaneseq
        %v4496 = vshrl.u32 %v4495, 7
        %v4497 = vsub.s32 %v4494, %v4496
        %v4498 = vrot.slane %v4470, %v4497
        %v4499 = vcombine.low %v4477, %v4484
        %v4500 = vcombine.low %v4491, %v4498
        %v4502 = vunpack.c.l.s4 1966171168
        %v4503 = vunpack.c.0.s8 %v4502
        %v4504 = vlaneseq
        %v4505 = vshrl.u32 %v4504, 7
        %v4506 = vsub.s32 %v4503, %v4505
        %v4507 = vrot.slane %v4499, %v4506
        %v4509 = vunpack.c.l.s4 1966171168
        %v4510 = vunpack.c.0.s8 %v4509
        %v4511 = vlaneseq
        %v4512 = vshrl.u32 %v4511, 7
        %v4513 = vsub.s32 %v4510, %v4512
        %v4514 = vrot.slane %v4500, %v4513
        %v4515 = vcombine.low %v4507, %v4514
        %v4516 = vcombine.low %v3036, %v3040
        %v4517 = vcombine.low %v3044, %v3048
        %v4518 = vcombine.low %v3052, %v3056
        %v4519 = vcombine.low %v3060, %v3064
        %v4521 = vunpack.c.l.s4 1966171168
        %v4522 = vunpack.c.0.s8 %v4521
        %v4523 = vlaneseq
        %v4524 = vshrl.u32 %v4523, 7
        %v4525 = vsub.s32 %v4522, %v4524
        %v4526 = vrot.slane %v4516, %v4525
        %v4528 = vunpack.c.l.s4 1966171168
        %v4529 = vunpack.c.0.s8 %v4528
        %v4530 = vlaneseq
        %v4531 = vshrl.u32 %v4530, 7
        %v4532 = vsub.s32 %v4529, %v4531
        %v4533 = vrot.slane %v4517, %v4532
        %v4535 = vunpack.c.l.s4 1966171168
        %v4536 = vunpack.c.0.s8 %v4535
        %v4537 = vlaneseq
        %v4538 = vshrl.u32 %v4537, 7
        %v4539 = vsub.s32 %v4536, %v4538
        %v4540 = vrot.slane %v4518, %v4539
        %v4542 = vunpack.c.l.s4 1966171168
        %v4543 = vunpack.c.0.s8 %v4542
        %v4544 = vlaneseq
        %v4545 = vshrl.u32 %v4544, 7
        %v4546 = vsub.s32 %v4543, %v4545
        %v4547 = vrot.slane %v4519, %v4546
        %v4548 = vcombine.low %v4526, %v4533
        %v4549 = vcombine.low %v4540, %v4547
        %v4551 = vunpack.c.l.s4 1966171168
        %v4552 = vunpack.c.0.s8 %v4551
        %v4553 = vlaneseq
        %v4554 = vshrl.u32 %v4553, 7
        %v4555 = vsub.s32 %v4552, %v4554
        %v4556 = vrot.slane %v4548, %v4555
        %v4558 = vunpack.c.l.s4 1966171168
        %v4559 = vunpack.c.0.s8 %v4558
        %v4560 = vlaneseq
        %v4561 = vshrl.u32 %v4560, 7
        %v4562 = vsub.s32 %v4559, %v4561
        %v4563 = vrot.slane %v4549, %v4562
        %v4564 = vcombine.low %v4556, %v4563
        %v4565 = vcombine.low %v3068, %v3072
        %v4566 = vcombine.low %v3076, %v3080
        %v4567 = vcombine.low %v3084, %v3088
        %v4568 = vcombine.low %v3092, %v3096
        %v4570 = vunpack.c.l.s4 1966171168
        %v4571 = vunpack.c.0.s8 %v4570
        %v4572 = vlaneseq
        %v4573 = vshrl.u32 %v4572, 7
        %v4574 = vsub.s32 %v4571, %v4573
        %v4575 = vrot.slane %v4565, %v4574
        %v4577 = vunpack.c.l.s4 1966171168
        %v4578 = vunpack.c.0.s8 %v4577
        %v4579 = vlaneseq
        %v4580 = vshrl.u32 %v4579, 7
        %v4581 = vsub.s32 %v4578, %v4580
        %v4582 = vrot.slane %v4566, %v4581
        %v4584 = vunpack.c.l.s4 1966171168
        %v4585 = vunpack.c.0.s8 %v4584
        %v4586 = vlaneseq
        %v4587 = vshrl.u32 %v4586, 7
        %v4588 = vsub.s32 %v4585, %v4587
        %v4589 = vrot.slane %v4567, %v4588
        %v4591 = vunpack.c.l.s4 1966171168
        %v4592 = vunpack.c.0.s8 %v4591
        %v4593 = vlaneseq
        %v4594 = vshrl.u32 %v4593, 7
        %v4595 = vsub.s32 %v4592, %v4594
        %v4596 = vrot.slane %v4568, %v4595
        %v4597 = vcombine.low %v4575, %v4582
        %v4598 = vcombine.low %v4589, %v4596
        %v4600 = vunpack.c.l.s4 1966171168
        %v4601 = vunpack.c.0.s8 %v4600
        %v4602 = vlaneseq
        %v4603 = vshrl.u32 %v4602, 7
        %v4604 = vsub.s32 %v4601, %v4603
        %v4605 = vrot.slane %v4597, %v4604
        %v4607 = vunpack.c.l.s4 1966171168
        %v4608 = vunpack.c.0.s8 %v4607
        %v4609 = vlaneseq
        %v4610 = vshrl.u32 %v4609, 7
        %v4611 = vsub.s32 %v4608, %v4610
        %v4612 = vrot.slane %v4598, %v4611
        %v4613 = vcombine.low %v4605, %v4612
        %v4614 = vcombine.low %v3100, %v3104
        %v4615 = vcombine.low %v3108, %v3112
        %v4616 = vcombine.low %v3116, %v3120
        %v4617 = vcombine.low %v3124, %v3128
        %v4619 = vunpack.c.l.s4 1966171168
        %v4620 = vunpack.c.0.s8 %v4619
        %v4621 = vlaneseq
        %v4622 = vshrl.u32 %v4621, 7
        %v4623 = vsub.s32 %v4620, %v4622
        %v4624 = vrot.slane %v4614, %v4623
        %v4626 = vunpack.c.l.s4 1966171168
        %v4627 = vunpack.c.0.s8 %v4626
        %v4628 = vlaneseq
        %v4629 = vshrl.u32 %v4628, 7
        %v4630 = vsub.s32 %v4627, %v4629
        %v4631 = vrot.slane %v4615, %v4630
        %v4633 = vunpack.c.l.s4 1966171168
        %v4634 = vunpack.c.0.s8 %v4633
        %v4635 = vlaneseq
        %v4636 = vshrl.u32 %v4635, 7
        %v4637 = vsub.s32 %v4634, %v4636
        %v4638 = vrot.slane %v4616, %v4637
        %v4640 = vunpack.c.l.s4 1966171168
        %v4641 = vunpack.c.0.s8 %v4640
        %v4642 = vlaneseq
        %v4643 = vshrl.u32 %v4642, 7
        %v4644 = vsub.s32 %v4641, %v4643
        %v4645 = vrot.slane %v4617, %v4644
        %v4646 = vcombine.low %v4624, %v4631
        %v4647 = vcombine.low %v4638, %v4645
        %v4649 = vunpack.c.l.s4 1966171168
        %v4650 = vunpack.c.0.s8 %v4649
        %v4651 = vlaneseq
        %v4652 = vshrl.u32 %v4651, 7
        %v4653 = vsub.s32 %v4650, %v4652
        %v4654 = vrot.slane %v4646, %v4653
        %v4656 = vunpack.c.l.s4 1966171168
        %v4657 = vunpack.c.0.s8 %v4656
        %v4658 = vlaneseq
        %v4659 = vshrl.u32 %v4658, 7
        %v4660 = vsub.s32 %v4657, %v4659
        %v4661 = vrot.slane %v4647, %v4660
        %v4662 = vcombine.low %v4654, %v4661
        %v4663 = vcombine.low %v3132, %v3136
        %v4664 = vcombine.low %v3140, %v3144
        %v4665 = vcombine.low %v3148, %v3152
        %v4666 = vcombine.low %v3156, %v3160
        %v4668 = vunpack.c.l.s4 1966171168
        %v4669 = vunpack.c.0.s8 %v4668
        %v4670 = vlaneseq
        %v4671 = vshrl.u32 %v4670, 7
        %v4672 = vsub.s32 %v4669, %v4671
        %v4673 = vrot.slane %v4663, %v4672
        %v4675 = vunpack.c.l.s4 1966171168
        %v4676 = vunpack.c.0.s8 %v4675
        %v4677 = vlaneseq
        %v4678 = vshrl.u32 %v4677, 7
        %v4679 = vsub.s32 %v4676, %v4678
        %v4680 = vrot.slane %v4664, %v4679
        %v4682 = vunpack.c.l.s4 1966171168
        %v4683 = vunpack.c.0.s8 %v4682
        %v4684 = vlaneseq
        %v4685 = vshrl.u32 %v4684, 7
        %v4686 = vsub.s32 %v4683, %v4685
        %v4687 = vrot.slane %v4665, %v4686
        %v4689 = vunpack.c.l.s4 1966171168
        %v4690 = vunpack.c.0.s8 %v4689
        %v4691 = vlaneseq
        %v4692 = vshrl.u32 %v4691, 7
        %v4693 = vsub.s32 %v4690, %v4692
        %v4694 = vrot.slane %v4666, %v4693
        %v4695 = vcombine.low %v4673, %v4680
        %v4696 = vcombine.low %v4687, %v4694
        %v4698 = vunpack.c.l.s4 1966171168
        %v4699 = vunpack.c.0.s8 %v4698
        %v4700 = vlaneseq
        %v4701 = vshrl.u32 %v4700, 7
        %v4702 = vsub.s32 %v4699, %v4701
        %v4703 = vrot.slane %v4695, %v4702
        %v4705 = vunpack.c.l.s4 1966171168
        %v4706 = vunpack.c.0.s8 %v4705
        %v4707 = vlaneseq
        %v4708 = vshrl.u32 %v4707, 7
        %v4709 = vsub.s32 %v4706, %v4708
        %v4710 = vrot.slane %v4696, %v4709
        %v4711 = vcombine.low %v4703, %v4710
        %v4712 = vcombine.low %v3164, %v3168
        %v4713 = vcombine.low %v3172, %v3176
        %v4714 = vcombine.low %v3180, %v3184
        %v4715 = vcombine.low %v3188, %v3192
        %v4717 = vunpack.c.l.s4 1966171168
        %v4718 = vunpack.c.0.s8 %v4717
        %v4719 = vlaneseq
        %v4720 = vshrl.u32 %v4719, 7
        %v4721 = vsub.s32 %v4718, %v4720
        %v4722 = vrot.slane %v4712, %v4721
        %v4724 = vunpack.c.l.s4 1966171168
        %v4725 = vunpack.c.0.s8 %v4724
        %v4726 = vlaneseq
        %v4727 = vshrl.u32 %v4726, 7
        %v4728 = vsub.s32 %v4725, %v4727
        %v4729 = vrot.slane %v4713, %v4728
        %v4731 = vunpack.c.l.s4 1966171168
        %v4732 = vunpack.c.0.s8 %v4731
        %v4733 = vlaneseq
        %v4734 = vshrl.u32 %v4733, 7
        %v4735 = vsub.s32 %v4732, %v4734
        %v4736 = vrot.slane %v4714, %v4735
        %v4738 = vunpack.c.l.s4 1966171168
        %v4739 = vunpack.c.0.s8 %v4738
        %v4740 = vlaneseq
        %v4741 = vshrl.u32 %v4740, 7
        %v4742 = vsub.s32 %v4739, %v4741
        %v4743 = vrot.slane %v4715, %v4742
        %v4744 = vcombine.low %v4722, %v4729
        %v4745 = vcombine.low %v4736, %v4743
        %v4747 = vunpack.c.l.s4 1966171168
        %v4748 = vunpack.c.0.s8 %v4747
        %v4749 = vlaneseq
        %v4750 = vshrl.u32 %v4749, 7
        %v4751 = vsub.s32 %v4748, %v4750
        %v4752 = vrot.slane %v4744, %v4751
        %v4754 = vunpack.c.l.s4 1966171168
        %v4755 = vunpack.c.0.s8 %v4754
        %v4756 = vlaneseq
        %v4757 = vshrl.u32 %v4756, 7
        %v4758 = vsub.s32 %v4755, %v4757
        %v4759 = vrot.slane %v4745, %v4758
        %v4760 = vcombine.low %v4752, %v4759
        %4761 = vset.pattern.permute.xlu0 0
        %4762 = vperm.xlu0 %4761, %v3241
        %v4763 = vpop.permute.xlu0 %4762
        %4764 = vset.pattern.permute.xlu0 0
        %4765 = vperm.xlu0 %4764, %v3290
        %v4766 = vpop.permute.xlu0 %4765
        %4767 = vset.pattern.permute.xlu0 0
        %4768 = vperm.xlu0 %4767, %v3339
        %v4769 = vpop.permute.xlu0 %4768
        %4770 = vset.pattern.permute.xlu0 0
        %4771 = vperm.xlu0 %4770, %v3388
        %v4772 = vpop.permute.xlu0 %4771
        %4773 = vset.pattern.permute.xlu0 0
        %4774 = vperm.xlu0 %4773, %v3437
        %v4775 = vpop.permute.xlu0 %4774
        %4776 = vset.pattern.permute.xlu0 0
        %4777 = vperm.xlu0 %4776, %v3486
        %v4778 = vpop.permute.xlu0 %4777
        %4779 = vset.pattern.permute.xlu0 0
        %4780 = vperm.xlu0 %4779, %v3535
        %v4781 = vpop.permute.xlu0 %4780
        %4782 = vset.pattern.permute.xlu0 0
        %4783 = vperm.xlu0 %4782, %v3584
        %v4784 = vpop.permute.xlu0 %4783
        %4785 = vset.pattern.permute.xlu0 0
        %4786 = vperm.xlu0 %4785, %v3633
        %v4787 = vpop.permute.xlu0 %4786
        %4788 = vset.pattern.permute.xlu0 0
        %4789 = vperm.xlu0 %4788, %v3682
        %v4790 = vpop.permute.xlu0 %4789
        %4791 = vset.pattern.permute.xlu0 0
        %4792 = vperm.xlu0 %4791, %v3731
        %v4793 = vpop.permute.xlu0 %4792
        %4794 = vset.pattern.permute.xlu0 0
        %4795 = vperm.xlu0 %4794, %v3780
        %v4796 = vpop.permute.xlu0 %4795
        %4797 = vset.pattern.permute.xlu0 0
        %4798 = vperm.xlu0 %4797, %v3829
        %v4799 = vpop.permute.xlu0 %4798
        %4800 = vset.pattern.permute.xlu0 0
        %4801 = vperm.xlu0 %4800, %v3878
        %v4802 = vpop.permute.xlu0 %4801
        %4803 = vset.pattern.permute.xlu0 0
        %4804 = vperm.xlu0 %4803, %v3927
        %v4805 = vpop.permute.xlu0 %4804
        %4806 = vset.pattern.permute.xlu0 0
        %4807 = vperm.xlu0 %4806, %v3976
        %v4808 = vpop.permute.xlu0 %4807
        %4809 = vset.pattern.permute.xlu0 0
        %4810 = vperm.xlu0 %4809, %v4025
        %v4811 = vpop.permute.xlu0 %4810
        %4812 = vset.pattern.permute.xlu0 0
        %4813 = vperm.xlu0 %4812, %v4074
        %v4814 = vpop.permute.xlu0 %4813
        %4815 = vset.pattern.permute.xlu0 0
        %4816 = vperm.xlu0 %4815, %v4123
        %v4817 = vpop.permute.xlu0 %4816
        %4818 = vset.pattern.permute.xlu0 0
        %4819 = vperm.xlu0 %4818, %v4172
        %v4820 = vpop.permute.xlu0 %4819
        %4821 = vset.pattern.permute.xlu0 0
        %4822 = vperm.xlu0 %4821, %v4221
        %v4823 = vpop.permute.xlu0 %4822
        %4824 = vset.pattern.permute.xlu0 0
        %4825 = vperm.xlu0 %4824, %v4270
        %v4826 = vpop.permute.xlu0 %4825
        %4827 = vset.pattern.permute.xlu0 0
        %4828 = vperm.xlu0 %4827, %v4319
        %v4829 = vpop.permute.xlu0 %4828
        %4830 = vset.pattern.permute.xlu0 0
        %4831 = vperm.xlu0 %4830, %v4368
        %v4832 = vpop.permute.xlu0 %4831
        %4833 = vset.pattern.permute.xlu0 0
        %4834 = vperm.xlu0 %4833, %v4417
        %v4835 = vpop.permute.xlu0 %4834
        %4836 = vset.pattern.permute.xlu0 0
        %4837 = vperm.xlu0 %4836, %v4466
        %v4838 = vpop.permute.xlu0 %4837
        %4839 = vset.pattern.permute.xlu0 0
        %4840 = vperm.xlu0 %4839, %v4515
        %v4841 = vpop.permute.xlu0 %4840
        %4842 = vset.pattern.permute.xlu0 0
        %4843 = vperm.xlu0 %4842, %v4564
        %v4844 = vpop.permute.xlu0 %4843
        %4845 = vset.pattern.permute.xlu0 0
        %4846 = vperm.xlu0 %4845, %v4613
        %v4847 = vpop.permute.xlu0 %4846
        %4848 = vset.pattern.permute.xlu0 0
        %4849 = vperm.xlu0 %4848, %v4662
        %v4850 = vpop.permute.xlu0 %4849
        %4851 = vset.pattern.permute.xlu0 0
        %4852 = vperm.xlu0 %4851, %v4711
        %v4853 = vpop.permute.xlu0 %4852
        %4854 = vset.pattern.permute.xlu0 0
        %4855 = vperm.xlu0 %4854, %v4760
        %v4856 = vpop.permute.xlu0 %4855
        %v4857 = vlaneseq
        %v4858 = vand.u32 %v4857, 127
        %v4859 = vlaneseq
        %v4860 = vshrl.u32 %v4859, 7
        %v4861 = vsub.s32 %v4858, %v4860
        %v4862 = vrot.slane %v4763, %v4861
        %v4863 = vadd.s32 %v4858, 4294967288
        %v4864 = vlaneseq
        %v4865 = vshrl.u32 %v4864, 7
        %v4866 = vsub.s32 %v4863, %v4865
        %v4867 = vrot.slane %v4766, %v4866
        %vm4868 = vcmask 130112
        %v4869 = vsel %vm4868, %v4867, %v4862
        %v4870 = vadd.s32 %v4858, 4294967280
        %v4871 = vlaneseq
        %v4872 = vshrl.u32 %v4871, 7
        %v4873 = vsub.s32 %v4870, %v4872
        %v4874 = vrot.slane %v4769, %v4873
        %vm4875 = vcmask 195712
        %v4876 = vsel %vm4875, %v4874, %v4869
        %v4877 = vadd.s32 %v4858, 4294967272
        %v4878 = vlaneseq
        %v4879 = vshrl.u32 %v4878, 7
        %v4880 = vsub.s32 %v4877, %v4879
        %v4881 = vrot.slane %v4772, %v4880
        %vm4882 = vcmask 261312
        %v4883 = vsel %vm4882, %v4881, %v4876
        %v4884 = vadd.s32 %v4858, 4294967264
        %v4885 = vlaneseq
        %v4886 = vshrl.u32 %v4885, 7
        %v4887 = vsub.s32 %v4884, %v4886
        %v4888 = vrot.slane %v4775, %v4887
        %vm4889 = vcmask 326912
        %v4890 = vsel %vm4889, %v4888, %v4883
        %v4891 = vadd.s32 %v4858, 4294967256
        %v4892 = vlaneseq
        %v4893 = vshrl.u32 %v4892, 7
        %v4894 = vsub.s32 %v4891, %v4893
        %v4895 = vrot.slane %v4778, %v4894
        %vm4896 = vcmask 392512
        %v4897 = vsel %vm4896, %v4895, %v4890
        %v4898 = vadd.s32 %v4858, 4294967248
        %v4899 = vlaneseq
        %v4900 = vshrl.u32 %v4899, 7
        %v4901 = vsub.s32 %v4898, %v4900
        %v4902 = vrot.slane %v4781, %v4901
        %vm4903 = vcmask 458112
        %v4904 = vsel %vm4903, %v4902, %v4897
        %v4905 = vadd.s32 %v4858, 4294967240
        %v4906 = vlaneseq
        %v4907 = vshrl.u32 %v4906, 7
        %v4908 = vsub.s32 %v4905, %v4907
        %v4909 = vrot.slane %v4784, %v4908
        %vm4910 = vcmask 523712
        %v4911 = vsel %vm4910, %v4909, %v4904
        %v4912 = vadd.s32 %v4858, 4294967232
        %v4913 = vlaneseq
        %v4914 = vshrl.u32 %v4913, 7
        %v4915 = vsub.s32 %v4912, %v4914
        %v4916 = vrot.slane %v4787, %v4915
        %vm4917 = vcmask 589312
        %v4918 = vsel %vm4917, %v4916, %v4911
        %v4919 = vadd.s32 %v4858, 4294967224
        %v4920 = vlaneseq
        %v4921 = vshrl.u32 %v4920, 7
        %v4922 = vsub.s32 %v4919, %v4921
        %v4923 = vrot.slane %v4790, %v4922
        %vm4924 = vcmask 654912
        %v4925 = vsel %vm4924, %v4923, %v4918
        %v4926 = vadd.s32 %v4858, 4294967216
        %v4927 = vlaneseq
        %v4928 = vshrl.u32 %v4927, 7
        %v4929 = vsub.s32 %v4926, %v4928
        %v4930 = vrot.slane %v4793, %v4929
        %vm4931 = vcmask 720512
        %v4932 = vsel %vm4931, %v4930, %v4925
        %v4933 = vadd.s32 %v4858, 4294967208
        %v4934 = vlaneseq
        %v4935 = vshrl.u32 %v4934, 7
        %v4936 = vsub.s32 %v4933, %v4935
        %v4937 = vrot.slane %v4796, %v4936
        %vm4938 = vcmask 786112
        %v4939 = vsel %vm4938, %v4937, %v4932
        %v4940 = vadd.s32 %v4858, 4294967200
        %v4941 = vlaneseq
        %v4942 = vshrl.u32 %v4941, 7
        %v4943 = vsub.s32 %v4940, %v4942
        %v4944 = vrot.slane %v4799, %v4943
        %vm4945 = vcmask 851712
        %v4946 = vsel %vm4945, %v4944, %v4939
        %v4947 = vadd.s32 %v4858, 4294967192
        %v4948 = vlaneseq
        %v4949 = vshrl.u32 %v4948, 7
        %v4950 = vsub.s32 %v4947, %v4949
        %v4951 = vrot.slane %v4802, %v4950
        %vm4952 = vcmask 917312
        %v4953 = vsel %vm4952, %v4951, %v4946
        %v4954 = vadd.s32 %v4858, 4294967184
        %v4955 = vlaneseq
        %v4956 = vshrl.u32 %v4955, 7
        %v4957 = vsub.s32 %v4954, %v4956
        %v4958 = vrot.slane %v4805, %v4957
        %vm4959 = vcmask 982912
        %v4960 = vsel %vm4959, %v4958, %v4953
        %v4961 = vadd.s32 %v4858, 4294967176
        %v4962 = vlaneseq
        %v4963 = vshrl.u32 %v4962, 7
        %v4964 = vsub.s32 %v4961, %v4963
        %v4965 = vrot.slane %v4808, %v4964
        %vm4966 = vcmask 1048512
        %v4967 = vsel %vm4966, %v4965, %v4960
        %v4968 = vlaneseq
        %v4969 = vshrl.u32 %v4968, 7
        %v4970 = vsub.s32 %v4858, %v4969
        %v4971 = vrot.slane %v4811, %v4970
        %v4972 = vlaneseq
        %v4973 = vshrl.u32 %v4972, 7
        %v4974 = vsub.s32 %v4863, %v4973
        %v4975 = vrot.slane %v4814, %v4974
        %v4976 = vsel %vm4868, %v4975, %v4971
        %v4977 = vlaneseq
        %v4978 = vshrl.u32 %v4977, 7
        %v4979 = vsub.s32 %v4870, %v4978
        %v4980 = vrot.slane %v4817, %v4979
        %v4981 = vsel %vm4875, %v4980, %v4976
        %v4982 = vlaneseq
        %v4983 = vshrl.u32 %v4982, 7
        %v4984 = vsub.s32 %v4877, %v4983
        %v4985 = vrot.slane %v4820, %v4984
        %v4986 = vsel %vm4882, %v4985, %v4981
        %v4987 = vlaneseq
        %v4988 = vshrl.u32 %v4987, 7
        %v4989 = vsub.s32 %v4884, %v4988
        %v4990 = vrot.slane %v4823, %v4989
        %v4991 = vsel %vm4889, %v4990, %v4986
        %v4992 = vlaneseq
        %v4993 = vshrl.u32 %v4992, 7
        %v4994 = vsub.s32 %v4891, %v4993
        %v4995 = vrot.slane %v4826, %v4994
        %v4996 = vsel %vm4896, %v4995, %v4991
        %v4997 = vlaneseq
        %v4998 = vshrl.u32 %v4997, 7
        %v4999 = vsub.s32 %v4898, %v4998
        %v5000 = vrot.slane %v4829, %v4999
        %v5001 = vsel %vm4903, %v5000, %v4996
        %v5002 = vlaneseq
        %v5003 = vshrl.u32 %v5002, 7
        %v5004 = vsub.s32 %v4905, %v5003
        %v5005 = vrot.slane %v4832, %v5004
        %v5006 = vsel %vm4910, %v5005, %v5001
        %v5007 = vlaneseq
        %v5008 = vshrl.u32 %v5007, 7
        %v5009 = vsub.s32 %v4912, %v5008
        %v5010 = vrot.slane %v4835, %v5009
        %v5011 = vsel %vm4917, %v5010, %v5006
        %v5012 = vlaneseq
        %v5013 = vshrl.u32 %v5012, 7
        %v5014 = vsub.s32 %v4919, %v5013
        %v5015 = vrot.slane %v4838, %v5014
        %v5016 = vsel %vm4924, %v5015, %v5011
        %v5017 = vlaneseq
        %v5018 = vshrl.u32 %v5017, 7
        %v5019 = vsub.s32 %v4926, %v5018
        %v5020 = vrot.slane %v4841, %v5019
        %v5021 = vsel %vm4931, %v5020, %v5016
        %v5022 = vlaneseq
        %v5023 = vshrl.u32 %v5022, 7
        %v5024 = vsub.s32 %v4933, %v5023
        %v5025 = vrot.slane %v4844, %v5024
        %v5026 = vsel %vm4938, %v5025, %v5021
        %v5027 = vlaneseq
        %v5028 = vshrl.u32 %v5027, 7
        %v5029 = vsub.s32 %v4940, %v5028
        %v5030 = vrot.slane %v4847, %v5029
        %v5031 = vsel %vm4945, %v5030, %v5026
        %v5032 = vlaneseq
        %v5033 = vshrl.u32 %v5032, 7
        %v5034 = vsub.s32 %v4947, %v5033
        %v5035 = vrot.slane %v4850, %v5034
        %v5036 = vsel %vm4952, %v5035, %v5031
        %v5037 = vlaneseq
        %v5038 = vshrl.u32 %v5037, 7
        %v5039 = vsub.s32 %v4954, %v5038
        %v5040 = vrot.slane %v4853, %v5039
        %v5041 = vsel %vm4959, %v5040, %v5036
        %v5042 = vlaneseq
        %v5043 = vshrl.u32 %v5042, 7
        %v5044 = vsub.s32 %v4961, %v5043
        %v5045 = vrot.slane %v4856, %v5044
        %v5046 = vsel %vm4966, %v5045, %v5041
        %v5047 = vcombine.low %v4967, %v5046
        %v5049 = vunpack.c.l.s4 1966171168
        %v5050 = vunpack.c.0.s8 %v5049
        %v5051 = vlaneseq
        %v5052 = vshrl.u32 %v5051, 7
        %v5053 = vsub.s32 %v5050, %v5052
        %v5054 = vrot.slane %v5047, %v5053
        %v5056 = vunpack.c.l.s4 1966171168
        %v5057 = vunpack.c.0.s8 %v5056
        %v5058 = vlaneseq
        %v5059 = vshrl.u32 %v5058, 7
        %v5060 = vsub.s32 %v5057, %v5059
        %v5061 = vrot.slane %v5054, %v5060
        %v5063 = vlaneseq
        %vm5064 = vcmp.ge.s32.totalorder %v5063, 0
        %vm5065 = vcmp.lt.s32.totalorder %v5063, 256
        %vm5066 = vmand %vm5064, %vm5065
        %5067 = vst.msk [vmem:[%s239] sm:$0x3] %vm5066, %v5061
        %s5068 = sand.u32 %s120, 1
        %s5069 = scalar_lea.sflag [#allocation5], %s5068
        %s5070 = sand.u32 %s120, 1
        %s5071 = smul.addr %s5070, 2
        %s5072 = scalar_lea.vmem [#allocation8], %s5071
        // Predicated region
        $region45: #{tpu_custom_call.1} parent=35 // pred_check
          %p5073 = pneg %p130
        $region46: #{tpu_custom_call.1} parent=35 // pred_check_branch
          %5075 = sbr.rel (%p5073) target = $region48
        $region47: #{tpu_custom_call.1} parent=35 // pred_region
          %s5076 = smul.u32 2, %s23
          %s5077 = ssub.s32 3, %s5076
          %p5078 = scmp.lt.s32.totalorder %s5077, 2
          %s5079 = scalar_select %p5078, %s5077, 2
          %s5080 = smul.u32 16, %s5079
          %s5082 = ssub.s32 32, %s5080
          %5083 = vsyncadd %s5069, %s5082
          %p5084 = scmp.ne.s32.totalorder 0, %s5080
          %s5085 = smul.addr %s5076, 16
          %s5086 = scalar_lea.hbm %s4, %s5085
          %s5087 = sshll.u32 %s5079, 4
          %s5088 = sshll.u32 %s5072, 4
          %s5089 = int_to_ptr.vmem [resolvable:$true] %s5088
          %5091 = dma.vmem_to_hbm [thread:$0]  (%p5084), %s5089, %s5087, %s5086, %s5069
        $region48: #{tpu_custom_call.1} parent=35 // pred_fallthru
          _
      $region36: #{tpu_custom_call.1} parent=5 // pred_fallthru
        _
      %p5092 = scmp.le.s32.totalorder 2, %s18
      // Predicated region
      $region49: #{tpu_custom_call.1} parent=5 // pred_check
        %p5093 = pneg %p5092
      $region50: #{tpu_custom_call.1} parent=5 // pred_check_branch
        %5095 = sbr.rel (%p5093) target = $region52
      $region51: #{tpu_custom_call.1} parent=5 // pred_region
        %s5096 = ssub.s32 %s18, 2
        // Predicated region
        $region53: #{tpu_custom_call.1} parent=51 // pred_check
          %p5097 = pneg %p136
        $region54: #{tpu_custom_call.1} parent=51 // pred_check_branch
          %5099 = sbr.rel (%p5097) target = $region56
        $region55: #{tpu_custom_call.1} parent=51 // pred_region
          %s5100 = sand.u32 %s121, 1
          %s5101 = scalar_lea.sflag [#allocation5], %s5100
          %s5102 = sand.u32 %s121, 1
          %s5103 = smul.addr %s5102, 2
          %s5104 = scalar_lea.vmem [#allocation8], %s5103
          %5105 = dma.done %s5101, 32
        $region56: #{tpu_custom_call.1} parent=51 // pred_fallthru
          _
      $region52: #{tpu_custom_call.1} parent=5 // pred_fallthru
        _
    $region6: #{tpu_custom_call.1} parent=1 // loop_footer
      %s22 = sadd.s32 1, %s18
    $region7: #{tpu_custom_call.1} parent=1 // loop_footer_branch
      %17 = sbr.rel target = $region3
    $region8: #{tpu_custom_call.1} parent=1 // loop_exit
      _
    %5106 = vsyncpa [#allocation4], 1
    %s5107 = scalar_lea.sflag [#allocation4], 1
    %5108 = vsyncpa %s5107, 1
    %5109 = vsyncpa [#allocation7], 1
    %5110 = vsyncpa [#allocation5], 1
    %s5111 = scalar_lea.sflag [#allocation5], 1
    %5112 = vsyncpa %s5111, 1

</llo_original>
